<compile_context>
chip_gen: v7x
topology: tpu7x:2x2x1
jax: 0.10.0
libtpu: 0.0.40
codegen_flags: <defaults>
</compile_context>

<pallas_src>
import jax
import jax.numpy as jnp
from jax.experimental import pallas as pl
from jax.experimental.pallas import tpu as pltpu

EMBED = 12                      # nn.MultiheadAttention(12, 6)
NUM_HEADS = 6
HEAD_DIM = EMBED // NUM_HEADS   # = 2
E_PAD = 16                      # 12 -> 16 so q/k/v sections are sublane-aligned


def _mha_kernel(x_ref, w_in_ref, wo_ref, o_ref):
    """Fused multi-head self-attention for a block of Bt batch elements.

    x_ref   : (Bt, 16, S)  rows 0:12 = channels, row 12 = 1.0 (bias lane),
                           rows 13:15 = 0.  Sequence S on the lane axis.
    w_in_ref: (48, 16)     packed in-projection: rows [0:16)=q, [16:32)=k,
                           [32:48)=v sections; in each section rows 0:12 hold W,
                           column 12 holds the bias, the rest is zero.  The q
                           section is pre-scaled by 1/sqrt(head_dim).
    wo_ref  : (6, 16, 3)   per-head out-projection: [:, :12, 0:2] = Wo[:, 2h:2h+2];
                           head 0's column 2 = out_proj bias (picked up by the
                           normalized "ones" denominator row).
    o_ref   : (Bt, 12, S)  attention output == at_out.permute(1, 2, 0) slice.
    """
    S = x_ref.shape[-1]
    bt = x_ref.shape[0]

    # Hoist all weight loads / slices out of the batch loop (done once per step).
    w_in = w_in_ref[...]                                    # (48, 16)
    wo_h = [wo_ref[h] for h in range(NUM_HEADS)]            # each (16, 3)
    ones_row = jnp.ones((1, S), jnp.float32)

    @pl.loop(0, bt)
    def _(b):
        x = x_ref[b]                                        # (16, S), lane-dense in S

        # Fused in-projection: one (48,16)@(16,S) MXU matmul.  Bias adds and the
        # 1/sqrt(head_dim) q-scale are folded into the packed weight via x row 12.
        qkv = jnp.dot(w_in, x, preferred_element_type=jnp.float32)   # (48, S)
        q = qkv[0:E_PAD]                                    # (16, S), rows 0:12 valid
        k = qkv[E_PAD:2 * E_PAD]
        v = qkv[2 * E_PAD:3 * E_PAD]

        # Keys with S on sublanes: a single XLU transpose shared by all heads.
        k_t = k.T                                           # (S, 16)

        out = None                                          # (16, S) accumulator
        for h in range(NUM_HEADS):                          # static loop, 6 heads
            c0 = h * HEAD_DIM
            # Scores on the MXU: (S,2)@(2,S) -> (S_k, S_q).
            s = jnp.dot(k_t[:, c0:c0 + HEAD_DIM], q[c0:c0 + HEAD_DIM, :],
                        preferred_element_type=jnp.float32)
            # Softmax over keys (axis 0 = sublanes); denominator is produced by
            # the PV matmul itself via the appended ones row (no XLU sum).
            s = s - jnp.max(s, axis=0, keepdims=True)
            p = jnp.exp(s)                                  # (S_k, S_q)

            v_aug = jnp.concatenate([v[c0:c0 + HEAD_DIM, :], ones_row], axis=0)
            oh = jnp.dot(v_aug, p, preferred_element_type=jnp.float32)   # (3, S)
            inv = pl.reciprocal(oh[HEAD_DIM:HEAD_DIM + 1, :], approx=False)
            oh = oh * inv       # rows 0:2 normalized; row 2 == 1 (carries the bias)

            # Per-head out-projection accumulation: (16,3)@(3,S) on the MXU.
            contrib = jnp.dot(wo_h[h], oh, preferred_element_type=jnp.float32)
            out = contrib if out is None else out + contrib

        o_ref[b] = out[:EMBED, :].astype(o_ref.dtype)
    # TODO(synk): for large S, tile the key axis (online softmax) so the per-head
    # (S,S) intermediates stay inside VMEM (v7x: 64 MiB physical, v5e: 16 MiB
    # default scoped limit); the current untiled form is sized for moderate S.


@jax.jit
def multihead_self_attention(x_bes, in_proj_w, in_proj_b, out_proj_w, out_proj_b):
    """x_bes: (B, 12, S) — PyTorch layout.  Returns (B, 12, S) (== attentioned)."""
    B, E, S = x_bes.shape
    assert E == EMBED
    f32 = jnp.float32
    scale = jnp.asarray(1.0 / float(HEAD_DIM) ** 0.5, f32)

    # ---- pack x: pad channels 12 -> 16, row 12 is the constant "ones" bias lane.
    x_pad = jnp.zeros((B, E_PAD, S), f32)
    x_pad = x_pad.at[:, :EMBED, :].set(x_bes.astype(f32))
    x_pad = x_pad.at[:, EMBED, :].set(1.0)

    # ---- pack in-projection: q/k/v sections, each (16,16); bias in column 12;
    #      1/sqrt(head_dim) folded into the q section.
    def pack_section(w, b):
        sec = jnp.zeros((E_PAD, E_PAD), f32)
        sec = sec.at[:EMBED, :EMBED].set(w)
        sec = sec.at[:EMBED, EMBED].set(b)
        return sec

    wq = in_proj_w[:EMBED].astype(f32)
    wk = in_proj_w[EMBED:2 * EMBED].astype(f32)
    wv = in_proj_w[2 * EMBED:].astype(f32)
    bq = in_proj_b[:EMBED].astype(f32)
    bk = in_proj_b[EMBED:2 * EMBED].astype(f32)
    bv = in_proj_b[2 * EMBED:].astype(f32)
    w_in = jnp.concatenate([pack_section(scale * wq, scale * bq),
                            pack_section(wk, bk),
                            pack_section(wv, bv)], axis=0)          # (48, 16)

    # ---- pack out-projection per head: (6, 16, 3); head 0's column 2 carries
    #      the out_proj bias (multiplied in-kernel by the normalized ones row).
    wo = out_proj_w.astype(f32)
    bo = out_proj_b.astype(f32)
    wo_heads = jnp.zeros((NUM_HEADS, E_PAD, HEAD_DIM + 1), f32)
    for h in range(NUM_HEADS):
        wo_heads = wo_heads.at[h, :EMBED, :HEAD_DIM].set(
            wo[:, h * HEAD_DIM:(h + 1) * HEAD_DIM])
    wo_heads = wo_heads.at[0, :EMBED, HEAD_DIM].set(bo)

    # ---- batch tiling: small per-step unroll; keep >= 4 grid steps when possible
    #      so v7x's two TensorCores each get >= 2 pipelined steps.
    bt = 2 if (B % 2 == 0 and B // 2 >= 4) else 1

    grid_spec = pltpu.PrefetchScalarGridSpec(
        num_scalar_prefetch=0,
        grid=(B // bt,),
        in_specs=[
            pl.BlockSpec((bt, E_PAD, S), lambda g: (g, 0, 0)),              # x
            pl.BlockSpec((3 * E_PAD, E_PAD), lambda g: (0, 0)),             # W_in
            pl.BlockSpec((NUM_HEADS, E_PAD, HEAD_DIM + 1),
                         lambda g: (0, 0, 0)),                              # Wo/head
        ],
        out_specs=pl.BlockSpec((bt, EMBED, S), lambda g: (g, 0, 0)),
    )

    return pl.pallas_call(
        _mha_kernel,
        out_shape=jax.ShapeDtypeStruct((B, EMBED, S), jnp.float32),
        grid_spec=grid_spec,
        compiler_params=pltpu.CompilerParams(
            dimension_semantics=("parallel",)),
    )(x_pad, w_in, wo_heads)


def type7_forward(x, params):
    """Type7.forward: x is (B, 12, S) float32.

    Returns the `attentioned` tensor (B, 12, S), i.e. at_out.permute(1, 2, 0).
    """
    attentioned = multihead_self_attention(
        x,
        params["in_proj_weight"], params["in_proj_bias"],
        params["out_proj_weight"], params["out_proj_bias"],
    )                                              # (B, 12, S)
    # TODO(synk): self.resnet (resnet18()) and self.tsf (TransformerTS) are
    # undefined external modules in the reference source, so x1 = resnet(at_out),
    # x3 = tsf(x.permute(0,2,1)) and the final x1 + x3 cannot be reproduced here.
    # (self.lstm / self.fc / self.fc2 are unused in forward.)
    return attentioned


def _jnp_reference(x, params):
    """Pure-jnp reference of nn.MultiheadAttention for correctness checking."""
    B, E, S = x.shape
    x_sbe = jnp.transpose(x, (2, 0, 1))                       # (S, B, E)
    qkv = jnp.einsum("sbe,fe->sbf", x_sbe, params["in_proj_weight"]) \
        + params["in_proj_bias"]
    q, k, v = qkv[..., :E], qkv[..., E:2 * E], qkv[..., 2 * E:]

    def split_heads(t):   # (S,B,E) -> (B,H,S,Dh)
        return jnp.transpose(t.reshape(S, B, NUM_HEADS, HEAD_DIM), (1, 2, 0, 3))

    qh, kh, vh = split_heads(q), split_heads(k), split_heads(v)
    scores = jnp.einsum("bhsd,bhtd->bhst", qh, kh) / jnp.sqrt(jnp.float32(HEAD_DIM))
    p = jax.nn.softmax(scores, axis=-1)
    o = jnp.einsum("bhst,bhtd->bhsd", p, vh)                  # (B,H,S,Dh)
    o = jnp.transpose(o, (2, 0, 1, 3)).reshape(S, B, E)       # (S,B,E)
    o = jnp.einsum("sbe,fe->sbf", o, params["out_proj_weight"]) \
        + params["out_proj_bias"]
    return jnp.transpose(o, (1, 2, 0))                        # (B, E, S)


if __name__ == "__main__":
    key = jax.random.PRNGKey(0)
    k_x, k_w1, k_b1, k_w2, k_b2 = jax.random.split(key, 5)

    B, S = 4, 128                    # embed dim fixed to 12 by the module
    x = jax.random.normal(k_x, (B, EMBED, S), dtype=jnp.float32)

    params = {
        "in_proj_weight": 0.3 * jax.random.normal(k_w1, (3 * EMBED, EMBED), jnp.float32),
        "in_proj_bias": 0.1 * jax.random.normal(k_b1, (3 * EMBED,), jnp.float32),
        "out_proj_weight": 0.3 * jax.random.normal(k_w2, (EMBED, EMBED), jnp.float32),
        "out_proj_bias": 0.1 * jax.random.normal(k_b2, (EMBED,), jnp.float32),
    }

    out = type7_forward(x, params)
    out = jax.block_until_ready(out)
    assert out.shape == (B, EMBED, S), out.shape

    ref = _jnp_reference(x, params)
    max_err = float(jnp.max(jnp.abs(out - ref)))
    assert jnp.allclose(out, ref, rtol=5e-3, atol=5e-3), f"max err {max_err}"

    print("KERNEL_OK")
</pallas_src>

<mosaic_0001>
module attributes {stable_mosaic.version = 11 : i64} {
  func.func @_mha_kernel(%arg0: i32, %arg1: memref<1x16x128xf32, #tpu.memory_space<vmem>>, %arg2: memref<48x16xf32, #tpu.memory_space<vmem>>, %arg3: memref<6x16x3xf32, #tpu.memory_space<vmem>>, %arg4: memref<1x12x128xf32, #tpu.memory_space<vmem>>) attributes {dimension_semantics = [#tpu.dimension_semantics<parallel>], iteration_bounds = array<i64: 4>, scalar_prefetch = 0 : i64, scratch_operands = 0 : i64, tpu.core_type = #tpu.core_type<tc>, window_params = [{transform_indices = @transform_0, window_bounds = array<i64: 1, 16, 128>}, {pipeline_mode = #tpu.pipeline_mode<synchronous>, transform_indices = @transform_1, window_bounds = array<i64: 48, 16>}, {pipeline_mode = #tpu.pipeline_mode<synchronous>, transform_indices = @transform_2, window_bounds = array<i64: 6, 16, 3>}, {transform_indices = @transform_3, window_bounds = array<i64: 1, 12, 128>}]} {
    %c0 = arith.constant 0 : index
    %c0_0 = arith.constant 0 : index
    %0 = vector.load %arg2[%c0, %c0_0] : memref<48x16xf32, #tpu.memory_space<vmem>>, vector<48x16xf32>
    %c0_1 = arith.constant 0 : index
    %c0_2 = arith.constant 0 : index
    %c0_3 = arith.constant 0 : index
    %1 = vector.load %arg3[%c0_1, %c0_2, %c0_3] : memref<6x16x3xf32, #tpu.memory_space<vmem>>, vector<1x16x3xf32>
    %2 = vector.shape_cast %1 : vector<1x16x3xf32> to vector<16x3xf32>
    %c1 = arith.constant 1 : index
    %c0_4 = arith.constant 0 : index
    %c0_5 = arith.constant 0 : index
    %3 = vector.load %arg3[%c1, %c0_4, %c0_5] : memref<6x16x3xf32, #tpu.memory_space<vmem>>, vector<1x16x3xf32>
    %4 = vector.shape_cast %3 : vector<1x16x3xf32> to vector<16x3xf32>
    %c2 = arith.constant 2 : index
    %c0_6 = arith.constant 0 : index
    %c0_7 = arith.constant 0 : index
    %5 = vector.load %arg3[%c2, %c0_6, %c0_7] : memref<6x16x3xf32, #tpu.memory_space<vmem>>, vector<1x16x3xf32>
    %6 = vector.shape_cast %5 : vector<1x16x3xf32> to vector<16x3xf32>
    %c3 = arith.constant 3 : index
    %c0_8 = arith.constant 0 : index
    %c0_9 = arith.constant 0 : index
    %7 = vector.load %arg3[%c3, %c0_8, %c0_9] : memref<6x16x3xf32, #tpu.memory_space<vmem>>, vector<1x16x3xf32>
    %8 = vector.shape_cast %7 : vector<1x16x3xf32> to vector<16x3xf32>
    %c4 = arith.constant 4 : index
    %c0_10 = arith.constant 0 : index
    %c0_11 = arith.constant 0 : index
    %9 = vector.load %arg3[%c4, %c0_10, %c0_11] : memref<6x16x3xf32, #tpu.memory_space<vmem>>, vector<1x16x3xf32>
    %10 = vector.shape_cast %9 : vector<1x16x3xf32> to vector<16x3xf32>
    %c5 = arith.constant 5 : index
    %c0_12 = arith.constant 0 : index
    %c0_13 = arith.constant 0 : index
    %11 = vector.load %arg3[%c5, %c0_12, %c0_13] : memref<6x16x3xf32, #tpu.memory_space<vmem>>, vector<1x16x3xf32>
    %12 = vector.shape_cast %11 : vector<1x16x3xf32> to vector<16x3xf32>
    %cst = arith.constant 1.000000e+00 : f32
    %13 = vector.broadcast %cst : f32 to vector<1x128xf32>
    %c0_i32 = arith.constant 0 : i32
    %c1_i32 = arith.constant 1 : i32
    %14 = arith.muli %c0_i32, %c1_i32 : i32
    %c0_i32_14 = arith.constant 0 : i32
    %15 = arith.addi %c0_i32_14, %14 : i32
    %16 = arith.index_cast %15 : i32 to index
    %c0_15 = arith.constant 0 : index
    %c0_16 = arith.constant 0 : index
    %17 = vector.load %arg1[%16, %c0_15, %c0_16] : memref<1x16x128xf32, #tpu.memory_space<vmem>>, vector<1x16x128xf32>
    %18 = vector.shape_cast %17 : vector<1x16x128xf32> to vector<16x128xf32>
    %cst_17 = arith.constant dense<0.000000e+00> : vector<48x128xf32>
    %19 = tpu.matmul %0, %18, %cst_17 {dimension_numbers = #tpu.dot_dimension_numbers<[1], [0], [0], [1], [0, 0, 1, 1], [], []>} : vector<48x16xf32>, vector<16x128xf32>, vector<48x128xf32> -> vector<48x128xf32>
    %20 = vector.extract_strided_slice %19 {offsets = [0, 0], sizes = [16, 128], strides = [1, 1]} : vector<48x128xf32> to vector<16x128xf32>
    %21 = vector.extract_strided_slice %19 {offsets = [16, 0], sizes = [16, 128], strides = [1, 1]} : vector<48x128xf32> to vector<16x128xf32>
    %22 = vector.extract_strided_slice %19 {offsets = [32, 0], sizes = [16, 128], strides = [1, 1]} : vector<48x128xf32> to vector<16x128xf32>
    %23 = tpu.transpose %21, [1, 0] : vector<16x128xf32> -> vector<128x16xf32>
    %24 = vector.extract_strided_slice %23 {offsets = [0, 0], sizes = [128, 2], strides = [1, 1]} : vector<128x16xf32> to vector<128x2xf32>
    %25 = vector.extract_strided_slice %20 {offsets = [0, 0], sizes = [2, 128], strides = [1, 1]} : vector<16x128xf32> to vector<2x128xf32>
    %cst_18 = arith.constant dense<0.000000e+00> : vector<128x128xf32>
    %26 = tpu.matmul %24, %25, %cst_18 {dimension_numbers = #tpu.dot_dimension_numbers<[1], [0], [0], [1], [0, 0, 1, 1], [], []>} : vector<128x2xf32>, vector<2x128xf32>, vector<128x128xf32> -> vector<128x128xf32>
    %cst_19 = arith.constant dense<0xFF800000> : vector<128xf32>
    %27 = vector.multi_reduction <maximumf>, %26, %cst_19 [0] : vector<128x128xf32> to vector<128xf32>
    %28 = vector.shape_cast %27 : vector<128xf32> to vector<1x128xf32>
    %29 = vector.broadcast %28 : vector<1x128xf32> to vector<128x128xf32>
    %30 = arith.subf %26, %29 : vector<128x128xf32>
    %31 = math.exp %30 : vector<128x128xf32>
    %32 = vector.extract_strided_slice %22 {offsets = [0, 0], sizes = [2, 128], strides = [1, 1]} : vector<16x128xf32> to vector<2x128xf32>
    %33 = tpu.concatenate %32, %13 in 0 : vector<2x128xf32>, vector<1x128xf32> -> vector<3x128xf32>
    %cst_20 = arith.constant dense<0.000000e+00> : vector<3x128xf32>
    %34 = tpu.matmul %33, %31, %cst_20 {dimension_numbers = #tpu.dot_dimension_numbers<[1], [0], [0], [1], [0, 0, 1, 1], [], []>} : vector<3x128xf32>, vector<128x128xf32>, vector<3x128xf32> -> vector<3x128xf32>
    %35 = vector.extract_strided_slice %34 {offsets = [2, 0], sizes = [1, 128], strides = [1, 1]} : vector<3x128xf32> to vector<1x128xf32>
    %36 = tpu.reciprocal %35 : vector<1x128xf32> -> vector<1x128xf32>
    %37 = vector.broadcast %36 : vector<1x128xf32> to vector<3x128xf32>
    %38 = arith.mulf %34, %37 : vector<3x128xf32>
    %cst_21 = arith.constant dense<0.000000e+00> : vector<16x128xf32>
    %39 = tpu.matmul %2, %38, %cst_21 {dimension_numbers = #tpu.dot_dimension_numbers<[1], [0], [0], [1], [0, 0, 1, 1], [], []>} : vector<16x3xf32>, vector<3x128xf32>, vector<16x128xf32> -> vector<16x128xf32>
    %40 = vector.extract_strided_slice %23 {offsets = [0, 2], sizes = [128, 2], strides = [1, 1]} : vector<128x16xf32> to vector<128x2xf32>
    %41 = vector.extract_strided_slice %20 {offsets = [2, 0], sizes = [2, 128], strides = [1, 1]} : vector<16x128xf32> to vector<2x128xf32>
    %cst_22 = arith.constant dense<0.000000e+00> : vector<128x128xf32>
    %42 = tpu.matmul %40, %41, %cst_22 {dimension_numbers = #tpu.dot_dimension_numbers<[1], [0], [0], [1], [0, 0, 1, 1], [], []>} : vector<128x2xf32>, vector<2x128xf32>, vector<128x128xf32> -> vector<128x128xf32>
    %cst_23 = arith.constant dense<0xFF800000> : vector<128xf32>
    %43 = vector.multi_reduction <maximumf>, %42, %cst_23 [0] : vector<128x128xf32> to vector<128xf32>
    %44 = vector.shape_cast %43 : vector<128xf32> to vector<1x128xf32>
    %45 = vector.broadcast %44 : vector<1x128xf32> to vector<128x128xf32>
    %46 = arith.subf %42, %45 : vector<128x128xf32>
    %47 = math.exp %46 : vector<128x128xf32>
    %48 = vector.extract_strided_slice %22 {offsets = [2, 0], sizes = [2, 128], strides = [1, 1]} : vector<16x128xf32> to vector<2x128xf32>
    %49 = tpu.concatenate %48, %13 in 0 : vector<2x128xf32>, vector<1x128xf32> -> vector<3x128xf32>
    %cst_24 = arith.constant dense<0.000000e+00> : vector<3x128xf32>
    %50 = tpu.matmul %49, %47, %cst_24 {dimension_numbers = #tpu.dot_dimension_numbers<[1], [0], [0], [1], [0, 0, 1, 1], [], []>} : vector<3x128xf32>, vector<128x128xf32>, vector<3x128xf32> -> vector<3x128xf32>
    %51 = vector.extract_strided_slice %50 {offsets = [2, 0], sizes = [1, 128], strides = [1, 1]} : vector<3x128xf32> to vector<1x128xf32>
    %52 = tpu.reciprocal %51 : vector<1x128xf32> -> vector<1x128xf32>
    %53 = vector.broadcast %52 : vector<1x128xf32> to vector<3x128xf32>
    %54 = arith.mulf %50, %53 : vector<3x128xf32>
    %cst_25 = arith.constant dense<0.000000e+00> : vector<16x128xf32>
    %55 = tpu.matmul %4, %54, %cst_25 {dimension_numbers = #tpu.dot_dimension_numbers<[1], [0], [0], [1], [0, 0, 1, 1], [], []>} : vector<16x3xf32>, vector<3x128xf32>, vector<16x128xf32> -> vector<16x128xf32>
    %56 = arith.addf %39, %55 : vector<16x128xf32>
    %57 = vector.extract_strided_slice %23 {offsets = [0, 4], sizes = [128, 2], strides = [1, 1]} : vector<128x16xf32> to vector<128x2xf32>
    %58 = vector.extract_strided_slice %20 {offsets = [4, 0], sizes = [2, 128], strides = [1, 1]} : vector<16x128xf32> to vector<2x128xf32>
    %cst_26 = arith.constant dense<0.000000e+00> : vector<128x128xf32>
    %59 = tpu.matmul %57, %58, %cst_26 {dimension_numbers = #tpu.dot_dimension_numbers<[1], [0], [0], [1], [0, 0, 1, 1], [], []>} : vector<128x2xf32>, vector<2x128xf32>, vector<128x128xf32> -> vector<128x128xf32>
    %cst_27 = arith.constant dense<0xFF800000> : vector<128xf32>
    %60 = vector.multi_reduction <maximumf>, %59, %cst_27 [0] : vector<128x128xf32> to vector<128xf32>
    %61 = vector.shape_cast %60 : vector<128xf32> to vector<1x128xf32>
    %62 = vector.broadcast %61 : vector<1x128xf32> to vector<128x128xf32>
    %63 = arith.subf %59, %62 : vector<128x128xf32>
    %64 = math.exp %63 : vector<128x128xf32>
    %65 = vector.extract_strided_slice %22 {offsets = [4, 0], sizes = [2, 128], strides = [1, 1]} : vector<16x128xf32> to vector<2x128xf32>
    %66 = tpu.concatenate %65, %13 in 0 : vector<2x128xf32>, vector<1x128xf32> -> vector<3x128xf32>
    %cst_28 = arith.constant dense<0.000000e+00> : vector<3x128xf32>
    %67 = tpu.matmul %66, %64, %cst_28 {dimension_numbers = #tpu.dot_dimension_numbers<[1], [0], [0], [1], [0, 0, 1, 1], [], []>} : vector<3x128xf32>, vector<128x128xf32>, vector<3x128xf32> -> vector<3x128xf32>
    %68 = vector.extract_strided_slice %67 {offsets = [2, 0], sizes = [1, 128], strides = [1, 1]} : vector<3x128xf32> to vector<1x128xf32>
    %69 = tpu.reciprocal %68 : vector<1x128xf32> -> vector<1x128xf32>
    %70 = vector.broadcast %69 : vector<1x128xf32> to vector<3x128xf32>
    %71 = arith.mulf %67, %70 : vector<3x128xf32>
    %cst_29 = arith.constant dense<0.000000e+00> : vector<16x128xf32>
    %72 = tpu.matmul %6, %71, %cst_29 {dimension_numbers = #tpu.dot_dimension_numbers<[1], [0], [0], [1], [0, 0, 1, 1], [], []>} : vector<16x3xf32>, vector<3x128xf32>, vector<16x128xf32> -> vector<16x128xf32>
    %73 = arith.addf %56, %72 : vector<16x128xf32>
    %74 = vector.extract_strided_slice %23 {offsets = [0, 6], sizes = [128, 2], strides = [1, 1]} : vector<128x16xf32> to vector<128x2xf32>
    %75 = vector.extract_strided_slice %20 {offsets = [6, 0], sizes = [2, 128], strides = [1, 1]} : vector<16x128xf32> to vector<2x128xf32>
    %cst_30 = arith.constant dense<0.000000e+00> : vector<128x128xf32>
    %76 = tpu.matmul %74, %75, %cst_30 {dimension_numbers = #tpu.dot_dimension_numbers<[1], [0], [0], [1], [0, 0, 1, 1], [], []>} : vector<128x2xf32>, vector<2x128xf32>, vector<128x128xf32> -> vector<128x128xf32>
    %cst_31 = arith.constant dense<0xFF800000> : vector<128xf32>
    %77 = vector.multi_reduction <maximumf>, %76, %cst_31 [0] : vector<128x128xf32> to vector<128xf32>
    %78 = vector.shape_cast %77 : vector<128xf32> to vector<1x128xf32>
    %79 = vector.broadcast %78 : vector<1x128xf32> to vector<128x128xf32>
    %80 = arith.subf %76, %79 : vector<128x128xf32>
    %81 = math.exp %80 : vector<128x128xf32>
    %82 = vector.extract_strided_slice %22 {offsets = [6, 0], sizes = [2, 128], strides = [1, 1]} : vector<16x128xf32> to vector<2x128xf32>
    %83 = tpu.concatenate %82, %13 in 0 : vector<2x128xf32>, vector<1x128xf32> -> vector<3x128xf32>
    %cst_32 = arith.constant dense<0.000000e+00> : vector<3x128xf32>
    %84 = tpu.matmul %83, %81, %cst_32 {dimension_numbers = #tpu.dot_dimension_numbers<[1], [0], [0], [1], [0, 0, 1, 1], [], []>} : vector<3x128xf32>, vector<128x128xf32>, vector<3x128xf32> -> vector<3x128xf32>
    %85 = vector.extract_strided_slice %84 {offsets = [2, 0], sizes = [1, 128], strides = [1, 1]} : vector<3x128xf32> to vector<1x128xf32>
    %86 = tpu.reciprocal %85 : vector<1x128xf32> -> vector<1x128xf32>
    %87 = vector.broadcast %86 : vector<1x128xf32> to vector<3x128xf32>
    %88 = arith.mulf %84, %87 : vector<3x128xf32>
    %cst_33 = arith.constant dense<0.000000e+00> : vector<16x128xf32>
    %89 = tpu.matmul %8, %88, %cst_33 {dimension_numbers = #tpu.dot_dimension_numbers<[1], [0], [0], [1], [0, 0, 1, 1], [], []>} : vector<16x3xf32>, vector<3x128xf32>, vector<16x128xf32> -> vector<16x128xf32>
    %90 = arith.addf %73, %89 : vector<16x128xf32>
    %91 = vector.extract_strided_slice %23 {offsets = [0, 8], sizes = [128, 2], strides = [1, 1]} : vector<128x16xf32> to vector<128x2xf32>
    %92 = vector.extract_strided_slice %20 {offsets = [8, 0], sizes = [2, 128], strides = [1, 1]} : vector<16x128xf32> to vector<2x128xf32>
    %cst_34 = arith.constant dense<0.000000e+00> : vector<128x128xf32>
    %93 = tpu.matmul %91, %92, %cst_34 {dimension_numbers = #tpu.dot_dimension_numbers<[1], [0], [0], [1], [0, 0, 1, 1], [], []>} : vector<128x2xf32>, vector<2x128xf32>, vector<128x128xf32> -> vector<128x128xf32>
    %cst_35 = arith.constant dense<0xFF800000> : vector<128xf32>
    %94 = vector.multi_reduction <maximumf>, %93, %cst_35 [0] : vector<128x128xf32> to vector<128xf32>
    %95 = vector.shape_cast %94 : vector<128xf32> to vector<1x128xf32>
    %96 = vector.broadcast %95 : vector<1x128xf32> to vector<128x128xf32>
    %97 = arith.subf %93, %96 : vector<128x128xf32>
    %98 = math.exp %97 : vector<128x128xf32>
    %99 = vector.extract_strided_slice %22 {offsets = [8, 0], sizes = [2, 128], strides = [1, 1]} : vector<16x128xf32> to vector<2x128xf32>
    %100 = tpu.concatenate %99, %13 in 0 : vector<2x128xf32>, vector<1x128xf32> -> vector<3x128xf32>
    %cst_36 = arith.constant dense<0.000000e+00> : vector<3x128xf32>
    %101 = tpu.matmul %100, %98, %cst_36 {dimension_numbers = #tpu.dot_dimension_numbers<[1], [0], [0], [1], [0, 0, 1, 1], [], []>} : vector<3x128xf32>, vector<128x128xf32>, vector<3x128xf32> -> vector<3x128xf32>
    %102 = vector.extract_strided_slice %101 {offsets = [2, 0], sizes = [1, 128], strides = [1, 1]} : vector<3x128xf32> to vector<1x128xf32>
    %103 = tpu.reciprocal %102 : vector<1x128xf32> -> vector<1x128xf32>
    %104 = vector.broadcast %103 : vector<1x128xf32> to vector<3x128xf32>
    %105 = arith.mulf %101, %104 : vector<3x128xf32>
    %cst_37 = arith.constant dense<0.000000e+00> : vector<16x128xf32>
    %106 = tpu.matmul %10, %105, %cst_37 {dimension_numbers = #tpu.dot_dimension_numbers<[1], [0], [0], [1], [0, 0, 1, 1], [], []>} : vector<16x3xf32>, vector<3x128xf32>, vector<16x128xf32> -> vector<16x128xf32>
    %107 = arith.addf %90, %106 : vector<16x128xf32>
    %108 = vector.extract_strided_slice %23 {offsets = [0, 10], sizes = [128, 2], strides = [1, 1]} : vector<128x16xf32> to vector<128x2xf32>
    %109 = vector.extract_strided_slice %20 {offsets = [10, 0], sizes = [2, 128], strides = [1, 1]} : vector<16x128xf32> to vector<2x128xf32>
    %cst_38 = arith.constant dense<0.000000e+00> : vector<128x128xf32>
    %110 = tpu.matmul %108, %109, %cst_38 {dimension_numbers = #tpu.dot_dimension_numbers<[1], [0], [0], [1], [0, 0, 1, 1], [], []>} : vector<128x2xf32>, vector<2x128xf32>, vector<128x128xf32> -> vector<128x128xf32>
    %cst_39 = arith.constant dense<0xFF800000> : vector<128xf32>
    %111 = vector.multi_reduction <maximumf>, %110, %cst_39 [0] : vector<128x128xf32> to vector<128xf32>
    %112 = vector.shape_cast %111 : vector<128xf32> to vector<1x128xf32>
    %113 = vector.broadcast %112 : vector<1x128xf32> to vector<128x128xf32>
    %114 = arith.subf %110, %113 : vector<128x128xf32>
    %115 = math.exp %114 : vector<128x128xf32>
    %116 = vector.extract_strided_slice %22 {offsets = [10, 0], sizes = [2, 128], strides = [1, 1]} : vector<16x128xf32> to vector<2x128xf32>
    %117 = tpu.concatenate %116, %13 in 0 : vector<2x128xf32>, vector<1x128xf32> -> vector<3x128xf32>
    %cst_40 = arith.constant dense<0.000000e+00> : vector<3x128xf32>
    %118 = tpu.matmul %117, %115, %cst_40 {dimension_numbers = #tpu.dot_dimension_numbers<[1], [0], [0], [1], [0, 0, 1, 1], [], []>} : vector<3x128xf32>, vector<128x128xf32>, vector<3x128xf32> -> vector<3x128xf32>
    %119 = vector.extract_strided_slice %118 {offsets = [2, 0], sizes = [1, 128], strides = [1, 1]} : vector<3x128xf32> to vector<1x128xf32>
    %120 = tpu.reciprocal %119 : vector<1x128xf32> -> vector<1x128xf32>
    %121 = vector.broadcast %120 : vector<1x128xf32> to vector<3x128xf32>
    %122 = arith.mulf %118, %121 : vector<3x128xf32>
    %cst_41 = arith.constant dense<0.000000e+00> : vector<16x128xf32>
    %123 = tpu.matmul %12, %122, %cst_41 {dimension_numbers = #tpu.dot_dimension_numbers<[1], [0], [0], [1], [0, 0, 1, 1], [], []>} : vector<16x3xf32>, vector<3x128xf32>, vector<16x128xf32> -> vector<16x128xf32>
    %124 = arith.addf %107, %123 : vector<16x128xf32>
    %125 = vector.extract_strided_slice %124 {offsets = [0, 0], sizes = [12, 128], strides = [1, 1]} : vector<16x128xf32> to vector<12x128xf32>
    %126 = arith.index_cast %15 : i32 to index
    %c0_42 = arith.constant 0 : index
    %c0_43 = arith.constant 0 : index
    %127 = vector.load %arg4[%126, %c0_42, %c0_43] : memref<1x12x128xf32, #tpu.memory_space<vmem>>, vector<1x12x128xf32>
    %128 = vector.shape_cast %127 : vector<1x12x128xf32> to vector<12x128xf32>
    %129 = vector.shape_cast %125 : vector<12x128xf32> to vector<1x12x128xf32>
    tpu.vector_store %arg4[%126, %c0_42, %c0_43], %129 {strides = array<i32>} : memref<1x12x128xf32, #tpu.memory_space<vmem>>, vector<1x12x128xf32>,
    %c1_i32_44 = arith.constant 1 : i32
    return
  }
  func.func @transform_0(%arg0: i32) -> (i32, i32, i32) {
    %c0_i32 = arith.constant 0 : i32
    %c0_i32_0 = arith.constant 0 : i32
    %c0_i32_1 = arith.constant 0 : i32
    return %arg0, %c0_i32, %c0_i32_0 : i32, i32, i32
  }
  func.func @transform_1(%arg0: i32) -> (i32, i32) {
    %c0_i32 = arith.constant 0 : i32
    %c0_i32_0 = arith.constant 0 : i32
    %c0_i32_1 = arith.constant 0 : i32
    return %c0_i32, %c0_i32_0 : i32, i32
  }
  func.func @transform_2(%arg0: i32) -> (i32, i32, i32) {
    %c0_i32 = arith.constant 0 : i32
    %c0_i32_0 = arith.constant 0 : i32
    %c0_i32_1 = arith.constant 0 : i32
    %c0_i32_2 = arith.constant 0 : i32
    return %c0_i32, %c0_i32_0, %c0_i32_1 : i32, i32, i32
  }
  func.func @transform_3(%arg0: i32) -> (i32, i32, i32) {
    %c0_i32 = arith.constant 0 : i32
    %c0_i32_0 = arith.constant 0 : i32
    %c0_i32_1 = arith.constant 0 : i32
    return %arg0, %c0_i32, %c0_i32_0 : i32, i32, i32
  }
}

</mosaic_0001>

<llo_original>
// kernel: multihead_self_attention.1
$region0: #{multihead_self_attention.1}
  #allocation0 [shape = 'u32[]', space=smem, size = 0x4, offset = 0x4, fixed_abs, tag = 'smem constant byte address 0x4 - core index']
  #allocation1 [shape = 'u32[144,128]{1,0:T(1,128)}', space=vmem, size = 0x12000, scoped, tag = 'internal scratch']
  %s0 = inlined_call_operand.vmem [shape: f32[4,16,128], index: 0, kind: input, shape index: {}]
  %s1 = inlined_call_operand.vmem [shape: f32[48,16], index: 1, kind: input, shape index: {}]
  %s2 = inlined_call_operand.vmem [shape: f32[6,16,3], index: 2, kind: input, shape index: {}]
  %s3 = inlined_call_operand.vmem [shape: f32[4,12,128], index: 3, kind: output, shape index: {}]
  %s4 = sld [smem:[#allocation0]]
  $region45: #{multihead_self_attention.1} parent=0
    _
  %s6 = ssub.s32 1, %s4
  %s7 = scalar_select 0, %s6, %s4
  loop: start=0, step=1, limit=6
  $region2: #{multihead_self_attention.1} parent=0 // loop_pre_header
    _
  $region3: #{multihead_self_attention.1} parent=0 // loop_header
    %s9 = sphi 0, %s13
    %p10 = scmp.ge.s32.totalorder %s9, 6
    %s19 = sphi 0, %s21
    %s22 = sphi 0, %s19
    %s23 = sphi 0, %s22
    %s39 = sphi 0, %s23
    %s43 = sphi 0, %s43
    %s45 = sphi 0, %s43
    %s46 = sphi 0, %s45
    %s60 = sphi 0, %s46
    %s64 = sphi 0, %s64
    %s66 = sphi 0, %s64
    %s67 = sphi 0, %s66
    %s81 = sphi 0, %s67
    %s87 = sphi 0, %s89
    %s90 = sphi 0, %s87
    %s91 = sphi 0, %s90
    %s107 = sphi 0, %s91
  $region4: #{multihead_self_attention.1} parent=0 // loop_header_branch
    %12 = sbr.rel (%p10) target = $region8
  $region5: #{multihead_self_attention.1} parent=0 // loop_body
    %s14 = ssub.s32 %s9, 1
    %s15 = ssub.s32 %s9, 2
    %s16 = sadd.s32 %s9, 1
    %s17 = ssub.s32 %s9, %s16
    %p18 = scmp.eq.s32.totalorder %s17, 0
    %s20 = sadd.s32 %s19, 1
    %s21 = scalar_select %p18, %s19, %s20
    %p24 = pneg %p18
    %p25 = scmp.eq.s32.totalorder %s9, 3
    %p26 = por %p24, %p25
    %p27 = scmp.ne.s32.totalorder %s19, %s22
    %p28 = scmp.eq.s32.totalorder %s9, 0
    %p29 = por %p27, %p28
    %p30 = scmp.ne.s32.totalorder %s19, %s22
    %p31 = scmp.eq.s32.totalorder %s14, 3
    %p32 = por %p30, %p31
    %p33 = scmp.ne.s32.totalorder %s22, %s23
    %p34 = scmp.eq.s32.totalorder %s14, 0
    %p35 = por %p33, %p34
    %p36 = scmp.ne.s32.totalorder %s22, %s23
    %p37 = scmp.eq.s32.totalorder %s15, 3
    %p38 = por %p36, %p37
    %p40 = scmp.ne.s32.totalorder %s23, %s39
    %p41 = scmp.eq.s32.totalorder %s15, 0
    %p42 = por %p40, %p41
    %s44 = sadd.s32 %s43, 1
    %p47 = scmp.eq.s32.totalorder %s9, 3
    %p48 = scmp.ne.s32.totalorder %s43, %s45
    %p49 = scmp.eq.s32.totalorder %s9, 0
    %p50 = por %p48, %p49
    %p51 = scmp.ne.s32.totalorder %s43, %s45
    %p52 = scmp.eq.s32.totalorder %s14, 3
    %p53 = por %p51, %p52
    %p54 = scmp.ne.s32.totalorder %s45, %s46
    %p55 = scmp.eq.s32.totalorder %s14, 0
    %p56 = por %p54, %p55
    %p57 = scmp.ne.s32.totalorder %s45, %s46
    %p58 = scmp.eq.s32.totalorder %s15, 3
    %p59 = por %p57, %p58
    %p61 = scmp.ne.s32.totalorder %s46, %s60
    %p62 = scmp.eq.s32.totalorder %s15, 0
    %p63 = por %p61, %p62
    %s65 = sadd.s32 %s64, 1
    %p68 = scmp.eq.s32.totalorder %s9, 3
    %p69 = scmp.ne.s32.totalorder %s64, %s66
    %p70 = scmp.eq.s32.totalorder %s9, 0
    %p71 = por %p69, %p70
    %p72 = scmp.ne.s32.totalorder %s64, %s66
    %p73 = scmp.eq.s32.totalorder %s14, 3
    %p74 = por %p72, %p73
    %p75 = scmp.ne.s32.totalorder %s66, %s67
    %p76 = scmp.eq.s32.totalorder %s14, 0
    %p77 = por %p75, %p76
    %p78 = scmp.ne.s32.totalorder %s66, %s67
    %p79 = scmp.eq.s32.totalorder %s15, 3
    %p80 = por %p78, %p79
    %p82 = scmp.ne.s32.totalorder %s67, %s81
    %p83 = scmp.eq.s32.totalorder %s15, 0
    %p84 = por %p82, %p83
    %s85 = ssub.s32 %s9, %s16
    %p86 = scmp.eq.s32.totalorder %s85, 0
    %s88 = sadd.s32 %s87, 1
    %s89 = scalar_select %p86, %s87, %s88
    %p92 = pneg %p86
    %p93 = scmp.eq.s32.totalorder %s9, 3
    %p94 = por %p92, %p93
    %p95 = scmp.ne.s32.totalorder %s87, %s90
    %p96 = scmp.eq.s32.totalorder %s9, 0
    %p97 = por %p95, %p96
    %p98 = scmp.ne.s32.totalorder %s87, %s90
    %p99 = scmp.eq.s32.totalorder %s14, 3
    %p100 = por %p98, %p99
    %p101 = scmp.ne.s32.totalorder %s90, %s91
    %p102 = scmp.eq.s32.totalorder %s14, 0
    %p103 = por %p101, %p102
    %p104 = scmp.ne.s32.totalorder %s90, %s91
    %p105 = scmp.eq.s32.totalorder %s15, 3
    %p106 = por %p104, %p105
    %p108 = scmp.ne.s32.totalorder %s91, %s107
    %p109 = scmp.eq.s32.totalorder %s15, 0
    %p110 = por %p108, %p109
    %p111 = scmp.le.s32.totalorder 1, %s9
    %p112 = scmp.lt.s32.totalorder %s9, 5
    %p113 = pnand %p111, %p112
    %p114 = pneg %p113
    // Predicated region
    $region9: #{multihead_self_attention.1} parent=5 // pred_check
      _
    $region10: #{multihead_self_attention.1} parent=5 // pred_check_branch
      %116 = sbr.rel (%p113) target = $region12
    $region11: #{multihead_self_attention.1} parent=5 // pred_region
      %s117 = ssub.s32 %s9, 1
      // Predicated region
      $region13: #{multihead_self_attention.1} parent=11 // pred_check
        %p118 = pneg %p56
      $region14: #{multihead_self_attention.1} parent=11 // pred_check_branch
        %120 = sbr.rel (%p118) target = $region16
      $region15: #{multihead_self_attention.1} parent=11 // pred_region
        _
      $region16: #{multihead_self_attention.1} parent=11 // pred_fallthru
        _
      // Predicated region
      $region17: #{multihead_self_attention.1} parent=11 // pred_check
        %p121 = pneg %p77
      $region18: #{multihead_self_attention.1} parent=11 // pred_check_branch
        %123 = sbr.rel (%p121) target = $region20
      $region19: #{multihead_self_attention.1} parent=11 // pred_region
        _
      $region20: #{multihead_self_attention.1} parent=11 // pred_fallthru
        _
    $region12: #{multihead_self_attention.1} parent=5 // pred_fallthru
      _
    %p124 = scmp.lt.s32.totalorder %s9, 4
    // Predicated region
    $region21: #{multihead_self_attention.1} parent=5 // pred_check
      %p125 = pneg %p124
    $region22: #{multihead_self_attention.1} parent=5 // pred_check_branch
      %127 = sbr.rel (%p125) target = $region24
    $region23: #{multihead_self_attention.1} parent=5 // pred_region
      // Predicated region
      $region25: #{multihead_self_attention.1} parent=23 // pred_check
        %p128 = pneg %p29
      $region26: #{multihead_self_attention.1} parent=23 // pred_check_branch
        %130 = sbr.rel (%p128) target = $region28
      $region27: #{multihead_self_attention.1} parent=23 // pred_region
        %p131 = scmp.lt.s32.totalorder %s9, 3
        %s132 = scalar_select %p131, %s9, 3
        %s133 = smul.addr %s132, 2
        %s134 = smul.addr %s133, 8
        %s135 = scalar_lea.vmem %s0, %s134
      $region28: #{multihead_self_attention.1} parent=23 // pred_fallthru
        _
    $region24: #{multihead_self_attention.1} parent=5 // pred_fallthru
      _
    %p136 = scmp.le.s32.totalorder 1, %s9
    %p137 = scmp.lt.s32.totalorder %s9, 5
    %p138 = pnand %p136, %p137
    %p139 = pneg %p138
    // Predicated region
    $region29: #{multihead_self_attention.1} parent=5 // pred_check
      _
    $region30: #{multihead_self_attention.1} parent=5 // pred_check_branch
      %141 = sbr.rel (%p138) target = $region32
    $region31: #{multihead_self_attention.1} parent=5 // pred_region
      %s142 = ssub.s32 %s9, 1
      %p143 = scmp.lt.s32.totalorder %s14, 3
      %s144 = scalar_select %p143, %s14, 3
      %s145 = smul.addr %s144, 2
      %s146 = smul.addr %s145, 8
      %s147 = scalar_lea.vmem %s0, %s146
      %p148 = pneg %p35
      %p149 = pneg %p32
      %p150 = pneg %p56
      %p151 = pneg %p53
      %p152 = pneg %p77
      %p153 = pneg %p74
      %p154 = pneg %p103
      %p155 = pneg %p100
      %p156 = scmp.lt.s32.totalorder %s14, 3
      %s157 = scalar_select %p156, %s14, 3
      %s158 = smul.addr %s157, 2
      %s159 = smul.addr %s158, 8
      %s160 = scalar_lea.vmem %s3, %s159
      %p161 = scmp.lt.s32.totalorder %s14, 3
      %s162 = scalar_select %p161, %s14, 3
      %s163 = smul.addr %s162, 2
      %s164 = smul.addr %s163, 8
      %s165 = scalar_lea.vmem %s0, %s164
      %p166 = scmp.lt.s32.totalorder %s14, 3
      %s167 = scalar_select %p166, %s14, 3
      %s168 = smul.addr %s167, 2
      %s169 = smul.addr %s168, 8
      %s170 = scalar_lea.vmem %s3, %s169
      %v171 = vld [vmem:[%s1] sm:$0xff]
      %v172 = vld [vmem:[%s1 + $0x8] sm:$0xff]
      %v173 = vld [vmem:[%s1 + $0x10] sm:$0xff]
      %v174 = vld [vmem:[%s1 + $0x18] sm:$0xff]
      %v175 = vld [vmem:[%s1 + $0x20] sm:$0xff]
      %v176 = vld [vmem:[%s1 + $0x28] sm:$0xff]
      %v177 = vld [vmem:[%s2] sm:$0xff]
      %v178 = vld [vmem:[%s2 + $0x8] sm:$0xff]
      %s179 = scalar_lea.vmem %s2, 16
      %v180 = vld [vmem:[%s179] sm:$0xff]
      %v181 = vld [vmem:[%s179 + $0x8] sm:$0xff]
      %s182 = scalar_lea.vmem %s2, 32
      %v183 = vld [vmem:[%s182] sm:$0xff]
      %v184 = vld [vmem:[%s182 + $0x8] sm:$0xff]
      %s185 = scalar_lea.vmem %s2, 48
      %v186 = vld [vmem:[%s185] sm:$0xff]
      %v187 = vld [vmem:[%s185 + $0x8] sm:$0xff]
      %s188 = scalar_lea.vmem %s2, 64
      %v189 = vld [vmem:[%s188] sm:$0xff]
      %v190 = vld [vmem:[%s188 + $0x8] sm:$0xff]
      %s191 = scalar_lea.vmem %s2, 80
      %v192 = vld [vmem:[%s191] sm:$0xff]
      %v193 = vld [vmem:[%s191 + $0x8] sm:$0xff]
      %v194 = vld [vmem:[%s165] sm:$0xff]
      %v195 = vld [vmem:[%s165 + $0x8] sm:$0xff]
      %vm196 = vcmask 130048
      %v198 = vsel %vm196, %v171, 0
      %v201 = vsel %vm196, %v172, 0
      %v204 = vsel %vm196, %v173, 0
      %v207 = vsel %vm196, %v174, 0
      %v210 = vsel %vm196, %v175, 0
      %v213 = vsel %vm196, %v176, 0
      %215 = vmatprep.subr.mxu0 0.0
      %216 = vmatpush1.msra.mxu0 %v194
      %217 = vmatprep.subr.mxu0 0.0
      %218 = vmatpush1.msra.mxu0 %v195
      %219 = vmatprep.subr.mxu0 0.0
      %220 = vmatpush1.msra.mxu0 0.0
      %221 = vmatprep.subr.mxu0 0.0
      %222 = vmatpush1.msra.mxu0 0.0
      %223 = vmatprep.subr.mxu0 0.0
      %224 = vmatpush1.msra.mxu0 0.0
      %225 = vmatprep.subr.mxu0 0.0
      %226 = vmatpush1.msra.mxu0 0.0
      %227 = vmatprep.subr.mxu0 0.0
      %228 = vmatpush1.msra.mxu0 0.0
      %229 = vmatprep.subr.mxu0 0.0
      %230 = vmatpush1.msra.mxu0 0.0
      %231 = vmatprep.subr.mxu0 0.0
      %232 = vmatpush1.msra.mxu0 0.0
      %233 = vmatprep.subr.mxu0 0.0
      %234 = vmatpush1.msra.mxu0 0.0
      %235 = vmatprep.subr.mxu0 0.0
      %236 = vmatpush1.msra.mxu0 0.0
      %237 = vmatprep.subr.mxu0 0.0
      %238 = vmatpush1.msra.mxu0 0.0
      %239 = vmatprep.subr.mxu0 0.0
      %240 = vmatpush1.msra.mxu0 0.0
      %241 = vmatprep.subr.mxu0 0.0
      %242 = vmatpush1.msra.mxu0 0.0
      %243 = vmatprep.subr.mxu0 0.0
      %244 = vmatpush1.msra.mxu0 0.0
      %245 = vmatprep.subr.mxu0 0.0
      %246 = vmatpush1.msra.mxu0 0.0
      %247 = vmatprep.subr.mxu0 0.0
      %248 = vmatpush1.msra.mxu0 0.0
      %249 = vmatprep.subr.mxu0 0.0
      %250 = vmatpush1.msra.mxu0 0.0
      %251 = vmatprep.subr.mxu0 0.0
      %252 = vmatpush1.msra.mxu0 0.0
      %253 = vmatprep.subr.mxu0 0.0
      %254 = vmatpush1.msra.mxu0 0.0
      %255 = vmatprep.subr.mxu0 0.0
      %256 = vmatpush1.msra.mxu0 0.0
      %257 = vmatprep.subr.mxu0 0.0
      %258 = vmatpush1.msra.mxu0 0.0
      %259 = vmatprep.subr.mxu0 0.0
      %260 = vmatpush1.msra.mxu0 0.0
      %261 = vmatprep.subr.mxu0 0.0
      %262 = vmatpush1.msra.mxu0 0.0
      %263 = vmatprep.subr.mxu0 0.0
      %264 = vmatpush1.msra.mxu0 0.0
      %265 = vmatprep.subr.mxu0 0.0
      %266 = vmatpush1.msra.mxu0 0.0
      %267 = vmatprep.subr.mxu0 0.0
      %268 = vmatpush1.msra.mxu0 0.0
      %269 = vmatprep.subr.mxu0 0.0
      %270 = vmatpush1.msra.mxu0 0.0
      %271 = vmatprep.subr.mxu0 0.0
      %272 = vmatpush1.msra.mxu0 0.0
      %273 = vmatprep.subr.mxu0 0.0
      %274 = vmatpush1.msra.mxu0 0.0
      %275 = vmatprep.subr.mxu0 0.0
      %276 = vmatpush1.msra.mxu0 0.0
      %277 = vmatprep.subr.mxu0 0.0
      %278 = vmatpush1.msra.mxu0 0.0
      %279 = vmatprep.mubr.f32.mxu0 0.0
      %280 = vmatmul.mubr.f32.gmra.mrb[0].mxu0 %v198
      %v281 = vpop.f32.mrb[0].mxu0
      %v282 = vadd.f32 0.0, %v281
      %v283 = vpop.f32.mrb[0].mxu0
      %284 = vmatprep.mubr.f32.mxu0 0.0
      %285 = vmatmul.mubr.f32.gmra.mrb[0].mxu0 %v201
      %v286 = vpop.f32.mrb[0].mxu0
      %v287 = vadd.f32 0.0, %v286
      %v288 = vpop.f32.mrb[0].mxu0
      %289 = vmatprep.mubr.f32.mxu0 0.0
      %290 = vmatmul.mubr.f32.gmra.mrb[0].mxu0 %v204
      %v291 = vpop.f32.mrb[0].mxu0
      %v292 = vadd.f32 0.0, %v291
      %v293 = vpop.f32.mrb[0].mxu0
      %294 = vmatprep.mubr.f32.mxu0 0.0
      %295 = vmatmul.mubr.f32.gmra.mrb[0].mxu0 %v207
      %v296 = vpop.f32.mrb[0].mxu0
      %v297 = vadd.f32 0.0, %v296
      %v298 = vpop.f32.mrb[0].mxu0
      %299 = vmatprep.mubr.f32.mxu0 0.0
      %300 = vmatmul.mubr.f32.gmra.mrb[0].mxu0 %v210
      %v301 = vpop.f32.mrb[0].mxu0
      %v302 = vadd.f32 0.0, %v301
      %v303 = vpop.f32.mrb[0].mxu0
      %304 = vmatprep.mubr.f32.mxu0 0.0
      %305 = vmatmul.mubr.f32.gmra.mrb[0].mxu0 %v213
      %v306 = vpop.f32.mrb[0].mxu0
      %v307 = vadd.f32 0.0, %v306
      %v308 = vpop.f32.mrb[0].mxu0
      %309 = vdwg.mxu0
      %310 = vxpose.xlu0.b32.start [1/16] %v292, 128
      %311 = vxpose.xlu0.b32.cont [2/16] %v297, 128
      %312 = vxpose.xlu0.b32.cont [3/16] 0.0, 128
      %313 = vxpose.xlu0.b32.cont [4/16] 0.0, 128
      %314 = vxpose.xlu0.b32.cont [5/16] 0.0, 128
      %315 = vxpose.xlu0.b32.cont [6/16] 0.0, 128
      %316 = vxpose.xlu0.b32.cont [7/16] 0.0, 128
      %317 = vxpose.xlu0.b32.cont [8/16] 0.0, 128
      %318 = vxpose.xlu0.b32.cont [9/16] 0.0, 128
      %319 = vxpose.xlu0.b32.cont [10/16] 0.0, 128
      %320 = vxpose.xlu0.b32.cont [11/16] 0.0, 128
      %321 = vxpose.xlu0.b32.cont [12/16] 0.0, 128
      %322 = vxpose.xlu0.b32.cont [13/16] 0.0, 128
      %323 = vxpose.xlu0.b32.cont [14/16] 0.0, 128
      %324 = vxpose.xlu0.b32.cont [15/16] 0.0, 128
      %325 = vxpose.xlu0.b32.end [16/16] 0.0, 128
      %v326 = vpop.trf.xlu0
      %v327 = vpop.trf.xlu0
      %v328 = vpop.trf.xlu0
      %v329 = vpop.trf.xlu0
      %v330 = vpop.trf.xlu0
      %v331 = vpop.trf.xlu0
      %v332 = vpop.trf.xlu0
      %v333 = vpop.trf.xlu0
      %v334 = vpop.trf.xlu0
      %v335 = vpop.trf.xlu0
      %v336 = vpop.trf.xlu0
      %v337 = vpop.trf.xlu0
      %v338 = vpop.trf.xlu0
      %v339 = vpop.trf.xlu0
      %v340 = vpop.trf.xlu0
      %v341 = vpop.trf.xlu0
      %vm342 = vcmask 15360
      %v344 = vsel %vm342, %v326, 0
      %v347 = vsel %vm342, %v327, 0
      %v350 = vsel %vm342, %v328, 0
      %v353 = vsel %vm342, %v329, 0
      %v356 = vsel %vm342, %v330, 0
      %v359 = vsel %vm342, %v331, 0
      %v362 = vsel %vm342, %v332, 0
      %v365 = vsel %vm342, %v333, 0
      %v368 = vsel %vm342, %v334, 0
      %v371 = vsel %vm342, %v335, 0
      %v374 = vsel %vm342, %v336, 0
      %v377 = vsel %vm342, %v337, 0
      %v380 = vsel %vm342, %v338, 0
      %v383 = vsel %vm342, %v339, 0
      %v386 = vsel %vm342, %v340, 0
      %v389 = vsel %vm342, %v341, 0
      %vm391 = vcmask 1041408
      %v393 = vsel %vm391, %v282, 0
      %395 = vmatprep.subr.mxu0 0.0
      %396 = vmatpush1.msra.mxu0 %v393
      %397 = vmatprep.subr.mxu0 0.0
      %398 = vmatpush1.msra.mxu0 0.0
      %399 = vmatprep.subr.mxu0 0.0
      %400 = vmatpush1.msra.mxu0 0.0
      %401 = vmatprep.subr.mxu0 0.0
      %402 = vmatpush1.msra.mxu0 0.0
      %403 = vmatprep.subr.mxu0 0.0
      %404 = vmatpush1.msra.mxu0 0.0
      %405 = vmatprep.subr.mxu0 0.0
      %406 = vmatpush1.msra.mxu0 0.0
      %407 = vmatprep.subr.mxu0 0.0
      %408 = vmatpush1.msra.mxu0 0.0
      %409 = vmatprep.subr.mxu0 0.0
      %410 = vmatpush1.msra.mxu0 0.0
      %411 = vmatprep.subr.mxu0 0.0
      %412 = vmatpush1.msra.mxu0 0.0
      %413 = vmatprep.subr.mxu0 0.0
      %414 = vmatpush1.msra.mxu0 0.0
      %415 = vmatprep.subr.mxu0 0.0
      %416 = vmatpush1.msra.mxu0 0.0
      %417 = vmatprep.subr.mxu0 0.0
      %418 = vmatpush1.msra.mxu0 0.0
      %419 = vmatprep.subr.mxu0 0.0
      %420 = vmatpush1.msra.mxu0 0.0
      %421 = vmatprep.subr.mxu0 0.0
      %422 = vmatpush1.msra.mxu0 0.0
      %423 = vmatprep.subr.mxu0 0.0
      %424 = vmatpush1.msra.mxu0 0.0
      %425 = vmatprep.subr.mxu0 0.0
      %426 = vmatpush1.msra.mxu0 0.0
      %427 = vmatprep.subr.mxu0 0.0
      %428 = vmatpush1.msra.mxu0 0.0
      %429 = vmatprep.subr.mxu0 0.0
      %430 = vmatpush1.msra.mxu0 0.0
      %431 = vmatprep.subr.mxu0 0.0
      %432 = vmatpush1.msra.mxu0 0.0
      %433 = vmatprep.subr.mxu0 0.0
      %434 = vmatpush1.msra.mxu0 0.0
      %435 = vmatprep.subr.mxu0 0.0
      %436 = vmatpush1.msra.mxu0 0.0
      %437 = vmatprep.subr.mxu0 0.0
      %438 = vmatpush1.msra.mxu0 0.0
      %439 = vmatprep.subr.mxu0 0.0
      %440 = vmatpush1.msra.mxu0 0.0
      %441 = vmatprep.subr.mxu0 0.0
      %442 = vmatpush1.msra.mxu0 0.0
      %443 = vmatprep.subr.mxu0 0.0
      %444 = vmatpush1.msra.mxu0 0.0
      %445 = vmatprep.subr.mxu0 0.0
      %446 = vmatpush1.msra.mxu0 0.0
      %447 = vmatprep.subr.mxu0 0.0
      %448 = vmatpush1.msra.mxu0 0.0
      %449 = vmatprep.subr.mxu0 0.0
      %450 = vmatpush1.msra.mxu0 0.0
      %451 = vmatprep.subr.mxu0 0.0
      %452 = vmatpush1.msra.mxu0 0.0
      %453 = vmatprep.subr.mxu0 0.0
      %454 = vmatpush1.msra.mxu0 0.0
      %455 = vmatprep.subr.mxu0 0.0
      %456 = vmatpush1.msra.mxu0 0.0
      %457 = vmatprep.subr.mxu0 0.0
      %458 = vmatpush1.msra.mxu0 0.0
      %459 = vmatprep.mubr.f32.mxu0 0.0
      %460 = vmatmul.mubr.f32.gmra.mrb[0].mxu0 %v344
      %v461 = vpop.f32.mrb[0].mxu0
      %v462 = vadd.f32 0.0, %v461
      %v463 = vpop.f32.mrb[0].mxu0
      %464 = vmatprep.mubr.f32.mxu0 0.0
      %465 = vmatmul.mubr.f32.gmra.mrb[0].mxu0 %v347
      %v466 = vpop.f32.mrb[0].mxu0
      %v467 = vadd.f32 0.0, %v466
      %v468 = vpop.f32.mrb[0].mxu0
      %469 = vmatprep.mubr.f32.mxu0 0.0
      %470 = vmatmul.mubr.f32.gmra.mrb[0].mxu0 %v350
      %v471 = vpop.f32.mrb[0].mxu0
      %v472 = vadd.f32 0.0, %v471
      %v473 = vpop.f32.mrb[0].mxu0
      %474 = vmatprep.mubr.f32.mxu0 0.0
      %475 = vmatmul.mubr.f32.gmra.mrb[0].mxu0 %v353
      %v476 = vpop.f32.mrb[0].mxu0
      %v477 = vadd.f32 0.0, %v476
      %v478 = vpop.f32.mrb[0].mxu0
      %479 = vmatprep.mubr.f32.mxu0 0.0
      %480 = vmatmul.mubr.f32.gmra.mrb[0].mxu0 %v356
      %v481 = vpop.f32.mrb[0].mxu0
      %v482 = vadd.f32 0.0, %v481
      %v483 = vpop.f32.mrb[0].mxu0
      %484 = vmatprep.mubr.f32.mxu0 0.0
      %485 = vmatmul.mubr.f32.gmra.mrb[0].mxu0 %v359
      %v486 = vpop.f32.mrb[0].mxu0
      %v487 = vadd.f32 0.0, %v486
      %v488 = vpop.f32.mrb[0].mxu0
      %489 = vmatprep.mubr.f32.mxu0 0.0
      %490 = vmatmul.mubr.f32.gmra.mrb[0].mxu0 %v362
      %v491 = vpop.f32.mrb[0].mxu0
      %v492 = vadd.f32 0.0, %v491
      %v493 = vpop.f32.mrb[0].mxu0
      %494 = vmatprep.mubr.f32.mxu0 0.0
      %495 = vmatmul.mubr.f32.gmra.mrb[0].mxu0 %v365
      %v496 = vpop.f32.mrb[0].mxu0
      %v497 = vadd.f32 0.0, %v496
      %v498 = vpop.f32.mrb[0].mxu0
      %499 = vmatprep.mubr.f32.mxu0 0.0
      %500 = vmatmul.mubr.f32.gmra.mrb[0].mxu0 %v368
      %v501 = vpop.f32.mrb[0].mxu0
      %v502 = vadd.f32 0.0, %v501
      %v503 = vpop.f32.mrb[0].mxu0
      %504 = vmatprep.mubr.f32.mxu0 0.0
      %505 = vmatmul.mubr.f32.gmra.mrb[0].mxu0 %v371
      %v506 = vpop.f32.mrb[0].mxu0
      %v507 = vadd.f32 0.0, %v506
      %v508 = vpop.f32.mrb[0].mxu0
      %509 = vmatprep.mubr.f32.mxu0 0.0
      %510 = vmatmul.mubr.f32.gmra.mrb[0].mxu0 %v374
      %v511 = vpop.f32.mrb[0].mxu0
      %v512 = vadd.f32 0.0, %v511
      %v513 = vpop.f32.mrb[0].mxu0
      %514 = vmatprep.mubr.f32.mxu0 0.0
      %515 = vmatmul.mubr.f32.gmra.mrb[0].mxu0 %v377
      %v516 = vpop.f32.mrb[0].mxu0
      %v517 = vadd.f32 0.0, %v516
      %v518 = vpop.f32.mrb[0].mxu0
      %519 = vmatprep.mubr.f32.mxu0 0.0
      %520 = vmatmul.mubr.f32.gmra.mrb[0].mxu0 %v380
      %v521 = vpop.f32.mrb[0].mxu0
      %v522 = vadd.f32 0.0, %v521
      %v523 = vpop.f32.mrb[0].mxu0
      %524 = vmatprep.mubr.f32.mxu0 0.0
      %525 = vmatmul.mubr.f32.gmra.mrb[0].mxu0 %v383
      %v526 = vpop.f32.mrb[0].mxu0
      %v527 = vadd.f32 0.0, %v526
      %v528 = vpop.f32.mrb[0].mxu0
      %529 = vmatprep.mubr.f32.mxu0 0.0
      %530 = vmatmul.mubr.f32.gmra.mrb[0].mxu0 %v386
      %v531 = vpop.f32.mrb[0].mxu0
      %v532 = vadd.f32 0.0, %v531
      %v533 = vpop.f32.mrb[0].mxu0
      %534 = vmatprep.mubr.f32.mxu0 0.0
      %535 = vmatmul.mubr.f32.gmra.mrb[0].mxu0 %v389
      %v536 = vpop.f32.mrb[0].mxu0
      %v537 = vadd.f32 0.0, %v536
      %v538 = vpop.f32.mrb[0].mxu0
      %539 = vdwg.mxu0
      %v540 = vmax.f32 %v462, %v482
      %v541 = vmax.f32 %v467, %v487
      %v542 = vmax.f32 %v472, %v492
      %v543 = vmax.f32 %v477, %v497
      %v544 = vmax.f32 %v540, %v502
      %v545 = vmax.f32 %v541, %v507
      %v546 = vmax.f32 %v542, %v512
      %v547 = vmax.f32 %v543, %v517
      %v548 = vmax.f32 %v544, %v522
      %v549 = vmax.f32 %v545, %v527
      %v550 = vmax.f32 %v546, %v532
      %v551 = vmax.f32 %v547, %v537
      %v552 = vmax.f32 %v548, %v549
      %v553 = vmax.f32 %v550, %v551
      %v554 = vmax.f32 %v552, %v553
      %v555 = vrot.slane %v554, 4
      %v556 = vmax.f32 %v554, %v555
      %v557 = vrot.slane %v556, 2
      %v558 = vmax.f32 %v556, %v557
      %v559 = vrot.slane %v558, 1
      %v560 = vmax.f32 %v558, %v559
      %v561 = vsub.f32 %v462, %v560
      %v562 = vsub.f32 %v467, %v560
      %v563 = vsub.f32 %v472, %v560
      %v564 = vsub.f32 %v477, %v560
      %v565 = vsub.f32 %v482, %v560
      %v566 = vsub.f32 %v487, %v560
      %v567 = vsub.f32 %v492, %v560
      %v568 = vsub.f32 %v497, %v560
      %v569 = vsub.f32 %v502, %v560
      %v570 = vsub.f32 %v507, %v560
      %v571 = vsub.f32 %v512, %v560
      %v572 = vsub.f32 %v517, %v560
      %v573 = vsub.f32 %v522, %v560
      %v574 = vsub.f32 %v527, %v560
      %v575 = vsub.f32 %v532, %v560
      %v576 = vsub.f32 %v537, %v560
      %v577 = vmul.f32 %v561, 1.442695
      %v578 = vpow.pop %v577
      %v579 = vmul.f32 %v562, 1.442695
      %v580 = vpow.pop %v579
      %v581 = vmul.f32 %v563, 1.442695
      %v582 = vpow.pop %v581
      %v583 = vmul.f32 %v564, 1.442695
      %v584 = vpow.pop %v583
      %v585 = vmul.f32 %v565, 1.442695
      %v586 = vpow.pop %v585
      %v587 = vmul.f32 %v566, 1.442695
      %v588 = vpow.pop %v587
      %v589 = vmul.f32 %v567, 1.442695
      %v590 = vpow.pop %v589
      %v591 = vmul.f32 %v568, 1.442695
      %v592 = vpow.pop %v591
      %v593 = vmul.f32 %v569, 1.442695
      %v594 = vpow.pop %v593
      %v595 = vmul.f32 %v570, 1.442695
      %v596 = vpow.pop %v595
      %v597 = vmul.f32 %v571, 1.442695
      %v598 = vpow.pop %v597
      %v599 = vmul.f32 %v572, 1.442695
      %v600 = vpow.pop %v599
      %v601 = vmul.f32 %v573, 1.442695
      %v602 = vpow.pop %v601
      %v603 = vmul.f32 %v574, 1.442695
      %v604 = vpow.pop %v603
      %v605 = vmul.f32 %v575, 1.442695
      %v606 = vpow.pop %v605
      %v607 = vmul.f32 %v576, 1.442695
      %v608 = vpow.pop %v607
      %v609 = vsel %vm391, %v302, 1.0
      %610 = vmatprep.subr.mxu0 0.0
      %611 = vmatpush1.msra.mxu0 %v578
      %612 = vmatprep.subr.mxu0 0.0
      %613 = vmatpush1.msra.mxu0 %v580
      %614 = vmatprep.subr.mxu0 0.0
      %615 = vmatpush1.msra.mxu0 %v582
      %616 = vmatprep.subr.mxu0 0.0
      %617 = vmatpush1.msra.mxu0 %v584
      %618 = vmatprep.subr.mxu0 0.0
      %619 = vmatpush1.msra.mxu0 %v586
      %620 = vmatprep.subr.mxu0 0.0
      %621 = vmatpush1.msra.mxu0 %v588
      %622 = vmatprep.subr.mxu0 0.0
      %623 = vmatpush1.msra.mxu0 %v590
      %624 = vmatprep.subr.mxu0 0.0
      %625 = vmatpush1.msra.mxu0 %v592
      %626 = vmatprep.subr.mxu0 0.0
      %627 = vmatpush1.msra.mxu0 %v594
      %628 = vmatprep.subr.mxu0 0.0
      %629 = vmatpush1.msra.mxu0 %v596
      %630 = vmatprep.subr.mxu0 0.0
      %631 = vmatpush1.msra.mxu0 %v598
      %632 = vmatprep.subr.mxu0 0.0
      %633 = vmatpush1.msra.mxu0 %v600
      %634 = vmatprep.subr.mxu0 0.0
      %635 = vmatpush1.msra.mxu0 %v602
      %636 = vmatprep.subr.mxu0 0.0
      %637 = vmatpush1.msra.mxu0 %v604
      %638 = vmatprep.subr.mxu0 0.0
      %639 = vmatpush1.msra.mxu0 %v606
      %640 = vmatprep.subr.mxu0 0.0
      %641 = vmatpush1.msra.mxu0 %v608
      %642 = vmatprep.subr.mxu0 0.0
      %643 = vmatpush1.msra.mxu0 0.0
      %644 = vmatprep.subr.mxu0 0.0
      %645 = vmatpush1.msra.mxu0 0.0
      %646 = vmatprep.subr.mxu0 0.0
      %647 = vmatpush1.msra.mxu0 0.0
      %648 = vmatprep.subr.mxu0 0.0
      %649 = vmatpush1.msra.mxu0 0.0
      %650 = vmatprep.subr.mxu0 0.0
      %651 = vmatpush1.msra.mxu0 0.0
      %652 = vmatprep.subr.mxu0 0.0
      %653 = vmatpush1.msra.mxu0 0.0
      %654 = vmatprep.subr.mxu0 0.0
      %655 = vmatpush1.msra.mxu0 0.0
      %656 = vmatprep.subr.mxu0 0.0
      %657 = vmatpush1.msra.mxu0 0.0
      %658 = vmatprep.subr.mxu0 0.0
      %659 = vmatpush1.msra.mxu0 0.0
      %660 = vmatprep.subr.mxu0 0.0
      %661 = vmatpush1.msra.mxu0 0.0
      %662 = vmatprep.subr.mxu0 0.0
      %663 = vmatpush1.msra.mxu0 0.0
      %664 = vmatprep.subr.mxu0 0.0
      %665 = vmatpush1.msra.mxu0 0.0
      %666 = vmatprep.subr.mxu0 0.0
      %667 = vmatpush1.msra.mxu0 0.0
      %668 = vmatprep.subr.mxu0 0.0
      %669 = vmatpush1.msra.mxu0 0.0
      %670 = vmatprep.subr.mxu0 0.0
      %671 = vmatpush1.msra.mxu0 0.0
      %672 = vmatprep.subr.mxu0 0.0
      %673 = vmatpush1.msra.mxu0 0.0
      %674 = vmatprep.mubr.f32.mxu0 0.0
      %675 = vmatmul.mubr.f32.gmra.mrb[0].mxu0 %v609
      %v676 = vpop.f32.mrb[0].mxu0
      %v677 = vadd.f32 0.0, %v676
      %v678 = vpop.f32.mrb[0].mxu0
      %679 = vdwg.mxu0
      %v680 = vrcp.pop %v677
      %v681 = vlaneseq
      %v682 = vshrl.u32 %v681, 7
      %v683 = vsub.s32 2, %v682
      %v684 = vrot.slane %v680, %v683
      %v685 = vmul.f32 %v677, %v684
      %686 = vrot.lane.b32.xlu0 %v326, 126
      %v687 = vpop.permute.xlu0 %686
      %688 = vrot.lane.b32.xlu0 %v327, 126
      %v689 = vpop.permute.xlu0 %688
      %690 = vrot.lane.b32.xlu0 %v328, 126
      %v691 = vpop.permute.xlu0 %690
      %692 = vrot.lane.b32.xlu0 %v329, 126
      %v693 = vpop.permute.xlu0 %692
      %694 = vrot.lane.b32.xlu0 %v330, 126
      %v695 = vpop.permute.xlu0 %694
      %696 = vrot.lane.b32.xlu0 %v331, 126
      %v697 = vpop.permute.xlu0 %696
      %698 = vrot.lane.b32.xlu0 %v332, 126
      %v699 = vpop.permute.xlu0 %698
      %700 = vrot.lane.b32.xlu0 %v333, 126
      %v701 = vpop.permute.xlu0 %700
      %702 = vrot.lane.b32.xlu0 %v334, 126
      %v703 = vpop.permute.xlu0 %702
      %704 = vrot.lane.b32.xlu0 %v335, 126
      %v705 = vpop.permute.xlu0 %704
      %706 = vrot.lane.b32.xlu0 %v336, 126
      %v707 = vpop.permute.xlu0 %706
      %708 = vrot.lane.b32.xlu0 %v337, 126
      %v709 = vpop.permute.xlu0 %708
      %710 = vrot.lane.b32.xlu0 %v338, 126
      %v711 = vpop.permute.xlu0 %710
      %712 = vrot.lane.b32.xlu0 %v339, 126
      %v713 = vpop.permute.xlu0 %712
      %714 = vrot.lane.b32.xlu0 %v340, 126
      %v715 = vpop.permute.xlu0 %714
      %716 = vrot.lane.b32.xlu0 %v341, 126
      %v717 = vpop.permute.xlu0 %716
      %v718 = vrot.slane %v282, 2
      %v719 = vsel %vm342, %v687, 0
      %v721 = vsel %vm342, %v689, 0
      %v723 = vsel %vm342, %v691, 0
      %v725 = vsel %vm342, %v693, 0
      %v727 = vsel %vm342, %v695, 0
      %v729 = vsel %vm342, %v697, 0
      %v731 = vsel %vm342, %v699, 0
      %v733 = vsel %vm342, %v701, 0
      %v735 = vsel %vm342, %v703, 0
      %v737 = vsel %vm342, %v705, 0
      %v739 = vsel %vm342, %v707, 0
      %v741 = vsel %vm342, %v709, 0
      %v743 = vsel %vm342, %v711, 0
      %v745 = vsel %vm342, %v713, 0
      %v747 = vsel %vm342, %v715, 0
      %v749 = vsel %vm342, %v717, 0
      %v751 = vsel %vm391, %v718, 0
      %753 = vmatprep.subr.mxu0 0.0
      %754 = vmatpush1.msra.mxu0 %v751
      %755 = vmatprep.subr.mxu0 0.0
      %756 = vmatpush1.msra.mxu0 0.0
      %757 = vmatprep.subr.mxu0 0.0
      %758 = vmatpush1.msra.mxu0 0.0
      %759 = vmatprep.subr.mxu0 0.0
      %760 = vmatpush1.msra.mxu0 0.0
      %761 = vmatprep.subr.mxu0 0.0
      %762 = vmatpush1.msra.mxu0 0.0
      %763 = vmatprep.subr.mxu0 0.0
      %764 = vmatpush1.msra.mxu0 0.0
      %765 = vmatprep.subr.mxu0 0.0
      %766 = vmatpush1.msra.mxu0 0.0
      %767 = vmatprep.subr.mxu0 0.0
      %768 = vmatpush1.msra.mxu0 0.0
      %769 = vmatprep.subr.mxu0 0.0
      %770 = vmatpush1.msra.mxu0 0.0
      %771 = vmatprep.subr.mxu0 0.0
      %772 = vmatpush1.msra.mxu0 0.0
      %773 = vmatprep.subr.mxu0 0.0
      %774 = vmatpush1.msra.mxu0 0.0
      %775 = vmatprep.subr.mxu0 0.0
      %776 = vmatpush1.msra.mxu0 0.0
      %777 = vmatprep.subr.mxu0 0.0
      %778 = vmatpush1.msra.mxu0 0.0
      %779 = vmatprep.subr.mxu0 0.0
      %780 = vmatpush1.msra.mxu0 0.0
      %781 = vmatprep.subr.mxu0 0.0
      %782 = vmatpush1.msra.mxu0 0.0
      %783 = vmatprep.subr.mxu0 0.0
      %784 = vmatpush1.msra.mxu0 0.0
      %785 = vmatprep.subr.mxu0 0.0
      %786 = vmatpush1.msra.mxu0 0.0
      %787 = vmatprep.subr.mxu0 0.0
      %788 = vmatpush1.msra.mxu0 0.0
      %789 = vmatprep.subr.mxu0 0.0
      %790 = vmatpush1.msra.mxu0 0.0
      %791 = vmatprep.subr.mxu0 0.0
      %792 = vmatpush1.msra.mxu0 0.0
      %793 = vmatprep.subr.mxu0 0.0
      %794 = vmatpush1.msra.mxu0 0.0
      %795 = vmatprep.subr.mxu0 0.0
      %796 = vmatpush1.msra.mxu0 0.0
      %797 = vmatprep.subr.mxu0 0.0
      %798 = vmatpush1.msra.mxu0 0.0
      %799 = vmatprep.subr.mxu0 0.0
      %800 = vmatpush1.msra.mxu0 0.0
      %801 = vmatprep.subr.mxu0 0.0
      %802 = vmatpush1.msra.mxu0 0.0
      %803 = vmatprep.subr.mxu0 0.0
      %804 = vmatpush1.msra.mxu0 0.0
      %805 = vmatprep.subr.mxu0 0.0
      %806 = vmatpush1.msra.mxu0 0.0
      %807 = vmatprep.subr.mxu0 0.0
      %808 = vmatpush1.msra.mxu0 0.0
      %809 = vmatprep.subr.mxu0 0.0
      %810 = vmatpush1.msra.mxu0 0.0
      %811 = vmatprep.subr.mxu0 0.0
      %812 = vmatpush1.msra.mxu0 0.0
      %813 = vmatprep.subr.mxu0 0.0
      %814 = vmatpush1.msra.mxu0 0.0
      %815 = vmatprep.subr.mxu0 0.0
      %816 = vmatpush1.msra.mxu0 0.0
      %817 = vmatprep.mubr.f32.mxu0 0.0
      %818 = vmatmul.mubr.f32.gmra.mrb[0].mxu0 %v719
      %v819 = vpop.f32.mrb[0].mxu0
      %v820 = vadd.f32 0.0, %v819
      %v821 = vpop.f32.mrb[0].mxu0
      %822 = vmatprep.mubr.f32.mxu0 0.0
      %823 = vmatmul.mubr.f32.gmra.mrb[0].mxu0 %v721
      %v824 = vpop.f32.mrb[0].mxu0
      %v825 = vadd.f32 0.0, %v824
      %v826 = vpop.f32.mrb[0].mxu0
      %827 = vmatprep.mubr.f32.mxu0 0.0
      %828 = vmatmul.mubr.f32.gmra.mrb[0].mxu0 %v723
      %v829 = vpop.f32.mrb[0].mxu0
      %v830 = vadd.f32 0.0, %v829
      %v831 = vpop.f32.mrb[0].mxu0
      %832 = vmatprep.mubr.f32.mxu0 0.0
      %833 = vmatmul.mubr.f32.gmra.mrb[0].mxu0 %v725
      %v834 = vpop.f32.mrb[0].mxu0
      %v835 = vadd.f32 0.0, %v834
      %v836 = vpop.f32.mrb[0].mxu0
      %837 = vmatprep.mubr.f32.mxu0 0.0
      %838 = vmatmul.mubr.f32.gmra.mrb[0].mxu0 %v727
      %v839 = vpop.f32.mrb[0].mxu0
      %v840 = vadd.f32 0.0, %v839
      %v841 = vpop.f32.mrb[0].mxu0
      %842 = vmatprep.mubr.f32.mxu0 0.0
      %843 = vmatmul.mubr.f32.gmra.mrb[0].mxu0 %v729
      %v844 = vpop.f32.mrb[0].mxu0
      %v845 = vadd.f32 0.0, %v844
      %v846 = vpop.f32.mrb[0].mxu0
      %847 = vmatprep.mubr.f32.mxu0 0.0
      %848 = vmatmul.mubr.f32.gmra.mrb[0].mxu0 %v731
      %v849 = vpop.f32.mrb[0].mxu0
      %v850 = vadd.f32 0.0, %v849
      %v851 = vpop.f32.mrb[0].mxu0
      %852 = vmatprep.mubr.f32.mxu0 0.0
      %853 = vmatmul.mubr.f32.gmra.mrb[0].mxu0 %v733
      %v854 = vpop.f32.mrb[0].mxu0
      %v855 = vadd.f32 0.0, %v854
      %v856 = vpop.f32.mrb[0].mxu0
      %857 = vmatprep.mubr.f32.mxu0 0.0
      %858 = vmatmul.mubr.f32.gmra.mrb[0].mxu0 %v735
      %v859 = vpop.f32.mrb[0].mxu0
      %v860 = vadd.f32 0.0, %v859
      %v861 = vpop.f32.mrb[0].mxu0
      %862 = vmatprep.mubr.f32.mxu0 0.0
      %863 = vmatmul.mubr.f32.gmra.mrb[0].mxu0 %v737
      %v864 = vpop.f32.mrb[0].mxu0
      %v865 = vadd.f32 0.0, %v864
      %v866 = vpop.f32.mrb[0].mxu0
      %867 = vmatprep.mubr.f32.mxu0 0.0
      %868 = vmatmul.mubr.f32.gmra.mrb[0].mxu0 %v739
      %v869 = vpop.f32.mrb[0].mxu0
      %v870 = vadd.f32 0.0, %v869
      %v871 = vpop.f32.mrb[0].mxu0
      %872 = vmatprep.mubr.f32.mxu0 0.0
      %873 = vmatmul.mubr.f32.gmra.mrb[0].mxu0 %v741
      %v874 = vpop.f32.mrb[0].mxu0
      %v875 = vadd.f32 0.0, %v874
      %v876 = vpop.f32.mrb[0].mxu0
      %877 = vmatprep.mubr.f32.mxu0 0.0
      %878 = vmatmul.mubr.f32.gmra.mrb[0].mxu0 %v743
      %v879 = vpop.f32.mrb[0].mxu0
      %v880 = vadd.f32 0.0, %v879
      %v881 = vpop.f32.mrb[0].mxu0
      %882 = vmatprep.mubr.f32.mxu0 0.0
      %883 = vmatmul.mubr.f32.gmra.mrb[0].mxu0 %v745
      %v884 = vpop.f32.mrb[0].mxu0
      %v885 = vadd.f32 0.0, %v884
      %v886 = vpop.f32.mrb[0].mxu0
      %887 = vmatprep.mubr.f32.mxu0 0.0
      %888 = vmatmul.mubr.f32.gmra.mrb[0].mxu0 %v747
      %v889 = vpop.f32.mrb[0].mxu0
      %v890 = vadd.f32 0.0, %v889
      %v891 = vpop.f32.mrb[0].mxu0
      %892 = vmatprep.mubr.f32.mxu0 0.0
      %893 = vmatmul.mubr.f32.gmra.mrb[0].mxu0 %v749
      %v894 = vpop.f32.mrb[0].mxu0
      %v895 = vadd.f32 0.0, %v894
      %v896 = vpop.f32.mrb[0].mxu0
      %897 = vdwg.mxu0
      %v898 = vmax.f32 %v820, %v840
      %v899 = vmax.f32 %v825, %v845
      %v900 = vmax.f32 %v830, %v850
      %v901 = vmax.f32 %v835, %v855
      %v902 = vmax.f32 %v898, %v860
      %v903 = vmax.f32 %v899, %v865
      %v904 = vmax.f32 %v900, %v870
      %v905 = vmax.f32 %v901, %v875
      %v906 = vmax.f32 %v902, %v880
      %v907 = vmax.f32 %v903, %v885
      %v908 = vmax.f32 %v904, %v890
      %v909 = vmax.f32 %v905, %v895
      %v910 = vmax.f32 %v906, %v907
      %v911 = vmax.f32 %v908, %v909
      %v912 = vmax.f32 %v910, %v911
      %v913 = vrot.slane %v912, 4
      %v914 = vmax.f32 %v912, %v913
      %v915 = vrot.slane %v914, 2
      %v916 = vmax.f32 %v914, %v915
      %v917 = vrot.slane %v916, 1
      %v918 = vmax.f32 %v916, %v917
      %v919 = vsub.f32 %v820, %v918
      %v920 = vsub.f32 %v825, %v918
      %v921 = vsub.f32 %v830, %v918
      %v922 = vsub.f32 %v835, %v918
      %v923 = vsub.f32 %v840, %v918
      %v924 = vsub.f32 %v845, %v918
      %v925 = vsub.f32 %v850, %v918
      %v926 = vsub.f32 %v855, %v918
      %v927 = vsub.f32 %v860, %v918
      %v928 = vsub.f32 %v865, %v918
      %v929 = vsub.f32 %v870, %v918
      %v930 = vsub.f32 %v875, %v918
      %v931 = vsub.f32 %v880, %v918
      %v932 = vsub.f32 %v885, %v918
      %v933 = vsub.f32 %v890, %v918
      %v934 = vsub.f32 %v895, %v918
      %v935 = vmul.f32 %v919, 1.442695
      %v936 = vpow.pop %v935
      %v937 = vmul.f32 %v920, 1.442695
      %v938 = vpow.pop %v937
      %v939 = vmul.f32 %v921, 1.442695
      %v940 = vpow.pop %v939
      %v941 = vmul.f32 %v922, 1.442695
      %v942 = vpow.pop %v941
      %v943 = vmul.f32 %v923, 1.442695
      %v944 = vpow.pop %v943
      %v945 = vmul.f32 %v924, 1.442695
      %v946 = vpow.pop %v945
      %v947 = vmul.f32 %v925, 1.442695
      %v948 = vpow.pop %v947
      %v949 = vmul.f32 %v926, 1.442695
      %v950 = vpow.pop %v949
      %v951 = vmul.f32 %v927, 1.442695
      %v952 = vpow.pop %v951
      %v953 = vmul.f32 %v928, 1.442695
      %v954 = vpow.pop %v953
      %v955 = vmul.f32 %v929, 1.442695
      %v956 = vpow.pop %v955
      %v957 = vmul.f32 %v930, 1.442695
      %v958 = vpow.pop %v957
      %v959 = vmul.f32 %v931, 1.442695
      %v960 = vpow.pop %v959
      %v961 = vmul.f32 %v932, 1.442695
      %v962 = vpow.pop %v961
      %v963 = vmul.f32 %v933, 1.442695
      %v964 = vpow.pop %v963
      %v965 = vmul.f32 %v934, 1.442695
      %v966 = vpow.pop %v965
      %v968 = vrot.slane %v302, 2
      %v970 = vsel %vm391, %v968, 1.0
      %971 = vmatprep.subr.mxu0 0.0
      %972 = vmatpush1.msra.mxu0 %v936
      %973 = vmatprep.subr.mxu0 0.0
      %974 = vmatpush1.msra.mxu0 %v938
      %975 = vmatprep.subr.mxu0 0.0
      %976 = vmatpush1.msra.mxu0 %v940
      %977 = vmatprep.subr.mxu0 0.0
      %978 = vmatpush1.msra.mxu0 %v942
      %979 = vmatprep.subr.mxu0 0.0
      %980 = vmatpush1.msra.mxu0 %v944
      %981 = vmatprep.subr.mxu0 0.0
      %982 = vmatpush1.msra.mxu0 %v946
      %983 = vmatprep.subr.mxu0 0.0
      %984 = vmatpush1.msra.mxu0 %v948
      %985 = vmatprep.subr.mxu0 0.0
      %986 = vmatpush1.msra.mxu0 %v950
      %987 = vmatprep.subr.mxu0 0.0
      %988 = vmatpush1.msra.mxu0 %v952
      %989 = vmatprep.subr.mxu0 0.0
      %990 = vmatpush1.msra.mxu0 %v954
      %991 = vmatprep.subr.mxu0 0.0
      %992 = vmatpush1.msra.mxu0 %v956
      %993 = vmatprep.subr.mxu0 0.0
      %994 = vmatpush1.msra.mxu0 %v958
      %995 = vmatprep.subr.mxu0 0.0
      %996 = vmatpush1.msra.mxu0 %v960
      %997 = vmatprep.subr.mxu0 0.0
      %998 = vmatpush1.msra.mxu0 %v962
      %999 = vmatprep.subr.mxu0 0.0
      %1000 = vmatpush1.msra.mxu0 %v964
      %1001 = vmatprep.subr.mxu0 0.0
      %1002 = vmatpush1.msra.mxu0 %v966
      %1003 = vmatprep.subr.mxu0 0.0
      %1004 = vmatpush1.msra.mxu0 0.0
      %1005 = vmatprep.subr.mxu0 0.0
      %1006 = vmatpush1.msra.mxu0 0.0
      %1007 = vmatprep.subr.mxu0 0.0
      %1008 = vmatpush1.msra.mxu0 0.0
      %1009 = vmatprep.subr.mxu0 0.0
      %1010 = vmatpush1.msra.mxu0 0.0
      %1011 = vmatprep.subr.mxu0 0.0
      %1012 = vmatpush1.msra.mxu0 0.0
      %1013 = vmatprep.subr.mxu0 0.0
      %1014 = vmatpush1.msra.mxu0 0.0
      %1015 = vmatprep.subr.mxu0 0.0
      %1016 = vmatpush1.msra.mxu0 0.0
      %1017 = vmatprep.subr.mxu0 0.0
      %1018 = vmatpush1.msra.mxu0 0.0
      %1019 = vmatprep.subr.mxu0 0.0
      %1020 = vmatpush1.msra.mxu0 0.0
      %1021 = vmatprep.subr.mxu0 0.0
      %1022 = vmatpush1.msra.mxu0 0.0
      %1023 = vmatprep.subr.mxu0 0.0
      %1024 = vmatpush1.msra.mxu0 0.0
      %1025 = vmatprep.subr.mxu0 0.0
      %1026 = vmatpush1.msra.mxu0 0.0
      %1027 = vmatprep.subr.mxu0 0.0
      %1028 = vmatpush1.msra.mxu0 0.0
      %1029 = vmatprep.subr.mxu0 0.0
      %1030 = vmatpush1.msra.mxu0 0.0
      %1031 = vmatprep.subr.mxu0 0.0
      %1032 = vmatpush1.msra.mxu0 0.0
      %1033 = vmatprep.subr.mxu0 0.0
      %1034 = vmatpush1.msra.mxu0 0.0
      %1035 = vmatprep.mubr.f32.mxu0 0.0
      %1036 = vmatmul.mubr.f32.gmra.mrb[0].mxu0 %v970
      %v1037 = vpop.f32.mrb[0].mxu0
      %v1038 = vadd.f32 0.0, %v1037
      %v1039 = vpop.f32.mrb[0].mxu0
      %1040 = vdwg.mxu0
      %v1041 = vrcp.pop %v1038
      %v1042 = vlaneseq
      %v1043 = vshrl.u32 %v1042, 7
      %v1044 = vsub.s32 2, %v1043
      %v1045 = vrot.slane %v1041, %v1044
      %v1046 = vmul.f32 %v1038, %v1045
      %vm1047 = vcmask 23552
      %v1049 = vsel %vm1047, %v180, 0
      %v1052 = vsel %vm1047, %v181, 0
      %vm1054 = vcmask 1042432
      %v1056 = vsel %vm1054, %v1046, 0
      %1058 = vmatprep.subr.mxu0 0.0
      %1059 = vmatpush1.msra.mxu0 %v1056
      %1060 = vmatprep.subr.mxu0 0.0
      %1061 = vmatpush1.msra.mxu0 0.0
      %1062 = vmatprep.subr.mxu0 0.0
      %1063 = vmatpush1.msra.mxu0 0.0
      %1064 = vmatprep.subr.mxu0 0.0
      %1065 = vmatpush1.msra.mxu0 0.0
      %1066 = vmatprep.subr.mxu0 0.0
      %1067 = vmatpush1.msra.mxu0 0.0
      %1068 = vmatprep.subr.mxu0 0.0
      %1069 = vmatpush1.msra.mxu0 0.0
      %1070 = vmatprep.subr.mxu0 0.0
      %1071 = vmatpush1.msra.mxu0 0.0
      %1072 = vmatprep.subr.mxu0 0.0
      %1073 = vmatpush1.msra.mxu0 0.0
      %1074 = vmatprep.subr.mxu0 0.0
      %1075 = vmatpush1.msra.mxu0 0.0
      %1076 = vmatprep.subr.mxu0 0.0
      %1077 = vmatpush1.msra.mxu0 0.0
      %1078 = vmatprep.subr.mxu0 0.0
      %1079 = vmatpush1.msra.mxu0 0.0
      %1080 = vmatprep.subr.mxu0 0.0
      %1081 = vmatpush1.msra.mxu0 0.0
      %1082 = vmatprep.subr.mxu0 0.0
      %1083 = vmatpush1.msra.mxu0 0.0
      %1084 = vmatprep.subr.mxu0 0.0
      %1085 = vmatpush1.msra.mxu0 0.0
      %1086 = vmatprep.subr.mxu0 0.0
      %1087 = vmatpush1.msra.mxu0 0.0
      %1088 = vmatprep.subr.mxu0 0.0
      %1089 = vmatpush1.msra.mxu0 0.0
      %1090 = vmatprep.subr.mxu0 0.0
      %1091 = vmatpush1.msra.mxu0 0.0
      %1092 = vmatprep.subr.mxu0 0.0
      %1093 = vmatpush1.msra.mxu0 0.0
      %1094 = vmatprep.subr.mxu0 0.0
      %1095 = vmatpush1.msra.mxu0 0.0
      %1096 = vmatprep.subr.mxu0 0.0
      %1097 = vmatpush1.msra.mxu0 0.0
      %1098 = vmatprep.subr.mxu0 0.0
      %1099 = vmatpush1.msra.mxu0 0.0
      %1100 = vmatprep.subr.mxu0 0.0
      %1101 = vmatpush1.msra.mxu0 0.0
      %1102 = vmatprep.subr.mxu0 0.0
      %1103 = vmatpush1.msra.mxu0 0.0
      %1104 = vmatprep.subr.mxu0 0.0
      %1105 = vmatpush1.msra.mxu0 0.0
      %1106 = vmatprep.subr.mxu0 0.0
      %1107 = vmatpush1.msra.mxu0 0.0
      %1108 = vmatprep.subr.mxu0 0.0
      %1109 = vmatpush1.msra.mxu0 0.0
      %1110 = vmatprep.subr.mxu0 0.0
      %1111 = vmatpush1.msra.mxu0 0.0
      %1112 = vmatprep.subr.mxu0 0.0
      %1113 = vmatpush1.msra.mxu0 0.0
      %1114 = vmatprep.subr.mxu0 0.0
      %1115 = vmatpush1.msra.mxu0 0.0
      %1116 = vmatprep.subr.mxu0 0.0
      %1117 = vmatpush1.msra.mxu0 0.0
      %1118 = vmatprep.subr.mxu0 0.0
      %1119 = vmatpush1.msra.mxu0 0.0
      %1120 = vmatprep.subr.mxu0 0.0
      %1121 = vmatpush1.msra.mxu0 0.0
      %1122 = vmatprep.mubr.f32.mxu0 0.0
      %1123 = vmatmul.mubr.f32.gmra.mrb[0].mxu0 %v1049
      %v1124 = vpop.f32.mrb[0].mxu0
      %v1125 = vadd.f32 0.0, %v1124
      %v1126 = vpop.f32.mrb[0].mxu0
      %1127 = vmatprep.mubr.f32.mxu0 0.0
      %1128 = vmatmul.mubr.f32.gmra.mrb[0].mxu0 %v1052
      %v1129 = vpop.f32.mrb[0].mxu0
      %v1130 = vadd.f32 0.0, %v1129
      %v1131 = vpop.f32.mrb[0].mxu0
      %1132 = vdwg.mxu0
      %v1134 = vsel %vm1047, %v177, 0
      %v1137 = vsel %vm1047, %v178, 0
      %v1140 = vsel %vm1054, %v685, 0
      %1142 = vmatprep.subr.mxu0 0.0
      %1143 = vmatpush1.msra.mxu0 %v1140
      %1144 = vmatprep.subr.mxu0 0.0
      %1145 = vmatpush1.msra.mxu0 0.0
      %1146 = vmatprep.subr.mxu0 0.0
      %1147 = vmatpush1.msra.mxu0 0.0
      %1148 = vmatprep.subr.mxu0 0.0
      %1149 = vmatpush1.msra.mxu0 0.0
      %1150 = vmatprep.subr.mxu0 0.0
      %1151 = vmatpush1.msra.mxu0 0.0
      %1152 = vmatprep.subr.mxu0 0.0
      %1153 = vmatpush1.msra.mxu0 0.0
      %1154 = vmatprep.subr.mxu0 0.0
      %1155 = vmatpush1.msra.mxu0 0.0
      %1156 = vmatprep.subr.mxu0 0.0
      %1157 = vmatpush1.msra.mxu0 0.0
      %1158 = vmatprep.subr.mxu0 0.0
      %1159 = vmatpush1.msra.mxu0 0.0
      %1160 = vmatprep.subr.mxu0 0.0
      %1161 = vmatpush1.msra.mxu0 0.0
      %1162 = vmatprep.subr.mxu0 0.0
      %1163 = vmatpush1.msra.mxu0 0.0
      %1164 = vmatprep.subr.mxu0 0.0
      %1165 = vmatpush1.msra.mxu0 0.0
      %1166 = vmatprep.subr.mxu0 0.0
      %1167 = vmatpush1.msra.mxu0 0.0
      %1168 = vmatprep.subr.mxu0 0.0
      %1169 = vmatpush1.msra.mxu0 0.0
      %1170 = vmatprep.subr.mxu0 0.0
      %1171 = vmatpush1.msra.mxu0 0.0
      %1172 = vmatprep.subr.mxu0 0.0
      %1173 = vmatpush1.msra.mxu0 0.0
      %1174 = vmatprep.subr.mxu0 0.0
      %1175 = vmatpush1.msra.mxu0 0.0
      %1176 = vmatprep.subr.mxu0 0.0
      %1177 = vmatpush1.msra.mxu0 0.0
      %1178 = vmatprep.subr.mxu0 0.0
      %1179 = vmatpush1.msra.mxu0 0.0
      %1180 = vmatprep.subr.mxu0 0.0
      %1181 = vmatpush1.msra.mxu0 0.0
      %1182 = vmatprep.subr.mxu0 0.0
      %1183 = vmatpush1.msra.mxu0 0.0
      %1184 = vmatprep.subr.mxu0 0.0
      %1185 = vmatpush1.msra.mxu0 0.0
      %1186 = vmatprep.subr.mxu0 0.0
      %1187 = vmatpush1.msra.mxu0 0.0
      %1188 = vmatprep.subr.mxu0 0.0
      %1189 = vmatpush1.msra.mxu0 0.0
      %1190 = vmatprep.subr.mxu0 0.0
      %1191 = vmatpush1.msra.mxu0 0.0
      %1192 = vmatprep.subr.mxu0 0.0
      %1193 = vmatpush1.msra.mxu0 0.0
      %1194 = vmatprep.subr.mxu0 0.0
      %1195 = vmatpush1.msra.mxu0 0.0
      %1196 = vmatprep.subr.mxu0 0.0
      %1197 = vmatpush1.msra.mxu0 0.0
      %1198 = vmatprep.subr.mxu0 0.0
      %1199 = vmatpush1.msra.mxu0 0.0
      %1200 = vmatprep.subr.mxu0 0.0
      %1201 = vmatpush1.msra.mxu0 0.0
      %1202 = vmatprep.subr.mxu0 0.0
      %1203 = vmatpush1.msra.mxu0 0.0
      %1204 = vmatprep.subr.mxu0 0.0
      %1205 = vmatpush1.msra.mxu0 0.0
      %1206 = vmatprep.mubr.f32.mxu0 0.0
      %1207 = vmatmul.mubr.f32.gmra.mrb[0].mxu0 %v1134
      %v1208 = vpop.f32.mrb[0].mxu0
      %v1209 = vadd.f32 %v1125, %v1208
      %v1210 = vpop.f32.mrb[0].mxu0
      %1211 = vmatprep.mubr.f32.mxu0 0.0
      %1212 = vmatmul.mubr.f32.gmra.mrb[0].mxu0 %v1137
      %v1213 = vpop.f32.mrb[0].mxu0
      %v1214 = vadd.f32 %v1130, %v1213
      %v1215 = vpop.f32.mrb[0].mxu0
      %1216 = vdwg.mxu0
      %1217 = vrot.lane.b32.xlu0 %v326, 124
      %v1218 = vpop.permute.xlu0 %1217
      %1219 = vrot.lane.b32.xlu0 %v327, 124
      %v1220 = vpop.permute.xlu0 %1219
      %1221 = vrot.lane.b32.xlu0 %v328, 124
      %v1222 = vpop.permute.xlu0 %1221
      %1223 = vrot.lane.b32.xlu0 %v329, 124
      %v1224 = vpop.permute.xlu0 %1223
      %1225 = vrot.lane.b32.xlu0 %v330, 124
      %v1226 = vpop.permute.xlu0 %1225
      %1227 = vrot.lane.b32.xlu0 %v331, 124
      %v1228 = vpop.permute.xlu0 %1227
      %1229 = vrot.lane.b32.xlu0 %v332, 124
      %v1230 = vpop.permute.xlu0 %1229
      %1231 = vrot.lane.b32.xlu0 %v333, 124
      %v1232 = vpop.permute.xlu0 %1231
      %1233 = vrot.lane.b32.xlu0 %v334, 124
      %v1234 = vpop.permute.xlu0 %1233
      %1235 = vrot.lane.b32.xlu0 %v335, 124
      %v1236 = vpop.permute.xlu0 %1235
      %1237 = vrot.lane.b32.xlu0 %v336, 124
      %v1238 = vpop.permute.xlu0 %1237
      %1239 = vrot.lane.b32.xlu0 %v337, 124
      %v1240 = vpop.permute.xlu0 %1239
      %1241 = vrot.lane.b32.xlu0 %v338, 124
      %v1242 = vpop.permute.xlu0 %1241
      %1243 = vrot.lane.b32.xlu0 %v339, 124
      %v1244 = vpop.permute.xlu0 %1243
      %1245 = vrot.lane.b32.xlu0 %v340, 124
      %v1246 = vpop.permute.xlu0 %1245
      %1247 = vrot.lane.b32.xlu0 %v341, 124
      %v1248 = vpop.permute.xlu0 %1247
      %v1249 = vrot.slane %v282, 4
      %v1250 = vsel %vm342, %v1218, 0
      %v1252 = vsel %vm342, %v1220, 0
      %v1254 = vsel %vm342, %v1222, 0
      %v1256 = vsel %vm342, %v1224, 0
      %v1258 = vsel %vm342, %v1226, 0
      %v1260 = vsel %vm342, %v1228, 0
      %v1262 = vsel %vm342, %v1230, 0
      %v1264 = vsel %vm342, %v1232, 0
      %v1266 = vsel %vm342, %v1234, 0
      %v1268 = vsel %vm342, %v1236, 0
      %v1270 = vsel %vm342, %v1238, 0
      %v1272 = vsel %vm342, %v1240, 0
      %v1274 = vsel %vm342, %v1242, 0
      %v1276 = vsel %vm342, %v1244, 0
      %v1278 = vsel %vm342, %v1246, 0
      %v1280 = vsel %vm342, %v1248, 0
      %v1282 = vsel %vm391, %v1249, 0
      %1284 = vmatprep.subr.mxu0 0.0
      %1285 = vmatpush1.msra.mxu0 %v1282
      %1286 = vmatprep.subr.mxu0 0.0
      %1287 = vmatpush1.msra.mxu0 0.0
      %1288 = vmatprep.subr.mxu0 0.0
      %1289 = vmatpush1.msra.mxu0 0.0
      %1290 = vmatprep.subr.mxu0 0.0
      %1291 = vmatpush1.msra.mxu0 0.0
      %1292 = vmatprep.subr.mxu0 0.0
      %1293 = vmatpush1.msra.mxu0 0.0
      %1294 = vmatprep.subr.mxu0 0.0
      %1295 = vmatpush1.msra.mxu0 0.0
      %1296 = vmatprep.subr.mxu0 0.0
      %1297 = vmatpush1.msra.mxu0 0.0
      %1298 = vmatprep.subr.mxu0 0.0
      %1299 = vmatpush1.msra.mxu0 0.0
      %1300 = vmatprep.subr.mxu0 0.0
      %1301 = vmatpush1.msra.mxu0 0.0
      %1302 = vmatprep.subr.mxu0 0.0
      %1303 = vmatpush1.msra.mxu0 0.0
      %1304 = vmatprep.subr.mxu0 0.0
      %1305 = vmatpush1.msra.mxu0 0.0
      %1306 = vmatprep.subr.mxu0 0.0
      %1307 = vmatpush1.msra.mxu0 0.0
      %1308 = vmatprep.subr.mxu0 0.0
      %1309 = vmatpush1.msra.mxu0 0.0
      %1310 = vmatprep.subr.mxu0 0.0
      %1311 = vmatpush1.msra.mxu0 0.0
      %1312 = vmatprep.subr.mxu0 0.0
      %1313 = vmatpush1.msra.mxu0 0.0
      %1314 = vmatprep.subr.mxu0 0.0
      %1315 = vmatpush1.msra.mxu0 0.0
      %1316 = vmatprep.subr.mxu0 0.0
      %1317 = vmatpush1.msra.mxu0 0.0
      %1318 = vmatprep.subr.mxu0 0.0
      %1319 = vmatpush1.msra.mxu0 0.0
      %1320 = vmatprep.subr.mxu0 0.0
      %1321 = vmatpush1.msra.mxu0 0.0
      %1322 = vmatprep.subr.mxu0 0.0
      %1323 = vmatpush1.msra.mxu0 0.0
      %1324 = vmatprep.subr.mxu0 0.0
      %1325 = vmatpush1.msra.mxu0 0.0
      %1326 = vmatprep.subr.mxu0 0.0
      %1327 = vmatpush1.msra.mxu0 0.0
      %1328 = vmatprep.subr.mxu0 0.0
      %1329 = vmatpush1.msra.mxu0 0.0
      %1330 = vmatprep.subr.mxu0 0.0
      %1331 = vmatpush1.msra.mxu0 0.0
      %1332 = vmatprep.subr.mxu0 0.0
      %1333 = vmatpush1.msra.mxu0 0.0
      %1334 = vmatprep.subr.mxu0 0.0
      %1335 = vmatpush1.msra.mxu0 0.0
      %1336 = vmatprep.subr.mxu0 0.0
      %1337 = vmatpush1.msra.mxu0 0.0
      %1338 = vmatprep.subr.mxu0 0.0
      %1339 = vmatpush1.msra.mxu0 0.0
      %1340 = vmatprep.subr.mxu0 0.0
      %1341 = vmatpush1.msra.mxu0 0.0
      %1342 = vmatprep.subr.mxu0 0.0
      %1343 = vmatpush1.msra.mxu0 0.0
      %1344 = vmatprep.subr.mxu0 0.0
      %1345 = vmatpush1.msra.mxu0 0.0
      %1346 = vmatprep.subr.mxu0 0.0
      %1347 = vmatpush1.msra.mxu0 0.0
      %1348 = vmatprep.mubr.f32.mxu0 0.0
      %1349 = vmatmul.mubr.f32.gmra.mrb[0].mxu0 %v1250
      %v1350 = vpop.f32.mrb[0].mxu0
      %v1351 = vadd.f32 0.0, %v1350
      %v1352 = vpop.f32.mrb[0].mxu0
      %1353 = vmatprep.mubr.f32.mxu0 0.0
      %1354 = vmatmul.mubr.f32.gmra.mrb[0].mxu0 %v1252
      %v1355 = vpop.f32.mrb[0].mxu0
      %v1356 = vadd.f32 0.0, %v1355
      %v1357 = vpop.f32.mrb[0].mxu0
      %1358 = vmatprep.mubr.f32.mxu0 0.0
      %1359 = vmatmul.mubr.f32.gmra.mrb[0].mxu0 %v1254
      %v1360 = vpop.f32.mrb[0].mxu0
      %v1361 = vadd.f32 0.0, %v1360
      %v1362 = vpop.f32.mrb[0].mxu0
      %1363 = vmatprep.mubr.f32.mxu0 0.0
      %1364 = vmatmul.mubr.f32.gmra.mrb[0].mxu0 %v1256
      %v1365 = vpop.f32.mrb[0].mxu0
      %v1366 = vadd.f32 0.0, %v1365
      %v1367 = vpop.f32.mrb[0].mxu0
      %1368 = vmatprep.mubr.f32.mxu0 0.0
      %1369 = vmatmul.mubr.f32.gmra.mrb[0].mxu0 %v1258
      %v1370 = vpop.f32.mrb[0].mxu0
      %v1371 = vadd.f32 0.0, %v1370
      %v1372 = vpop.f32.mrb[0].mxu0
      %1373 = vmatprep.mubr.f32.mxu0 0.0
      %1374 = vmatmul.mubr.f32.gmra.mrb[0].mxu0 %v1260
      %v1375 = vpop.f32.mrb[0].mxu0
      %v1376 = vadd.f32 0.0, %v1375
      %v1377 = vpop.f32.mrb[0].mxu0
      %1378 = vmatprep.mubr.f32.mxu0 0.0
      %1379 = vmatmul.mubr.f32.gmra.mrb[0].mxu0 %v1262
      %v1380 = vpop.f32.mrb[0].mxu0
      %v1381 = vadd.f32 0.0, %v1380
      %v1382 = vpop.f32.mrb[0].mxu0
      %1383 = vmatprep.mubr.f32.mxu0 0.0
      %1384 = vmatmul.mubr.f32.gmra.mrb[0].mxu0 %v1264
      %v1385 = vpop.f32.mrb[0].mxu0
      %v1386 = vadd.f32 0.0, %v1385
      %v1387 = vpop.f32.mrb[0].mxu0
      %1388 = vmatprep.mubr.f32.mxu0 0.0
      %1389 = vmatmul.mubr.f32.gmra.mrb[0].mxu0 %v1266
      %v1390 = vpop.f32.mrb[0].mxu0
      %v1391 = vadd.f32 0.0, %v1390
      %v1392 = vpop.f32.mrb[0].mxu0
      %1393 = vmatprep.mubr.f32.mxu0 0.0
      %1394 = vmatmul.mubr.f32.gmra.mrb[0].mxu0 %v1268
      %v1395 = vpop.f32.mrb[0].mxu0
      %v1396 = vadd.f32 0.0, %v1395
      %v1397 = vpop.f32.mrb[0].mxu0
      %1398 = vmatprep.mubr.f32.mxu0 0.0
      %1399 = vmatmul.mubr.f32.gmra.mrb[0].mxu0 %v1270
      %v1400 = vpop.f32.mrb[0].mxu0
      %v1401 = vadd.f32 0.0, %v1400
      %v1402 = vpop.f32.mrb[0].mxu0
      %1403 = vmatprep.mubr.f32.mxu0 0.0
      %1404 = vmatmul.mubr.f32.gmra.mrb[0].mxu0 %v1272
      %v1405 = vpop.f32.mrb[0].mxu0
      %v1406 = vadd.f32 0.0, %v1405
      %v1407 = vpop.f32.mrb[0].mxu0
      %1408 = vmatprep.mubr.f32.mxu0 0.0
      %1409 = vmatmul.mubr.f32.gmra.mrb[0].mxu0 %v1274
      %v1410 = vpop.f32.mrb[0].mxu0
      %v1411 = vadd.f32 0.0, %v1410
      %v1412 = vpop.f32.mrb[0].mxu0
      %1413 = vmatprep.mubr.f32.mxu0 0.0
      %1414 = vmatmul.mubr.f32.gmra.mrb[0].mxu0 %v1276
      %v1415 = vpop.f32.mrb[0].mxu0
      %v1416 = vadd.f32 0.0, %v1415
      %v1417 = vpop.f32.mrb[0].mxu0
      %1418 = vmatprep.mubr.f32.mxu0 0.0
      %1419 = vmatmul.mubr.f32.gmra.mrb[0].mxu0 %v1278
      %v1420 = vpop.f32.mrb[0].mxu0
      %v1421 = vadd.f32 0.0, %v1420
      %v1422 = vpop.f32.mrb[0].mxu0
      %1423 = vmatprep.mubr.f32.mxu0 0.0
      %1424 = vmatmul.mubr.f32.gmra.mrb[0].mxu0 %v1280
      %v1425 = vpop.f32.mrb[0].mxu0
      %v1426 = vadd.f32 0.0, %v1425
      %v1427 = vpop.f32.mrb[0].mxu0
      %1428 = vdwg.mxu0
      %v1429 = vmax.f32 %v1351, %v1371
      %v1430 = vmax.f32 %v1356, %v1376
      %v1431 = vmax.f32 %v1361, %v1381
      %v1432 = vmax.f32 %v1366, %v1386
      %v1433 = vmax.f32 %v1429, %v1391
      %v1434 = vmax.f32 %v1430, %v1396
      %v1435 = vmax.f32 %v1431, %v1401
      %v1436 = vmax.f32 %v1432, %v1406
      %v1437 = vmax.f32 %v1433, %v1411
      %v1438 = vmax.f32 %v1434, %v1416
      %v1439 = vmax.f32 %v1435, %v1421
      %v1440 = vmax.f32 %v1436, %v1426
      %v1441 = vmax.f32 %v1437, %v1438
      %v1442 = vmax.f32 %v1439, %v1440
      %v1443 = vmax.f32 %v1441, %v1442
      %v1444 = vrot.slane %v1443, 4
      %v1445 = vmax.f32 %v1443, %v1444
      %v1446 = vrot.slane %v1445, 2
      %v1447 = vmax.f32 %v1445, %v1446
      %v1448 = vrot.slane %v1447, 1
      %v1449 = vmax.f32 %v1447, %v1448
      %v1450 = vsub.f32 %v1351, %v1449
      %v1451 = vsub.f32 %v1356, %v1449
      %v1452 = vsub.f32 %v1361, %v1449
      %v1453 = vsub.f32 %v1366, %v1449
      %v1454 = vsub.f32 %v1371, %v1449
      %v1455 = vsub.f32 %v1376, %v1449
      %v1456 = vsub.f32 %v1381, %v1449
      %v1457 = vsub.f32 %v1386, %v1449
      %v1458 = vsub.f32 %v1391, %v1449
      %v1459 = vsub.f32 %v1396, %v1449
      %v1460 = vsub.f32 %v1401, %v1449
      %v1461 = vsub.f32 %v1406, %v1449
      %v1462 = vsub.f32 %v1411, %v1449
      %v1463 = vsub.f32 %v1416, %v1449
      %v1464 = vsub.f32 %v1421, %v1449
      %v1465 = vsub.f32 %v1426, %v1449
      %v1466 = vmul.f32 %v1450, 1.442695
      %v1467 = vpow.pop %v1466
      %v1468 = vmul.f32 %v1451, 1.442695
      %v1469 = vpow.pop %v1468
      %v1470 = vmul.f32 %v1452, 1.442695
      %v1471 = vpow.pop %v1470
      %v1472 = vmul.f32 %v1453, 1.442695
      %v1473 = vpow.pop %v1472
      %v1474 = vmul.f32 %v1454, 1.442695
      %v1475 = vpow.pop %v1474
      %v1476 = vmul.f32 %v1455, 1.442695
      %v1477 = vpow.pop %v1476
      %v1478 = vmul.f32 %v1456, 1.442695
      %v1479 = vpow.pop %v1478
      %v1480 = vmul.f32 %v1457, 1.442695
      %v1481 = vpow.pop %v1480
      %v1482 = vmul.f32 %v1458, 1.442695
      %v1483 = vpow.pop %v1482
      %v1484 = vmul.f32 %v1459, 1.442695
      %v1485 = vpow.pop %v1484
      %v1486 = vmul.f32 %v1460, 1.442695
      %v1487 = vpow.pop %v1486
      %v1488 = vmul.f32 %v1461, 1.442695
      %v1489 = vpow.pop %v1488
      %v1490 = vmul.f32 %v1462, 1.442695
      %v1491 = vpow.pop %v1490
      %v1492 = vmul.f32 %v1463, 1.442695
      %v1493 = vpow.pop %v1492
      %v1494 = vmul.f32 %v1464, 1.442695
      %v1495 = vpow.pop %v1494
      %v1496 = vmul.f32 %v1465, 1.442695
      %v1497 = vpow.pop %v1496
      %v1498 = vrot.slane %v302, 4
      %v1500 = vsel %vm391, %v1498, 1.0
      %1501 = vmatprep.subr.mxu0 0.0
      %1502 = vmatpush1.msra.mxu0 %v1467
      %1503 = vmatprep.subr.mxu0 0.0
      %1504 = vmatpush1.msra.mxu0 %v1469
      %1505 = vmatprep.subr.mxu0 0.0
      %1506 = vmatpush1.msra.mxu0 %v1471
      %1507 = vmatprep.subr.mxu0 0.0
      %1508 = vmatpush1.msra.mxu0 %v1473
      %1509 = vmatprep.subr.mxu0 0.0
      %1510 = vmatpush1.msra.mxu0 %v1475
      %1511 = vmatprep.subr.mxu0 0.0
      %1512 = vmatpush1.msra.mxu0 %v1477
      %1513 = vmatprep.subr.mxu0 0.0
      %1514 = vmatpush1.msra.mxu0 %v1479
      %1515 = vmatprep.subr.mxu0 0.0
      %1516 = vmatpush1.msra.mxu0 %v1481
      %1517 = vmatprep.subr.mxu0 0.0
      %1518 = vmatpush1.msra.mxu0 %v1483
      %1519 = vmatprep.subr.mxu0 0.0
      %1520 = vmatpush1.msra.mxu0 %v1485
      %1521 = vmatprep.subr.mxu0 0.0
      %1522 = vmatpush1.msra.mxu0 %v1487
      %1523 = vmatprep.subr.mxu0 0.0
      %1524 = vmatpush1.msra.mxu0 %v1489
      %1525 = vmatprep.subr.mxu0 0.0
      %1526 = vmatpush1.msra.mxu0 %v1491
      %1527 = vmatprep.subr.mxu0 0.0
      %1528 = vmatpush1.msra.mxu0 %v1493
      %1529 = vmatprep.subr.mxu0 0.0
      %1530 = vmatpush1.msra.mxu0 %v1495
      %1531 = vmatprep.subr.mxu0 0.0
      %1532 = vmatpush1.msra.mxu0 %v1497
      %1533 = vmatprep.subr.mxu0 0.0
      %1534 = vmatpush1.msra.mxu0 0.0
      %1535 = vmatprep.subr.mxu0 0.0
      %1536 = vmatpush1.msra.mxu0 0.0
      %1537 = vmatprep.subr.mxu0 0.0
      %1538 = vmatpush1.msra.mxu0 0.0
      %1539 = vmatprep.subr.mxu0 0.0
      %1540 = vmatpush1.msra.mxu0 0.0
      %1541 = vmatprep.subr.mxu0 0.0
      %1542 = vmatpush1.msra.mxu0 0.0
      %1543 = vmatprep.subr.mxu0 0.0
      %1544 = vmatpush1.msra.mxu0 0.0
      %1545 = vmatprep.subr.mxu0 0.0
      %1546 = vmatpush1.msra.mxu0 0.0
      %1547 = vmatprep.subr.mxu0 0.0
      %1548 = vmatpush1.msra.mxu0 0.0
      %1549 = vmatprep.subr.mxu0 0.0
      %1550 = vmatpush1.msra.mxu0 0.0
      %1551 = vmatprep.subr.mxu0 0.0
      %1552 = vmatpush1.msra.mxu0 0.0
      %1553 = vmatprep.subr.mxu0 0.0
      %1554 = vmatpush1.msra.mxu0 0.0
      %1555 = vmatprep.subr.mxu0 0.0
      %1556 = vmatpush1.msra.mxu0 0.0
      %1557 = vmatprep.subr.mxu0 0.0
      %1558 = vmatpush1.msra.mxu0 0.0
      %1559 = vmatprep.subr.mxu0 0.0
      %1560 = vmatpush1.msra.mxu0 0.0
      %1561 = vmatprep.subr.mxu0 0.0
      %1562 = vmatpush1.msra.mxu0 0.0
      %1563 = vmatprep.subr.mxu0 0.0
      %1564 = vmatpush1.msra.mxu0 0.0
      %1565 = vmatprep.mubr.f32.mxu0 0.0
      %1566 = vmatmul.mubr.f32.gmra.mrb[0].mxu0 %v1500
      %v1567 = vpop.f32.mrb[0].mxu0
      %v1568 = vadd.f32 0.0, %v1567
      %v1569 = vpop.f32.mrb[0].mxu0
      %1570 = vdwg.mxu0
      %v1571 = vrcp.pop %v1568
      %v1572 = vlaneseq
      %v1573 = vshrl.u32 %v1572, 7
      %v1574 = vsub.s32 2, %v1573
      %v1575 = vrot.slane %v1571, %v1574
      %v1576 = vmul.f32 %v1568, %v1575
      %v1578 = vsel %vm1047, %v183, 0
      %v1581 = vsel %vm1047, %v184, 0
      %v1584 = vsel %vm1054, %v1576, 0
      %1586 = vmatprep.subr.mxu0 0.0
      %1587 = vmatpush1.msra.mxu0 %v1584
      %1588 = vmatprep.subr.mxu0 0.0
      %1589 = vmatpush1.msra.mxu0 0.0
      %1590 = vmatprep.subr.mxu0 0.0
      %1591 = vmatpush1.msra.mxu0 0.0
      %1592 = vmatprep.subr.mxu0 0.0
      %1593 = vmatpush1.msra.mxu0 0.0
      %1594 = vmatprep.subr.mxu0 0.0
      %1595 = vmatpush1.msra.mxu0 0.0
      %1596 = vmatprep.subr.mxu0 0.0
      %1597 = vmatpush1.msra.mxu0 0.0
      %1598 = vmatprep.subr.mxu0 0.0
      %1599 = vmatpush1.msra.mxu0 0.0
      %1600 = vmatprep.subr.mxu0 0.0
      %1601 = vmatpush1.msra.mxu0 0.0
      %1602 = vmatprep.subr.mxu0 0.0
      %1603 = vmatpush1.msra.mxu0 0.0
      %1604 = vmatprep.subr.mxu0 0.0
      %1605 = vmatpush1.msra.mxu0 0.0
      %1606 = vmatprep.subr.mxu0 0.0
      %1607 = vmatpush1.msra.mxu0 0.0
      %1608 = vmatprep.subr.mxu0 0.0
      %1609 = vmatpush1.msra.mxu0 0.0
      %1610 = vmatprep.subr.mxu0 0.0
      %1611 = vmatpush1.msra.mxu0 0.0
      %1612 = vmatprep.subr.mxu0 0.0
      %1613 = vmatpush1.msra.mxu0 0.0
      %1614 = vmatprep.subr.mxu0 0.0
      %1615 = vmatpush1.msra.mxu0 0.0
      %1616 = vmatprep.subr.mxu0 0.0
      %1617 = vmatpush1.msra.mxu0 0.0
      %1618 = vmatprep.subr.mxu0 0.0
      %1619 = vmatpush1.msra.mxu0 0.0
      %1620 = vmatprep.subr.mxu0 0.0
      %1621 = vmatpush1.msra.mxu0 0.0
      %1622 = vmatprep.subr.mxu0 0.0
      %1623 = vmatpush1.msra.mxu0 0.0
      %1624 = vmatprep.subr.mxu0 0.0
      %1625 = vmatpush1.msra.mxu0 0.0
      %1626 = vmatprep.subr.mxu0 0.0
      %1627 = vmatpush1.msra.mxu0 0.0
      %1628 = vmatprep.subr.mxu0 0.0
      %1629 = vmatpush1.msra.mxu0 0.0
      %1630 = vmatprep.subr.mxu0 0.0
      %1631 = vmatpush1.msra.mxu0 0.0
      %1632 = vmatprep.subr.mxu0 0.0
      %1633 = vmatpush1.msra.mxu0 0.0
      %1634 = vmatprep.subr.mxu0 0.0
      %1635 = vmatpush1.msra.mxu0 0.0
      %1636 = vmatprep.subr.mxu0 0.0
      %1637 = vmatpush1.msra.mxu0 0.0
      %1638 = vmatprep.subr.mxu0 0.0
      %1639 = vmatpush1.msra.mxu0 0.0
      %1640 = vmatprep.subr.mxu0 0.0
      %1641 = vmatpush1.msra.mxu0 0.0
      %1642 = vmatprep.subr.mxu0 0.0
      %1643 = vmatpush1.msra.mxu0 0.0
      %1644 = vmatprep.subr.mxu0 0.0
      %1645 = vmatpush1.msra.mxu0 0.0
      %1646 = vmatprep.subr.mxu0 0.0
      %1647 = vmatpush1.msra.mxu0 0.0
      %1648 = vmatprep.subr.mxu0 0.0
      %1649 = vmatpush1.msra.mxu0 0.0
      %1650 = vmatprep.mubr.f32.mxu0 0.0
      %1651 = vmatmul.mubr.f32.gmra.mrb[0].mxu0 %v1578
      %v1652 = vpop.f32.mrb[0].mxu0
      %v1653 = vadd.f32 0.0, %v1652
      %v1654 = vpop.f32.mrb[0].mxu0
      %1655 = vmatprep.mubr.f32.mxu0 0.0
      %1656 = vmatmul.mubr.f32.gmra.mrb[0].mxu0 %v1581
      %v1657 = vpop.f32.mrb[0].mxu0
      %v1658 = vadd.f32 0.0, %v1657
      %v1659 = vpop.f32.mrb[0].mxu0
      %1660 = vdwg.mxu0
      %v1661 = vadd.f32 %v1209, %v1653
      %v1662 = vadd.f32 %v1214, %v1658
      %1663 = vrot.lane.b32.xlu0 %v326, 122
      %v1664 = vpop.permute.xlu0 %1663
      %1665 = vrot.lane.b32.xlu0 %v327, 122
      %v1666 = vpop.permute.xlu0 %1665
      %1667 = vrot.lane.b32.xlu0 %v328, 122
      %v1668 = vpop.permute.xlu0 %1667
      %1669 = vrot.lane.b32.xlu0 %v329, 122
      %v1670 = vpop.permute.xlu0 %1669
      %1671 = vrot.lane.b32.xlu0 %v330, 122
      %v1672 = vpop.permute.xlu0 %1671
      %1673 = vrot.lane.b32.xlu0 %v331, 122
      %v1674 = vpop.permute.xlu0 %1673
      %1675 = vrot.lane.b32.xlu0 %v332, 122
      %v1676 = vpop.permute.xlu0 %1675
      %1677 = vrot.lane.b32.xlu0 %v333, 122
      %v1678 = vpop.permute.xlu0 %1677
      %1679 = vrot.lane.b32.xlu0 %v334, 122
      %v1680 = vpop.permute.xlu0 %1679
      %1681 = vrot.lane.b32.xlu0 %v335, 122
      %v1682 = vpop.permute.xlu0 %1681
      %1683 = vrot.lane.b32.xlu0 %v336, 122
      %v1684 = vpop.permute.xlu0 %1683
      %1685 = vrot.lane.b32.xlu0 %v337, 122
      %v1686 = vpop.permute.xlu0 %1685
      %1687 = vrot.lane.b32.xlu0 %v338, 122
      %v1688 = vpop.permute.xlu0 %1687
      %1689 = vrot.lane.b32.xlu0 %v339, 122
      %v1690 = vpop.permute.xlu0 %1689
      %1691 = vrot.lane.b32.xlu0 %v340, 122
      %v1692 = vpop.permute.xlu0 %1691
      %1693 = vrot.lane.b32.xlu0 %v341, 122
      %v1694 = vpop.permute.xlu0 %1693
      %v1695 = vrot.slane %v282, 6
      %v1696 = vsel %vm342, %v1664, 0
      %v1698 = vsel %vm342, %v1666, 0
      %v1700 = vsel %vm342, %v1668, 0
      %v1702 = vsel %vm342, %v1670, 0
      %v1704 = vsel %vm342, %v1672, 0
      %v1706 = vsel %vm342, %v1674, 0
      %v1708 = vsel %vm342, %v1676, 0
      %v1710 = vsel %vm342, %v1678, 0
      %v1712 = vsel %vm342, %v1680, 0
      %v1714 = vsel %vm342, %v1682, 0
      %v1716 = vsel %vm342, %v1684, 0
      %v1718 = vsel %vm342, %v1686, 0
      %v1720 = vsel %vm342, %v1688, 0
      %v1722 = vsel %vm342, %v1690, 0
      %v1724 = vsel %vm342, %v1692, 0
      %v1726 = vsel %vm342, %v1694, 0
      %v1728 = vsel %vm391, %v1695, 0
      %1730 = vmatprep.subr.mxu0 0.0
      %1731 = vmatpush1.msra.mxu0 %v1728
      %1732 = vmatprep.subr.mxu0 0.0
      %1733 = vmatpush1.msra.mxu0 0.0
      %1734 = vmatprep.subr.mxu0 0.0
      %1735 = vmatpush1.msra.mxu0 0.0
      %1736 = vmatprep.subr.mxu0 0.0
      %1737 = vmatpush1.msra.mxu0 0.0
      %1738 = vmatprep.subr.mxu0 0.0
      %1739 = vmatpush1.msra.mxu0 0.0
      %1740 = vmatprep.subr.mxu0 0.0
      %1741 = vmatpush1.msra.mxu0 0.0
      %1742 = vmatprep.subr.mxu0 0.0
      %1743 = vmatpush1.msra.mxu0 0.0
      %1744 = vmatprep.subr.mxu0 0.0
      %1745 = vmatpush1.msra.mxu0 0.0
      %1746 = vmatprep.subr.mxu0 0.0
      %1747 = vmatpush1.msra.mxu0 0.0
      %1748 = vmatprep.subr.mxu0 0.0
      %1749 = vmatpush1.msra.mxu0 0.0
      %1750 = vmatprep.subr.mxu0 0.0
      %1751 = vmatpush1.msra.mxu0 0.0
      %1752 = vmatprep.subr.mxu0 0.0
      %1753 = vmatpush1.msra.mxu0 0.0
      %1754 = vmatprep.subr.mxu0 0.0
      %1755 = vmatpush1.msra.mxu0 0.0
      %1756 = vmatprep.subr.mxu0 0.0
      %1757 = vmatpush1.msra.mxu0 0.0
      %1758 = vmatprep.subr.mxu0 0.0
      %1759 = vmatpush1.msra.mxu0 0.0
      %1760 = vmatprep.subr.mxu0 0.0
      %1761 = vmatpush1.msra.mxu0 0.0
      %1762 = vmatprep.subr.mxu0 0.0
      %1763 = vmatpush1.msra.mxu0 0.0
      %1764 = vmatprep.subr.mxu0 0.0
      %1765 = vmatpush1.msra.mxu0 0.0
      %1766 = vmatprep.subr.mxu0 0.0
      %1767 = vmatpush1.msra.mxu0 0.0
      %1768 = vmatprep.subr.mxu0 0.0
      %1769 = vmatpush1.msra.mxu0 0.0
      %1770 = vmatprep.subr.mxu0 0.0
      %1771 = vmatpush1.msra.mxu0 0.0
      %1772 = vmatprep.subr.mxu0 0.0
      %1773 = vmatpush1.msra.mxu0 0.0
      %1774 = vmatprep.subr.mxu0 0.0
      %1775 = vmatpush1.msra.mxu0 0.0
      %1776 = vmatprep.subr.mxu0 0.0
      %1777 = vmatpush1.msra.mxu0 0.0
      %1778 = vmatprep.subr.mxu0 0.0
      %1779 = vmatpush1.msra.mxu0 0.0
      %1780 = vmatprep.subr.mxu0 0.0
      %1781 = vmatpush1.msra.mxu0 0.0
      %1782 = vmatprep.subr.mxu0 0.0
      %1783 = vmatpush1.msra.mxu0 0.0
      %1784 = vmatprep.subr.mxu0 0.0
      %1785 = vmatpush1.msra.mxu0 0.0
      %1786 = vmatprep.subr.mxu0 0.0
      %1787 = vmatpush1.msra.mxu0 0.0
      %1788 = vmatprep.subr.mxu0 0.0
      %1789 = vmatpush1.msra.mxu0 0.0
      %1790 = vmatprep.subr.mxu0 0.0
      %1791 = vmatpush1.msra.mxu0 0.0
      %1792 = vmatprep.subr.mxu0 0.0
      %1793 = vmatpush1.msra.mxu0 0.0
      %1794 = vmatprep.mubr.f32.mxu0 0.0
      %1795 = vmatmul.mubr.f32.gmra.mrb[0].mxu0 %v1696
      %v1796 = vpop.f32.mrb[0].mxu0
      %v1797 = vadd.f32 0.0, %v1796
      %v1798 = vpop.f32.mrb[0].mxu0
      %1799 = vmatprep.mubr.f32.mxu0 0.0
      %1800 = vmatmul.mubr.f32.gmra.mrb[0].mxu0 %v1698
      %v1801 = vpop.f32.mrb[0].mxu0
      %v1802 = vadd.f32 0.0, %v1801
      %v1803 = vpop.f32.mrb[0].mxu0
      %1804 = vmatprep.mubr.f32.mxu0 0.0
      %1805 = vmatmul.mubr.f32.gmra.mrb[0].mxu0 %v1700
      %v1806 = vpop.f32.mrb[0].mxu0
      %v1807 = vadd.f32 0.0, %v1806
      %v1808 = vpop.f32.mrb[0].mxu0
      %1809 = vmatprep.mubr.f32.mxu0 0.0
      %1810 = vmatmul.mubr.f32.gmra.mrb[0].mxu0 %v1702
      %v1811 = vpop.f32.mrb[0].mxu0
      %v1812 = vadd.f32 0.0, %v1811
      %v1813 = vpop.f32.mrb[0].mxu0
      %1814 = vmatprep.mubr.f32.mxu0 0.0
      %1815 = vmatmul.mubr.f32.gmra.mrb[0].mxu0 %v1704
      %v1816 = vpop.f32.mrb[0].mxu0
      %v1817 = vadd.f32 0.0, %v1816
      %v1818 = vpop.f32.mrb[0].mxu0
      %1819 = vmatprep.mubr.f32.mxu0 0.0
      %1820 = vmatmul.mubr.f32.gmra.mrb[0].mxu0 %v1706
      %v1821 = vpop.f32.mrb[0].mxu0
      %v1822 = vadd.f32 0.0, %v1821
      %v1823 = vpop.f32.mrb[0].mxu0
      %1824 = vmatprep.mubr.f32.mxu0 0.0
      %1825 = vmatmul.mubr.f32.gmra.mrb[0].mxu0 %v1708
      %v1826 = vpop.f32.mrb[0].mxu0
      %v1827 = vadd.f32 0.0, %v1826
      %v1828 = vpop.f32.mrb[0].mxu0
      %1829 = vmatprep.mubr.f32.mxu0 0.0
      %1830 = vmatmul.mubr.f32.gmra.mrb[0].mxu0 %v1710
      %v1831 = vpop.f32.mrb[0].mxu0
      %v1832 = vadd.f32 0.0, %v1831
      %v1833 = vpop.f32.mrb[0].mxu0
      %1834 = vmatprep.mubr.f32.mxu0 0.0
      %1835 = vmatmul.mubr.f32.gmra.mrb[0].mxu0 %v1712
      %v1836 = vpop.f32.mrb[0].mxu0
      %v1837 = vadd.f32 0.0, %v1836
      %v1838 = vpop.f32.mrb[0].mxu0
      %1839 = vmatprep.mubr.f32.mxu0 0.0
      %1840 = vmatmul.mubr.f32.gmra.mrb[0].mxu0 %v1714
      %v1841 = vpop.f32.mrb[0].mxu0
      %v1842 = vadd.f32 0.0, %v1841
      %v1843 = vpop.f32.mrb[0].mxu0
      %1844 = vmatprep.mubr.f32.mxu0 0.0
      %1845 = vmatmul.mubr.f32.gmra.mrb[0].mxu0 %v1716
      %v1846 = vpop.f32.mrb[0].mxu0
      %v1847 = vadd.f32 0.0, %v1846
      %v1848 = vpop.f32.mrb[0].mxu0
      %1849 = vmatprep.mubr.f32.mxu0 0.0
      %1850 = vmatmul.mubr.f32.gmra.mrb[0].mxu0 %v1718
      %v1851 = vpop.f32.mrb[0].mxu0
      %v1852 = vadd.f32 0.0, %v1851
      %v1853 = vpop.f32.mrb[0].mxu0
      %1854 = vmatprep.mubr.f32.mxu0 0.0
      %1855 = vmatmul.mubr.f32.gmra.mrb[0].mxu0 %v1720
      %v1856 = vpop.f32.mrb[0].mxu0
      %v1857 = vadd.f32 0.0, %v1856
      %v1858 = vpop.f32.mrb[0].mxu0
      %1859 = vmatprep.mubr.f32.mxu0 0.0
      %1860 = vmatmul.mubr.f32.gmra.mrb[0].mxu0 %v1722
      %v1861 = vpop.f32.mrb[0].mxu0
      %v1862 = vadd.f32 0.0, %v1861
      %v1863 = vpop.f32.mrb[0].mxu0
      %1864 = vmatprep.mubr.f32.mxu0 0.0
      %1865 = vmatmul.mubr.f32.gmra.mrb[0].mxu0 %v1724
      %v1866 = vpop.f32.mrb[0].mxu0
      %v1867 = vadd.f32 0.0, %v1866
      %v1868 = vpop.f32.mrb[0].mxu0
      %1869 = vmatprep.mubr.f32.mxu0 0.0
      %1870 = vmatmul.mubr.f32.gmra.mrb[0].mxu0 %v1726
      %v1871 = vpop.f32.mrb[0].mxu0
      %v1872 = vadd.f32 0.0, %v1871
      %v1873 = vpop.f32.mrb[0].mxu0
      %1874 = vdwg.mxu0
      %v1875 = vmax.f32 %v1797, %v1817
      %v1876 = vmax.f32 %v1802, %v1822
      %v1877 = vmax.f32 %v1807, %v1827
      %v1878 = vmax.f32 %v1812, %v1832
      %v1879 = vmax.f32 %v1875, %v1837
      %v1880 = vmax.f32 %v1876, %v1842
      %v1881 = vmax.f32 %v1877, %v1847
      %v1882 = vmax.f32 %v1878, %v1852
      %v1883 = vmax.f32 %v1879, %v1857
      %v1884 = vmax.f32 %v1880, %v1862
      %v1885 = vmax.f32 %v1881, %v1867
      %v1886 = vmax.f32 %v1882, %v1872
      %v1887 = vmax.f32 %v1883, %v1884
      %v1888 = vmax.f32 %v1885, %v1886
      %v1889 = vmax.f32 %v1887, %v1888
      %v1890 = vrot.slane %v1889, 4
      %v1891 = vmax.f32 %v1889, %v1890
      %v1892 = vrot.slane %v1891, 2
      %v1893 = vmax.f32 %v1891, %v1892
      %v1894 = vrot.slane %v1893, 1
      %v1895 = vmax.f32 %v1893, %v1894
      %v1896 = vsub.f32 %v1797, %v1895
      %v1897 = vsub.f32 %v1802, %v1895
      %v1898 = vsub.f32 %v1807, %v1895
      %v1899 = vsub.f32 %v1812, %v1895
      %v1900 = vsub.f32 %v1817, %v1895
      %v1901 = vsub.f32 %v1822, %v1895
      %v1902 = vsub.f32 %v1827, %v1895
      %v1903 = vsub.f32 %v1832, %v1895
      %v1904 = vsub.f32 %v1837, %v1895
      %v1905 = vsub.f32 %v1842, %v1895
      %v1906 = vsub.f32 %v1847, %v1895
      %v1907 = vsub.f32 %v1852, %v1895
      %v1908 = vsub.f32 %v1857, %v1895
      %v1909 = vsub.f32 %v1862, %v1895
      %v1910 = vsub.f32 %v1867, %v1895
      %v1911 = vsub.f32 %v1872, %v1895
      %v1912 = vmul.f32 %v1896, 1.442695
      %v1913 = vpow.pop %v1912
      %v1914 = vmul.f32 %v1897, 1.442695
      %v1915 = vpow.pop %v1914
      %v1916 = vmul.f32 %v1898, 1.442695
      %v1917 = vpow.pop %v1916
      %v1918 = vmul.f32 %v1899, 1.442695
      %v1919 = vpow.pop %v1918
      %v1920 = vmul.f32 %v1900, 1.442695
      %v1921 = vpow.pop %v1920
      %v1922 = vmul.f32 %v1901, 1.442695
      %v1923 = vpow.pop %v1922
      %v1924 = vmul.f32 %v1902, 1.442695
      %v1925 = vpow.pop %v1924
      %v1926 = vmul.f32 %v1903, 1.442695
      %v1927 = vpow.pop %v1926
      %v1928 = vmul.f32 %v1904, 1.442695
      %v1929 = vpow.pop %v1928
      %v1930 = vmul.f32 %v1905, 1.442695
      %v1931 = vpow.pop %v1930
      %v1932 = vmul.f32 %v1906, 1.442695
      %v1933 = vpow.pop %v1932
      %v1934 = vmul.f32 %v1907, 1.442695
      %v1935 = vpow.pop %v1934
      %v1936 = vmul.f32 %v1908, 1.442695
      %v1937 = vpow.pop %v1936
      %v1938 = vmul.f32 %v1909, 1.442695
      %v1939 = vpow.pop %v1938
      %v1940 = vmul.f32 %v1910, 1.442695
      %v1941 = vpow.pop %v1940
      %v1942 = vmul.f32 %v1911, 1.442695
      %v1943 = vpow.pop %v1942
      %v1944 = vrot.slane %v302, 6
      %v1946 = vsel %vm391, %v1944, 1.0
      %1947 = vmatprep.subr.mxu0 0.0
      %1948 = vmatpush1.msra.mxu0 %v1913
      %1949 = vmatprep.subr.mxu0 0.0
      %1950 = vmatpush1.msra.mxu0 %v1915
      %1951 = vmatprep.subr.mxu0 0.0
      %1952 = vmatpush1.msra.mxu0 %v1917
      %1953 = vmatprep.subr.mxu0 0.0
      %1954 = vmatpush1.msra.mxu0 %v1919
      %1955 = vmatprep.subr.mxu0 0.0
      %1956 = vmatpush1.msra.mxu0 %v1921
      %1957 = vmatprep.subr.mxu0 0.0
      %1958 = vmatpush1.msra.mxu0 %v1923
      %1959 = vmatprep.subr.mxu0 0.0
      %1960 = vmatpush1.msra.mxu0 %v1925
      %1961 = vmatprep.subr.mxu0 0.0
      %1962 = vmatpush1.msra.mxu0 %v1927
      %1963 = vmatprep.subr.mxu0 0.0
      %1964 = vmatpush1.msra.mxu0 %v1929
      %1965 = vmatprep.subr.mxu0 0.0
      %1966 = vmatpush1.msra.mxu0 %v1931
      %1967 = vmatprep.subr.mxu0 0.0
      %1968 = vmatpush1.msra.mxu0 %v1933
      %1969 = vmatprep.subr.mxu0 0.0
      %1970 = vmatpush1.msra.mxu0 %v1935
      %1971 = vmatprep.subr.mxu0 0.0
      %1972 = vmatpush1.msra.mxu0 %v1937
      %1973 = vmatprep.subr.mxu0 0.0
      %1974 = vmatpush1.msra.mxu0 %v1939
      %1975 = vmatprep.subr.mxu0 0.0
      %1976 = vmatpush1.msra.mxu0 %v1941
      %1977 = vmatprep.subr.mxu0 0.0
      %1978 = vmatpush1.msra.mxu0 %v1943
      %1979 = vmatprep.subr.mxu0 0.0
      %1980 = vmatpush1.msra.mxu0 0.0
      %1981 = vmatprep.subr.mxu0 0.0
      %1982 = vmatpush1.msra.mxu0 0.0
      %1983 = vmatprep.subr.mxu0 0.0
      %1984 = vmatpush1.msra.mxu0 0.0
      %1985 = vmatprep.subr.mxu0 0.0
      %1986 = vmatpush1.msra.mxu0 0.0
      %1987 = vmatprep.subr.mxu0 0.0
      %1988 = vmatpush1.msra.mxu0 0.0
      %1989 = vmatprep.subr.mxu0 0.0
      %1990 = vmatpush1.msra.mxu0 0.0
      %1991 = vmatprep.subr.mxu0 0.0
      %1992 = vmatpush1.msra.mxu0 0.0
      %1993 = vmatprep.subr.mxu0 0.0
      %1994 = vmatpush1.msra.mxu0 0.0
      %1995 = vmatprep.subr.mxu0 0.0
      %1996 = vmatpush1.msra.mxu0 0.0
      %1997 = vmatprep.subr.mxu0 0.0
      %1998 = vmatpush1.msra.mxu0 0.0
      %1999 = vmatprep.subr.mxu0 0.0
      %2000 = vmatpush1.msra.mxu0 0.0
      %2001 = vmatprep.subr.mxu0 0.0
      %2002 = vmatpush1.msra.mxu0 0.0
      %2003 = vmatprep.subr.mxu0 0.0
      %2004 = vmatpush1.msra.mxu0 0.0
      %2005 = vmatprep.subr.mxu0 0.0
      %2006 = vmatpush1.msra.mxu0 0.0
      %2007 = vmatprep.subr.mxu0 0.0
      %2008 = vmatpush1.msra.mxu0 0.0
      %2009 = vmatprep.subr.mxu0 0.0
      %2010 = vmatpush1.msra.mxu0 0.0
      %2011 = vmatprep.mubr.f32.mxu0 0.0
      %2012 = vmatmul.mubr.f32.gmra.mrb[0].mxu0 %v1946
      %v2013 = vpop.f32.mrb[0].mxu0
      %v2014 = vadd.f32 0.0, %v2013
      %v2015 = vpop.f32.mrb[0].mxu0
      %2016 = vdwg.mxu0
      %v2017 = vrcp.pop %v2014
      %v2018 = vlaneseq
      %v2019 = vshrl.u32 %v2018, 7
      %v2020 = vsub.s32 2, %v2019
      %v2021 = vrot.slane %v2017, %v2020
      %v2022 = vmul.f32 %v2014, %v2021
      %v2024 = vsel %vm1047, %v186, 0
      %v2027 = vsel %vm1047, %v187, 0
      %v2030 = vsel %vm1054, %v2022, 0
      %2032 = vmatprep.subr.mxu0 0.0
      %2033 = vmatpush1.msra.mxu0 %v2030
      %2034 = vmatprep.subr.mxu0 0.0
      %2035 = vmatpush1.msra.mxu0 0.0
      %2036 = vmatprep.subr.mxu0 0.0
      %2037 = vmatpush1.msra.mxu0 0.0
      %2038 = vmatprep.subr.mxu0 0.0
      %2039 = vmatpush1.msra.mxu0 0.0
      %2040 = vmatprep.subr.mxu0 0.0
      %2041 = vmatpush1.msra.mxu0 0.0
      %2042 = vmatprep.subr.mxu0 0.0
      %2043 = vmatpush1.msra.mxu0 0.0
      %2044 = vmatprep.subr.mxu0 0.0
      %2045 = vmatpush1.msra.mxu0 0.0
      %2046 = vmatprep.subr.mxu0 0.0
      %2047 = vmatpush1.msra.mxu0 0.0
      %2048 = vmatprep.subr.mxu0 0.0
      %2049 = vmatpush1.msra.mxu0 0.0
      %2050 = vmatprep.subr.mxu0 0.0
      %2051 = vmatpush1.msra.mxu0 0.0
      %2052 = vmatprep.subr.mxu0 0.0
      %2053 = vmatpush1.msra.mxu0 0.0
      %2054 = vmatprep.subr.mxu0 0.0
      %2055 = vmatpush1.msra.mxu0 0.0
      %2056 = vmatprep.subr.mxu0 0.0
      %2057 = vmatpush1.msra.mxu0 0.0
      %2058 = vmatprep.subr.mxu0 0.0
      %2059 = vmatpush1.msra.mxu0 0.0
      %2060 = vmatprep.subr.mxu0 0.0
      %2061 = vmatpush1.msra.mxu0 0.0
      %2062 = vmatprep.subr.mxu0 0.0
      %2063 = vmatpush1.msra.mxu0 0.0
      %2064 = vmatprep.subr.mxu0 0.0
      %2065 = vmatpush1.msra.mxu0 0.0
      %2066 = vmatprep.subr.mxu0 0.0
      %2067 = vmatpush1.msra.mxu0 0.0
      %2068 = vmatprep.subr.mxu0 0.0
      %2069 = vmatpush1.msra.mxu0 0.0
      %2070 = vmatprep.subr.mxu0 0.0
      %2071 = vmatpush1.msra.mxu0 0.0
      %2072 = vmatprep.subr.mxu0 0.0
      %2073 = vmatpush1.msra.mxu0 0.0
      %2074 = vmatprep.subr.mxu0 0.0
      %2075 = vmatpush1.msra.mxu0 0.0
      %2076 = vmatprep.subr.mxu0 0.0
      %2077 = vmatpush1.msra.mxu0 0.0
      %2078 = vmatprep.subr.mxu0 0.0
      %2079 = vmatpush1.msra.mxu0 0.0
      %2080 = vmatprep.subr.mxu0 0.0
      %2081 = vmatpush1.msra.mxu0 0.0
      %2082 = vmatprep.subr.mxu0 0.0
      %2083 = vmatpush1.msra.mxu0 0.0
      %2084 = vmatprep.subr.mxu0 0.0
      %2085 = vmatpush1.msra.mxu0 0.0
      %2086 = vmatprep.subr.mxu0 0.0
      %2087 = vmatpush1.msra.mxu0 0.0
      %2088 = vmatprep.subr.mxu0 0.0
      %2089 = vmatpush1.msra.mxu0 0.0
      %2090 = vmatprep.subr.mxu0 0.0
      %2091 = vmatpush1.msra.mxu0 0.0
      %2092 = vmatprep.subr.mxu0 0.0
      %2093 = vmatpush1.msra.mxu0 0.0
      %2094 = vmatprep.subr.mxu0 0.0
      %2095 = vmatpush1.msra.mxu0 0.0
      %2096 = vmatprep.mubr.f32.mxu0 0.0
      %2097 = vmatmul.mubr.f32.gmra.mrb[0].mxu0 %v2024
      %v2098 = vpop.f32.mrb[0].mxu0
      %v2099 = vadd.f32 0.0, %v2098
      %v2100 = vpop.f32.mrb[0].mxu0
      %2101 = vmatprep.mubr.f32.mxu0 0.0
      %2102 = vmatmul.mubr.f32.gmra.mrb[0].mxu0 %v2027
      %v2103 = vpop.f32.mrb[0].mxu0
      %v2104 = vadd.f32 0.0, %v2103
      %v2105 = vpop.f32.mrb[0].mxu0
      %2106 = vdwg.mxu0
      %v2107 = vadd.f32 %v1661, %v2099
      %v2108 = vadd.f32 %v1662, %v2104
      %2109 = vrot.lane.b32.xlu0 %v326, 120
      %v2110 = vpop.permute.xlu0 %2109
      %2111 = vrot.lane.b32.xlu0 %v327, 120
      %v2112 = vpop.permute.xlu0 %2111
      %2113 = vrot.lane.b32.xlu0 %v328, 120
      %v2114 = vpop.permute.xlu0 %2113
      %2115 = vrot.lane.b32.xlu0 %v329, 120
      %v2116 = vpop.permute.xlu0 %2115
      %2117 = vrot.lane.b32.xlu0 %v330, 120
      %v2118 = vpop.permute.xlu0 %2117
      %2119 = vrot.lane.b32.xlu0 %v331, 120
      %v2120 = vpop.permute.xlu0 %2119
      %2121 = vrot.lane.b32.xlu0 %v332, 120
      %v2122 = vpop.permute.xlu0 %2121
      %2123 = vrot.lane.b32.xlu0 %v333, 120
      %v2124 = vpop.permute.xlu0 %2123
      %2125 = vrot.lane.b32.xlu0 %v334, 120
      %v2126 = vpop.permute.xlu0 %2125
      %2127 = vrot.lane.b32.xlu0 %v335, 120
      %v2128 = vpop.permute.xlu0 %2127
      %2129 = vrot.lane.b32.xlu0 %v336, 120
      %v2130 = vpop.permute.xlu0 %2129
      %2131 = vrot.lane.b32.xlu0 %v337, 120
      %v2132 = vpop.permute.xlu0 %2131
      %2133 = vrot.lane.b32.xlu0 %v338, 120
      %v2134 = vpop.permute.xlu0 %2133
      %2135 = vrot.lane.b32.xlu0 %v339, 120
      %v2136 = vpop.permute.xlu0 %2135
      %2137 = vrot.lane.b32.xlu0 %v340, 120
      %v2138 = vpop.permute.xlu0 %2137
      %2139 = vrot.lane.b32.xlu0 %v341, 120
      %v2140 = vpop.permute.xlu0 %2139
      %v2141 = vsel %vm342, %v2110, 0
      %v2143 = vsel %vm342, %v2112, 0
      %v2145 = vsel %vm342, %v2114, 0
      %v2147 = vsel %vm342, %v2116, 0
      %v2149 = vsel %vm342, %v2118, 0
      %v2151 = vsel %vm342, %v2120, 0
      %v2153 = vsel %vm342, %v2122, 0
      %v2155 = vsel %vm342, %v2124, 0
      %v2157 = vsel %vm342, %v2126, 0
      %v2159 = vsel %vm342, %v2128, 0
      %v2161 = vsel %vm342, %v2130, 0
      %v2163 = vsel %vm342, %v2132, 0
      %v2165 = vsel %vm342, %v2134, 0
      %v2167 = vsel %vm342, %v2136, 0
      %v2169 = vsel %vm342, %v2138, 0
      %v2171 = vsel %vm342, %v2140, 0
      %v2174 = vsel %vm391, %v287, 0
      %2176 = vmatprep.subr.mxu0 0.0
      %2177 = vmatpush1.msra.mxu0 %v2174
      %2178 = vmatprep.subr.mxu0 0.0
      %2179 = vmatpush1.msra.mxu0 0.0
      %2180 = vmatprep.subr.mxu0 0.0
      %2181 = vmatpush1.msra.mxu0 0.0
      %2182 = vmatprep.subr.mxu0 0.0
      %2183 = vmatpush1.msra.mxu0 0.0
      %2184 = vmatprep.subr.mxu0 0.0
      %2185 = vmatpush1.msra.mxu0 0.0
      %2186 = vmatprep.subr.mxu0 0.0
      %2187 = vmatpush1.msra.mxu0 0.0
      %2188 = vmatprep.subr.mxu0 0.0
      %2189 = vmatpush1.msra.mxu0 0.0
      %2190 = vmatprep.subr.mxu0 0.0
      %2191 = vmatpush1.msra.mxu0 0.0
      %2192 = vmatprep.subr.mxu0 0.0
      %2193 = vmatpush1.msra.mxu0 0.0
      %2194 = vmatprep.subr.mxu0 0.0
      %2195 = vmatpush1.msra.mxu0 0.0
      %2196 = vmatprep.subr.mxu0 0.0
      %2197 = vmatpush1.msra.mxu0 0.0
      %2198 = vmatprep.subr.mxu0 0.0
      %2199 = vmatpush1.msra.mxu0 0.0
      %2200 = vmatprep.subr.mxu0 0.0
      %2201 = vmatpush1.msra.mxu0 0.0
      %2202 = vmatprep.subr.mxu0 0.0
      %2203 = vmatpush1.msra.mxu0 0.0
      %2204 = vmatprep.subr.mxu0 0.0
      %2205 = vmatpush1.msra.mxu0 0.0
      %2206 = vmatprep.subr.mxu0 0.0
      %2207 = vmatpush1.msra.mxu0 0.0
      %2208 = vmatprep.subr.mxu0 0.0
      %2209 = vmatpush1.msra.mxu0 0.0
      %2210 = vmatprep.subr.mxu0 0.0
      %2211 = vmatpush1.msra.mxu0 0.0
      %2212 = vmatprep.subr.mxu0 0.0
      %2213 = vmatpush1.msra.mxu0 0.0
      %2214 = vmatprep.subr.mxu0 0.0
      %2215 = vmatpush1.msra.mxu0 0.0
      %2216 = vmatprep.subr.mxu0 0.0
      %2217 = vmatpush1.msra.mxu0 0.0
      %2218 = vmatprep.subr.mxu0 0.0
      %2219 = vmatpush1.msra.mxu0 0.0
      %2220 = vmatprep.subr.mxu0 0.0
      %2221 = vmatpush1.msra.mxu0 0.0
      %2222 = vmatprep.subr.mxu0 0.0
      %2223 = vmatpush1.msra.mxu0 0.0
      %2224 = vmatprep.subr.mxu0 0.0
      %2225 = vmatpush1.msra.mxu0 0.0
      %2226 = vmatprep.subr.mxu0 0.0
      %2227 = vmatpush1.msra.mxu0 0.0
      %2228 = vmatprep.subr.mxu0 0.0
      %2229 = vmatpush1.msra.mxu0 0.0
      %2230 = vmatprep.subr.mxu0 0.0
      %2231 = vmatpush1.msra.mxu0 0.0
      %2232 = vmatprep.subr.mxu0 0.0
      %2233 = vmatpush1.msra.mxu0 0.0
      %2234 = vmatprep.subr.mxu0 0.0
      %2235 = vmatpush1.msra.mxu0 0.0
      %2236 = vmatprep.subr.mxu0 0.0
      %2237 = vmatpush1.msra.mxu0 0.0
      %2238 = vmatprep.subr.mxu0 0.0
      %2239 = vmatpush1.msra.mxu0 0.0
      %2240 = vmatprep.mubr.f32.mxu0 0.0
      %2241 = vmatmul.mubr.f32.gmra.mrb[0].mxu0 %v2141
      %v2242 = vpop.f32.mrb[0].mxu0
      %v2243 = vadd.f32 0.0, %v2242
      %v2244 = vpop.f32.mrb[0].mxu0
      %2245 = vmatprep.mubr.f32.mxu0 0.0
      %2246 = vmatmul.mubr.f32.gmra.mrb[0].mxu0 %v2143
      %v2247 = vpop.f32.mrb[0].mxu0
      %v2248 = vadd.f32 0.0, %v2247
      %v2249 = vpop.f32.mrb[0].mxu0
      %2250 = vmatprep.mubr.f32.mxu0 0.0
      %2251 = vmatmul.mubr.f32.gmra.mrb[0].mxu0 %v2145
      %v2252 = vpop.f32.mrb[0].mxu0
      %v2253 = vadd.f32 0.0, %v2252
      %v2254 = vpop.f32.mrb[0].mxu0
      %2255 = vmatprep.mubr.f32.mxu0 0.0
      %2256 = vmatmul.mubr.f32.gmra.mrb[0].mxu0 %v2147
      %v2257 = vpop.f32.mrb[0].mxu0
      %v2258 = vadd.f32 0.0, %v2257
      %v2259 = vpop.f32.mrb[0].mxu0
      %2260 = vmatprep.mubr.f32.mxu0 0.0
      %2261 = vmatmul.mubr.f32.gmra.mrb[0].mxu0 %v2149
      %v2262 = vpop.f32.mrb[0].mxu0
      %v2263 = vadd.f32 0.0, %v2262
      %v2264 = vpop.f32.mrb[0].mxu0
      %2265 = vmatprep.mubr.f32.mxu0 0.0
      %2266 = vmatmul.mubr.f32.gmra.mrb[0].mxu0 %v2151
      %v2267 = vpop.f32.mrb[0].mxu0
      %v2268 = vadd.f32 0.0, %v2267
      %v2269 = vpop.f32.mrb[0].mxu0
      %2270 = vmatprep.mubr.f32.mxu0 0.0
      %2271 = vmatmul.mubr.f32.gmra.mrb[0].mxu0 %v2153
      %v2272 = vpop.f32.mrb[0].mxu0
      %v2273 = vadd.f32 0.0, %v2272
      %v2274 = vpop.f32.mrb[0].mxu0
      %2275 = vmatprep.mubr.f32.mxu0 0.0
      %2276 = vmatmul.mubr.f32.gmra.mrb[0].mxu0 %v2155
      %v2277 = vpop.f32.mrb[0].mxu0
      %v2278 = vadd.f32 0.0, %v2277
      %v2279 = vpop.f32.mrb[0].mxu0
      %2280 = vmatprep.mubr.f32.mxu0 0.0
      %2281 = vmatmul.mubr.f32.gmra.mrb[0].mxu0 %v2157
      %v2282 = vpop.f32.mrb[0].mxu0
      %v2283 = vadd.f32 0.0, %v2282
      %v2284 = vpop.f32.mrb[0].mxu0
      %2285 = vmatprep.mubr.f32.mxu0 0.0
      %2286 = vmatmul.mubr.f32.gmra.mrb[0].mxu0 %v2159
      %v2287 = vpop.f32.mrb[0].mxu0
      %v2288 = vadd.f32 0.0, %v2287
      %v2289 = vpop.f32.mrb[0].mxu0
      %2290 = vmatprep.mubr.f32.mxu0 0.0
      %2291 = vmatmul.mubr.f32.gmra.mrb[0].mxu0 %v2161
      %v2292 = vpop.f32.mrb[0].mxu0
      %v2293 = vadd.f32 0.0, %v2292
      %v2294 = vpop.f32.mrb[0].mxu0
      %2295 = vmatprep.mubr.f32.mxu0 0.0
      %2296 = vmatmul.mubr.f32.gmra.mrb[0].mxu0 %v2163
      %v2297 = vpop.f32.mrb[0].mxu0
      %v2298 = vadd.f32 0.0, %v2297
      %v2299 = vpop.f32.mrb[0].mxu0
      %2300 = vmatprep.mubr.f32.mxu0 0.0
      %2301 = vmatmul.mubr.f32.gmra.mrb[0].mxu0 %v2165
      %v2302 = vpop.f32.mrb[0].mxu0
      %v2303 = vadd.f32 0.0, %v2302
      %v2304 = vpop.f32.mrb[0].mxu0
      %2305 = vmatprep.mubr.f32.mxu0 0.0
      %2306 = vmatmul.mubr.f32.gmra.mrb[0].mxu0 %v2167
      %v2307 = vpop.f32.mrb[0].mxu0
      %v2308 = vadd.f32 0.0, %v2307
      %v2309 = vpop.f32.mrb[0].mxu0
      %2310 = vmatprep.mubr.f32.mxu0 0.0
      %2311 = vmatmul.mubr.f32.gmra.mrb[0].mxu0 %v2169
      %v2312 = vpop.f32.mrb[0].mxu0
      %v2313 = vadd.f32 0.0, %v2312
      %v2314 = vpop.f32.mrb[0].mxu0
      %2315 = vmatprep.mubr.f32.mxu0 0.0
      %2316 = vmatmul.mubr.f32.gmra.mrb[0].mxu0 %v2171
      %v2317 = vpop.f32.mrb[0].mxu0
      %v2318 = vadd.f32 0.0, %v2317
      %v2319 = vpop.f32.mrb[0].mxu0
      %2320 = vdwg.mxu0
      %v2321 = vmax.f32 %v2243, %v2263
      %v2322 = vmax.f32 %v2248, %v2268
      %v2323 = vmax.f32 %v2253, %v2273
      %v2324 = vmax.f32 %v2258, %v2278
      %v2325 = vmax.f32 %v2321, %v2283
      %v2326 = vmax.f32 %v2322, %v2288
      %v2327 = vmax.f32 %v2323, %v2293
      %v2328 = vmax.f32 %v2324, %v2298
      %v2329 = vmax.f32 %v2325, %v2303
      %v2330 = vmax.f32 %v2326, %v2308
      %v2331 = vmax.f32 %v2327, %v2313
      %v2332 = vmax.f32 %v2328, %v2318
      %v2333 = vmax.f32 %v2329, %v2330
      %v2334 = vmax.f32 %v2331, %v2332
      %v2335 = vmax.f32 %v2333, %v2334
      %v2336 = vrot.slane %v2335, 4
      %v2337 = vmax.f32 %v2335, %v2336
      %v2338 = vrot.slane %v2337, 2
      %v2339 = vmax.f32 %v2337, %v2338
      %v2340 = vrot.slane %v2339, 1
      %v2341 = vmax.f32 %v2339, %v2340
      %v2342 = vsub.f32 %v2243, %v2341
      %v2343 = vsub.f32 %v2248, %v2341
      %v2344 = vsub.f32 %v2253, %v2341
      %v2345 = vsub.f32 %v2258, %v2341
      %v2346 = vsub.f32 %v2263, %v2341
      %v2347 = vsub.f32 %v2268, %v2341
      %v2348 = vsub.f32 %v2273, %v2341
      %v2349 = vsub.f32 %v2278, %v2341
      %v2350 = vsub.f32 %v2283, %v2341
      %v2351 = vsub.f32 %v2288, %v2341
      %v2352 = vsub.f32 %v2293, %v2341
      %v2353 = vsub.f32 %v2298, %v2341
      %v2354 = vsub.f32 %v2303, %v2341
      %v2355 = vsub.f32 %v2308, %v2341
      %v2356 = vsub.f32 %v2313, %v2341
      %v2357 = vsub.f32 %v2318, %v2341
      %v2358 = vmul.f32 %v2342, 1.442695
      %v2359 = vpow.pop %v2358
      %v2360 = vmul.f32 %v2343, 1.442695
      %v2361 = vpow.pop %v2360
      %v2362 = vmul.f32 %v2344, 1.442695
      %v2363 = vpow.pop %v2362
      %v2364 = vmul.f32 %v2345, 1.442695
      %v2365 = vpow.pop %v2364
      %v2366 = vmul.f32 %v2346, 1.442695
      %v2367 = vpow.pop %v2366
      %v2368 = vmul.f32 %v2347, 1.442695
      %v2369 = vpow.pop %v2368
      %v2370 = vmul.f32 %v2348, 1.442695
      %v2371 = vpow.pop %v2370
      %v2372 = vmul.f32 %v2349, 1.442695
      %v2373 = vpow.pop %v2372
      %v2374 = vmul.f32 %v2350, 1.442695
      %v2375 = vpow.pop %v2374
      %v2376 = vmul.f32 %v2351, 1.442695
      %v2377 = vpow.pop %v2376
      %v2378 = vmul.f32 %v2352, 1.442695
      %v2379 = vpow.pop %v2378
      %v2380 = vmul.f32 %v2353, 1.442695
      %v2381 = vpow.pop %v2380
      %v2382 = vmul.f32 %v2354, 1.442695
      %v2383 = vpow.pop %v2382
      %v2384 = vmul.f32 %v2355, 1.442695
      %v2385 = vpow.pop %v2384
      %v2386 = vmul.f32 %v2356, 1.442695
      %v2387 = vpow.pop %v2386
      %v2388 = vmul.f32 %v2357, 1.442695
      %v2389 = vpow.pop %v2388
      %v2390 = vsel %vm391, %v307, 1.0
      %2391 = vmatprep.subr.mxu0 0.0
      %2392 = vmatpush1.msra.mxu0 %v2359
      %2393 = vmatprep.subr.mxu0 0.0
      %2394 = vmatpush1.msra.mxu0 %v2361
      %2395 = vmatprep.subr.mxu0 0.0
      %2396 = vmatpush1.msra.mxu0 %v2363
      %2397 = vmatprep.subr.mxu0 0.0
      %2398 = vmatpush1.msra.mxu0 %v2365
      %2399 = vmatprep.subr.mxu0 0.0
      %2400 = vmatpush1.msra.mxu0 %v2367
      %2401 = vmatprep.subr.mxu0 0.0
      %2402 = vmatpush1.msra.mxu0 %v2369
      %2403 = vmatprep.subr.mxu0 0.0
      %2404 = vmatpush1.msra.mxu0 %v2371
      %2405 = vmatprep.subr.mxu0 0.0
      %2406 = vmatpush1.msra.mxu0 %v2373
      %2407 = vmatprep.subr.mxu0 0.0
      %2408 = vmatpush1.msra.mxu0 %v2375
      %2409 = vmatprep.subr.mxu0 0.0
      %2410 = vmatpush1.msra.mxu0 %v2377
      %2411 = vmatprep.subr.mxu0 0.0
      %2412 = vmatpush1.msra.mxu0 %v2379
      %2413 = vmatprep.subr.mxu0 0.0
      %2414 = vmatpush1.msra.mxu0 %v2381
      %2415 = vmatprep.subr.mxu0 0.0
      %2416 = vmatpush1.msra.mxu0 %v2383
      %2417 = vmatprep.subr.mxu0 0.0
      %2418 = vmatpush1.msra.mxu0 %v2385
      %2419 = vmatprep.subr.mxu0 0.0
      %2420 = vmatpush1.msra.mxu0 %v2387
      %2421 = vmatprep.subr.mxu0 0.0
      %2422 = vmatpush1.msra.mxu0 %v2389
      %2423 = vmatprep.subr.mxu0 0.0
      %2424 = vmatpush1.msra.mxu0 0.0
      %2425 = vmatprep.subr.mxu0 0.0
      %2426 = vmatpush1.msra.mxu0 0.0
      %2427 = vmatprep.subr.mxu0 0.0
      %2428 = vmatpush1.msra.mxu0 0.0
      %2429 = vmatprep.subr.mxu0 0.0
      %2430 = vmatpush1.msra.mxu0 0.0
      %2431 = vmatprep.subr.mxu0 0.0
      %2432 = vmatpush1.msra.mxu0 0.0
      %2433 = vmatprep.subr.mxu0 0.0
      %2434 = vmatpush1.msra.mxu0 0.0
      %2435 = vmatprep.subr.mxu0 0.0
      %2436 = vmatpush1.msra.mxu0 0.0
      %2437 = vmatprep.subr.mxu0 0.0
      %2438 = vmatpush1.msra.mxu0 0.0
      %2439 = vmatprep.subr.mxu0 0.0
      %2440 = vmatpush1.msra.mxu0 0.0
      %2441 = vmatprep.subr.mxu0 0.0
      %2442 = vmatpush1.msra.mxu0 0.0
      %2443 = vmatprep.subr.mxu0 0.0
      %2444 = vmatpush1.msra.mxu0 0.0
      %2445 = vmatprep.subr.mxu0 0.0
      %2446 = vmatpush1.msra.mxu0 0.0
      %2447 = vmatprep.subr.mxu0 0.0
      %2448 = vmatpush1.msra.mxu0 0.0
      %2449 = vmatprep.subr.mxu0 0.0
      %2450 = vmatpush1.msra.mxu0 0.0
      %2451 = vmatprep.subr.mxu0 0.0
      %2452 = vmatpush1.msra.mxu0 0.0
      %2453 = vmatprep.subr.mxu0 0.0
      %2454 = vmatpush1.msra.mxu0 0.0
      %2455 = vmatprep.mubr.f32.mxu0 0.0
      %2456 = vmatmul.mubr.f32.gmra.mrb[0].mxu0 %v2390
      %v2457 = vpop.f32.mrb[0].mxu0
      %v2458 = vadd.f32 0.0, %v2457
      %v2459 = vpop.f32.mrb[0].mxu0
      %2460 = vdwg.mxu0
      %v2461 = vrcp.pop %v2458
      %v2462 = vlaneseq
      %v2463 = vshrl.u32 %v2462, 7
      %v2464 = vsub.s32 2, %v2463
      %v2465 = vrot.slane %v2461, %v2464
      %v2466 = vmul.f32 %v2458, %v2465
      %v2468 = vsel %vm1047, %v189, 0
      %v2471 = vsel %vm1047, %v190, 0
      %v2474 = vsel %vm1054, %v2466, 0
      %2476 = vmatprep.subr.mxu0 0.0
      %2477 = vmatpush1.msra.mxu0 %v2474
      %2478 = vmatprep.subr.mxu0 0.0
      %2479 = vmatpush1.msra.mxu0 0.0
      %2480 = vmatprep.subr.mxu0 0.0
      %2481 = vmatpush1.msra.mxu0 0.0
      %2482 = vmatprep.subr.mxu0 0.0
      %2483 = vmatpush1.msra.mxu0 0.0
      %2484 = vmatprep.subr.mxu0 0.0
      %2485 = vmatpush1.msra.mxu0 0.0
      %2486 = vmatprep.subr.mxu0 0.0
      %2487 = vmatpush1.msra.mxu0 0.0
      %2488 = vmatprep.subr.mxu0 0.0
      %2489 = vmatpush1.msra.mxu0 0.0
      %2490 = vmatprep.subr.mxu0 0.0
      %2491 = vmatpush1.msra.mxu0 0.0
      %2492 = vmatprep.subr.mxu0 0.0
      %2493 = vmatpush1.msra.mxu0 0.0
      %2494 = vmatprep.subr.mxu0 0.0
      %2495 = vmatpush1.msra.mxu0 0.0
      %2496 = vmatprep.subr.mxu0 0.0
      %2497 = vmatpush1.msra.mxu0 0.0
      %2498 = vmatprep.subr.mxu0 0.0
      %2499 = vmatpush1.msra.mxu0 0.0
      %2500 = vmatprep.subr.mxu0 0.0
      %2501 = vmatpush1.msra.mxu0 0.0
      %2502 = vmatprep.subr.mxu0 0.0
      %2503 = vmatpush1.msra.mxu0 0.0
      %2504 = vmatprep.subr.mxu0 0.0
      %2505 = vmatpush1.msra.mxu0 0.0
      %2506 = vmatprep.subr.mxu0 0.0
      %2507 = vmatpush1.msra.mxu0 0.0
      %2508 = vmatprep.subr.mxu0 0.0
      %2509 = vmatpush1.msra.mxu0 0.0
      %2510 = vmatprep.subr.mxu0 0.0
      %2511 = vmatpush1.msra.mxu0 0.0
      %2512 = vmatprep.subr.mxu0 0.0
      %2513 = vmatpush1.msra.mxu0 0.0
      %2514 = vmatprep.subr.mxu0 0.0
      %2515 = vmatpush1.msra.mxu0 0.0
      %2516 = vmatprep.subr.mxu0 0.0
      %2517 = vmatpush1.msra.mxu0 0.0
      %2518 = vmatprep.subr.mxu0 0.0
      %2519 = vmatpush1.msra.mxu0 0.0
      %2520 = vmatprep.subr.mxu0 0.0
      %2521 = vmatpush1.msra.mxu0 0.0
      %2522 = vmatprep.subr.mxu0 0.0
      %2523 = vmatpush1.msra.mxu0 0.0
      %2524 = vmatprep.subr.mxu0 0.0
      %2525 = vmatpush1.msra.mxu0 0.0
      %2526 = vmatprep.subr.mxu0 0.0
      %2527 = vmatpush1.msra.mxu0 0.0
      %2528 = vmatprep.subr.mxu0 0.0
      %2529 = vmatpush1.msra.mxu0 0.0
      %2530 = vmatprep.subr.mxu0 0.0
      %2531 = vmatpush1.msra.mxu0 0.0
      %2532 = vmatprep.subr.mxu0 0.0
      %2533 = vmatpush1.msra.mxu0 0.0
      %2534 = vmatprep.subr.mxu0 0.0
      %2535 = vmatpush1.msra.mxu0 0.0
      %2536 = vmatprep.subr.mxu0 0.0
      %2537 = vmatpush1.msra.mxu0 0.0
      %2538 = vmatprep.subr.mxu0 0.0
      %2539 = vmatpush1.msra.mxu0 0.0
      %2540 = vmatprep.mubr.f32.mxu0 0.0
      %2541 = vmatmul.mubr.f32.gmra.mrb[0].mxu0 %v2468
      %v2542 = vpop.f32.mrb[0].mxu0
      %v2543 = vadd.f32 0.0, %v2542
      %v2544 = vpop.f32.mrb[0].mxu0
      %2545 = vmatprep.mubr.f32.mxu0 0.0
      %2546 = vmatmul.mubr.f32.gmra.mrb[0].mxu0 %v2471
      %v2547 = vpop.f32.mrb[0].mxu0
      %v2548 = vadd.f32 0.0, %v2547
      %v2549 = vpop.f32.mrb[0].mxu0
      %2550 = vdwg.mxu0
      %v2551 = vadd.f32 %v2107, %v2543
      %v2552 = vadd.f32 %v2108, %v2548
      %2553 = vrot.lane.b32.xlu0 %v326, 118
      %v2554 = vpop.permute.xlu0 %2553
      %2555 = vrot.lane.b32.xlu0 %v327, 118
      %v2556 = vpop.permute.xlu0 %2555
      %2557 = vrot.lane.b32.xlu0 %v328, 118
      %v2558 = vpop.permute.xlu0 %2557
      %2559 = vrot.lane.b32.xlu0 %v329, 118
      %v2560 = vpop.permute.xlu0 %2559
      %2561 = vrot.lane.b32.xlu0 %v330, 118
      %v2562 = vpop.permute.xlu0 %2561
      %2563 = vrot.lane.b32.xlu0 %v331, 118
      %v2564 = vpop.permute.xlu0 %2563
      %2565 = vrot.lane.b32.xlu0 %v332, 118
      %v2566 = vpop.permute.xlu0 %2565
      %2567 = vrot.lane.b32.xlu0 %v333, 118
      %v2568 = vpop.permute.xlu0 %2567
      %2569 = vrot.lane.b32.xlu0 %v334, 118
      %v2570 = vpop.permute.xlu0 %2569
      %2571 = vrot.lane.b32.xlu0 %v335, 118
      %v2572 = vpop.permute.xlu0 %2571
      %2573 = vrot.lane.b32.xlu0 %v336, 118
      %v2574 = vpop.permute.xlu0 %2573
      %2575 = vrot.lane.b32.xlu0 %v337, 118
      %v2576 = vpop.permute.xlu0 %2575
      %2577 = vrot.lane.b32.xlu0 %v338, 118
      %v2578 = vpop.permute.xlu0 %2577
      %2579 = vrot.lane.b32.xlu0 %v339, 118
      %v2580 = vpop.permute.xlu0 %2579
      %2581 = vrot.lane.b32.xlu0 %v340, 118
      %v2582 = vpop.permute.xlu0 %2581
      %2583 = vrot.lane.b32.xlu0 %v341, 118
      %v2584 = vpop.permute.xlu0 %2583
      %v2585 = vrot.slane %v287, 2
      %v2586 = vsel %vm342, %v2554, 0
      %v2588 = vsel %vm342, %v2556, 0
      %v2590 = vsel %vm342, %v2558, 0
      %v2592 = vsel %vm342, %v2560, 0
      %v2594 = vsel %vm342, %v2562, 0
      %v2596 = vsel %vm342, %v2564, 0
      %v2598 = vsel %vm342, %v2566, 0
      %v2600 = vsel %vm342, %v2568, 0
      %v2602 = vsel %vm342, %v2570, 0
      %v2604 = vsel %vm342, %v2572, 0
      %v2606 = vsel %vm342, %v2574, 0
      %v2608 = vsel %vm342, %v2576, 0
      %v2610 = vsel %vm342, %v2578, 0
      %v2612 = vsel %vm342, %v2580, 0
      %v2614 = vsel %vm342, %v2582, 0
      %v2616 = vsel %vm342, %v2584, 0
      %v2618 = vsel %vm391, %v2585, 0
      %2620 = vmatprep.subr.mxu0 0.0
      %2621 = vmatpush1.msra.mxu0 %v2618
      %2622 = vmatprep.subr.mxu0 0.0
      %2623 = vmatpush1.msra.mxu0 0.0
      %2624 = vmatprep.subr.mxu0 0.0
      %2625 = vmatpush1.msra.mxu0 0.0
      %2626 = vmatprep.subr.mxu0 0.0
      %2627 = vmatpush1.msra.mxu0 0.0
      %2628 = vmatprep.subr.mxu0 0.0
      %2629 = vmatpush1.msra.mxu0 0.0
      %2630 = vmatprep.subr.mxu0 0.0
      %2631 = vmatpush1.msra.mxu0 0.0
      %2632 = vmatprep.subr.mxu0 0.0
      %2633 = vmatpush1.msra.mxu0 0.0
      %2634 = vmatprep.subr.mxu0 0.0
      %2635 = vmatpush1.msra.mxu0 0.0
      %2636 = vmatprep.subr.mxu0 0.0
      %2637 = vmatpush1.msra.mxu0 0.0
      %2638 = vmatprep.subr.mxu0 0.0
      %2639 = vmatpush1.msra.mxu0 0.0
      %2640 = vmatprep.subr.mxu0 0.0
      %2641 = vmatpush1.msra.mxu0 0.0
      %2642 = vmatprep.subr.mxu0 0.0
      %2643 = vmatpush1.msra.mxu0 0.0
      %2644 = vmatprep.subr.mxu0 0.0
      %2645 = vmatpush1.msra.mxu0 0.0
      %2646 = vmatprep.subr.mxu0 0.0
      %2647 = vmatpush1.msra.mxu0 0.0
      %2648 = vmatprep.subr.mxu0 0.0
      %2649 = vmatpush1.msra.mxu0 0.0
      %2650 = vmatprep.subr.mxu0 0.0
      %2651 = vmatpush1.msra.mxu0 0.0
      %2652 = vmatprep.subr.mxu0 0.0
      %2653 = vmatpush1.msra.mxu0 0.0
      %2654 = vmatprep.subr.mxu0 0.0
      %2655 = vmatpush1.msra.mxu0 0.0
      %2656 = vmatprep.subr.mxu0 0.0
      %2657 = vmatpush1.msra.mxu0 0.0
      %2658 = vmatprep.subr.mxu0 0.0
      %2659 = vmatpush1.msra.mxu0 0.0
      %2660 = vmatprep.subr.mxu0 0.0
      %2661 = vmatpush1.msra.mxu0 0.0
      %2662 = vmatprep.subr.mxu0 0.0
      %2663 = vmatpush1.msra.mxu0 0.0
      %2664 = vmatprep.subr.mxu0 0.0
      %2665 = vmatpush1.msra.mxu0 0.0
      %2666 = vmatprep.subr.mxu0 0.0
      %2667 = vmatpush1.msra.mxu0 0.0
      %2668 = vmatprep.subr.mxu0 0.0
      %2669 = vmatpush1.msra.mxu0 0.0
      %2670 = vmatprep.subr.mxu0 0.0
      %2671 = vmatpush1.msra.mxu0 0.0
      %2672 = vmatprep.subr.mxu0 0.0
      %2673 = vmatpush1.msra.mxu0 0.0
      %2674 = vmatprep.subr.mxu0 0.0
      %2675 = vmatpush1.msra.mxu0 0.0
      %2676 = vmatprep.subr.mxu0 0.0
      %2677 = vmatpush1.msra.mxu0 0.0
      %2678 = vmatprep.subr.mxu0 0.0
      %2679 = vmatpush1.msra.mxu0 0.0
      %2680 = vmatprep.subr.mxu0 0.0
      %2681 = vmatpush1.msra.mxu0 0.0
      %2682 = vmatprep.subr.mxu0 0.0
      %2683 = vmatpush1.msra.mxu0 0.0
      %2684 = vmatprep.mubr.f32.mxu0 0.0
      %2685 = vmatmul.mubr.f32.gmra.mrb[0].mxu0 %v2586
      %v2686 = vpop.f32.mrb[0].mxu0
      %v2687 = vadd.f32 0.0, %v2686
      %v2688 = vpop.f32.mrb[0].mxu0
      %2689 = vmatprep.mubr.f32.mxu0 0.0
      %2690 = vmatmul.mubr.f32.gmra.mrb[0].mxu0 %v2588
      %v2691 = vpop.f32.mrb[0].mxu0
      %v2692 = vadd.f32 0.0, %v2691
      %v2693 = vpop.f32.mrb[0].mxu0
      %2694 = vmatprep.mubr.f32.mxu0 0.0
      %2695 = vmatmul.mubr.f32.gmra.mrb[0].mxu0 %v2590
      %v2696 = vpop.f32.mrb[0].mxu0
      %v2697 = vadd.f32 0.0, %v2696
      %v2698 = vpop.f32.mrb[0].mxu0
      %2699 = vmatprep.mubr.f32.mxu0 0.0
      %2700 = vmatmul.mubr.f32.gmra.mrb[0].mxu0 %v2592
      %v2701 = vpop.f32.mrb[0].mxu0
      %v2702 = vadd.f32 0.0, %v2701
      %v2703 = vpop.f32.mrb[0].mxu0
      %2704 = vmatprep.mubr.f32.mxu0 0.0
      %2705 = vmatmul.mubr.f32.gmra.mrb[0].mxu0 %v2594
      %v2706 = vpop.f32.mrb[0].mxu0
      %v2707 = vadd.f32 0.0, %v2706
      %v2708 = vpop.f32.mrb[0].mxu0
      %2709 = vmatprep.mubr.f32.mxu0 0.0
      %2710 = vmatmul.mubr.f32.gmra.mrb[0].mxu0 %v2596
      %v2711 = vpop.f32.mrb[0].mxu0
      %v2712 = vadd.f32 0.0, %v2711
      %v2713 = vpop.f32.mrb[0].mxu0
      %2714 = vmatprep.mubr.f32.mxu0 0.0
      %2715 = vmatmul.mubr.f32.gmra.mrb[0].mxu0 %v2598
      %v2716 = vpop.f32.mrb[0].mxu0
      %v2717 = vadd.f32 0.0, %v2716
      %v2718 = vpop.f32.mrb[0].mxu0
      %2719 = vmatprep.mubr.f32.mxu0 0.0
      %2720 = vmatmul.mubr.f32.gmra.mrb[0].mxu0 %v2600
      %v2721 = vpop.f32.mrb[0].mxu0
      %v2722 = vadd.f32 0.0, %v2721
      %v2723 = vpop.f32.mrb[0].mxu0
      %2724 = vmatprep.mubr.f32.mxu0 0.0
      %2725 = vmatmul.mubr.f32.gmra.mrb[0].mxu0 %v2602
      %v2726 = vpop.f32.mrb[0].mxu0
      %v2727 = vadd.f32 0.0, %v2726
      %v2728 = vpop.f32.mrb[0].mxu0
      %2729 = vmatprep.mubr.f32.mxu0 0.0
      %2730 = vmatmul.mubr.f32.gmra.mrb[0].mxu0 %v2604
      %v2731 = vpop.f32.mrb[0].mxu0
      %v2732 = vadd.f32 0.0, %v2731
      %v2733 = vpop.f32.mrb[0].mxu0
      %2734 = vmatprep.mubr.f32.mxu0 0.0
      %2735 = vmatmul.mubr.f32.gmra.mrb[0].mxu0 %v2606
      %v2736 = vpop.f32.mrb[0].mxu0
      %v2737 = vadd.f32 0.0, %v2736
      %v2738 = vpop.f32.mrb[0].mxu0
      %2739 = vmatprep.mubr.f32.mxu0 0.0
      %2740 = vmatmul.mubr.f32.gmra.mrb[0].mxu0 %v2608
      %v2741 = vpop.f32.mrb[0].mxu0
      %v2742 = vadd.f32 0.0, %v2741
      %v2743 = vpop.f32.mrb[0].mxu0
      %2744 = vmatprep.mubr.f32.mxu0 0.0
      %2745 = vmatmul.mubr.f32.gmra.mrb[0].mxu0 %v2610
      %v2746 = vpop.f32.mrb[0].mxu0
      %v2747 = vadd.f32 0.0, %v2746
      %v2748 = vpop.f32.mrb[0].mxu0
      %2749 = vmatprep.mubr.f32.mxu0 0.0
      %2750 = vmatmul.mubr.f32.gmra.mrb[0].mxu0 %v2612
      %v2751 = vpop.f32.mrb[0].mxu0
      %v2752 = vadd.f32 0.0, %v2751
      %v2753 = vpop.f32.mrb[0].mxu0
      %2754 = vmatprep.mubr.f32.mxu0 0.0
      %2755 = vmatmul.mubr.f32.gmra.mrb[0].mxu0 %v2614
      %v2756 = vpop.f32.mrb[0].mxu0
      %v2757 = vadd.f32 0.0, %v2756
      %v2758 = vpop.f32.mrb[0].mxu0
      %2759 = vmatprep.mubr.f32.mxu0 0.0
      %2760 = vmatmul.mubr.f32.gmra.mrb[0].mxu0 %v2616
      %v2761 = vpop.f32.mrb[0].mxu0
      %v2762 = vadd.f32 0.0, %v2761
      %v2763 = vpop.f32.mrb[0].mxu0
      %2764 = vdwg.mxu0
      %v2765 = vmax.f32 %v2687, %v2707
      %v2766 = vmax.f32 %v2692, %v2712
      %v2767 = vmax.f32 %v2697, %v2717
      %v2768 = vmax.f32 %v2702, %v2722
      %v2769 = vmax.f32 %v2765, %v2727
      %v2770 = vmax.f32 %v2766, %v2732
      %v2771 = vmax.f32 %v2767, %v2737
      %v2772 = vmax.f32 %v2768, %v2742
      %v2773 = vmax.f32 %v2769, %v2747
      %v2774 = vmax.f32 %v2770, %v2752
      %v2775 = vmax.f32 %v2771, %v2757
      %v2776 = vmax.f32 %v2772, %v2762
      %v2777 = vmax.f32 %v2773, %v2774
      %v2778 = vmax.f32 %v2775, %v2776
      %v2779 = vmax.f32 %v2777, %v2778
      %v2780 = vrot.slane %v2779, 4
      %v2781 = vmax.f32 %v2779, %v2780
      %v2782 = vrot.slane %v2781, 2
      %v2783 = vmax.f32 %v2781, %v2782
      %v2784 = vrot.slane %v2783, 1
      %v2785 = vmax.f32 %v2783, %v2784
      %v2786 = vsub.f32 %v2687, %v2785
      %v2787 = vsub.f32 %v2692, %v2785
      %v2788 = vsub.f32 %v2697, %v2785
      %v2789 = vsub.f32 %v2702, %v2785
      %v2790 = vsub.f32 %v2707, %v2785
      %v2791 = vsub.f32 %v2712, %v2785
      %v2792 = vsub.f32 %v2717, %v2785
      %v2793 = vsub.f32 %v2722, %v2785
      %v2794 = vsub.f32 %v2727, %v2785
      %v2795 = vsub.f32 %v2732, %v2785
      %v2796 = vsub.f32 %v2737, %v2785
      %v2797 = vsub.f32 %v2742, %v2785
      %v2798 = vsub.f32 %v2747, %v2785
      %v2799 = vsub.f32 %v2752, %v2785
      %v2800 = vsub.f32 %v2757, %v2785
      %v2801 = vsub.f32 %v2762, %v2785
      %v2802 = vmul.f32 %v2786, 1.442695
      %v2803 = vpow.pop %v2802
      %v2804 = vmul.f32 %v2787, 1.442695
      %v2805 = vpow.pop %v2804
      %v2806 = vmul.f32 %v2788, 1.442695
      %v2807 = vpow.pop %v2806
      %v2808 = vmul.f32 %v2789, 1.442695
      %v2809 = vpow.pop %v2808
      %v2810 = vmul.f32 %v2790, 1.442695
      %v2811 = vpow.pop %v2810
      %v2812 = vmul.f32 %v2791, 1.442695
      %v2813 = vpow.pop %v2812
      %v2814 = vmul.f32 %v2792, 1.442695
      %v2815 = vpow.pop %v2814
      %v2816 = vmul.f32 %v2793, 1.442695
      %v2817 = vpow.pop %v2816
      %v2818 = vmul.f32 %v2794, 1.442695
      %v2819 = vpow.pop %v2818
      %v2820 = vmul.f32 %v2795, 1.442695
      %v2821 = vpow.pop %v2820
      %v2822 = vmul.f32 %v2796, 1.442695
      %v2823 = vpow.pop %v2822
      %v2824 = vmul.f32 %v2797, 1.442695
      %v2825 = vpow.pop %v2824
      %v2826 = vmul.f32 %v2798, 1.442695
      %v2827 = vpow.pop %v2826
      %v2828 = vmul.f32 %v2799, 1.442695
      %v2829 = vpow.pop %v2828
      %v2830 = vmul.f32 %v2800, 1.442695
      %v2831 = vpow.pop %v2830
      %v2832 = vmul.f32 %v2801, 1.442695
      %v2833 = vpow.pop %v2832
      %v2835 = vrot.slane %v307, 2
      %v2837 = vsel %vm391, %v2835, 1.0
      %2838 = vmatprep.subr.mxu0 0.0
      %2839 = vmatpush1.msra.mxu0 %v2803
      %2840 = vmatprep.subr.mxu0 0.0
      %2841 = vmatpush1.msra.mxu0 %v2805
      %2842 = vmatprep.subr.mxu0 0.0
      %2843 = vmatpush1.msra.mxu0 %v2807
      %2844 = vmatprep.subr.mxu0 0.0
      %2845 = vmatpush1.msra.mxu0 %v2809
      %2846 = vmatprep.subr.mxu0 0.0
      %2847 = vmatpush1.msra.mxu0 %v2811
      %2848 = vmatprep.subr.mxu0 0.0
      %2849 = vmatpush1.msra.mxu0 %v2813
      %2850 = vmatprep.subr.mxu0 0.0
      %2851 = vmatpush1.msra.mxu0 %v2815
      %2852 = vmatprep.subr.mxu0 0.0
      %2853 = vmatpush1.msra.mxu0 %v2817
      %2854 = vmatprep.subr.mxu0 0.0
      %2855 = vmatpush1.msra.mxu0 %v2819
      %2856 = vmatprep.subr.mxu0 0.0
      %2857 = vmatpush1.msra.mxu0 %v2821
      %2858 = vmatprep.subr.mxu0 0.0
      %2859 = vmatpush1.msra.mxu0 %v2823
      %2860 = vmatprep.subr.mxu0 0.0
      %2861 = vmatpush1.msra.mxu0 %v2825
      %2862 = vmatprep.subr.mxu0 0.0
      %2863 = vmatpush1.msra.mxu0 %v2827
      %2864 = vmatprep.subr.mxu0 0.0
      %2865 = vmatpush1.msra.mxu0 %v2829
      %2866 = vmatprep.subr.mxu0 0.0
      %2867 = vmatpush1.msra.mxu0 %v2831
      %2868 = vmatprep.subr.mxu0 0.0
      %2869 = vmatpush1.msra.mxu0 %v2833
      %2870 = vmatprep.subr.mxu0 0.0
      %2871 = vmatpush1.msra.mxu0 0.0
      %2872 = vmatprep.subr.mxu0 0.0
      %2873 = vmatpush1.msra.mxu0 0.0
      %2874 = vmatprep.subr.mxu0 0.0
      %2875 = vmatpush1.msra.mxu0 0.0
      %2876 = vmatprep.subr.mxu0 0.0
      %2877 = vmatpush1.msra.mxu0 0.0
      %2878 = vmatprep.subr.mxu0 0.0
      %2879 = vmatpush1.msra.mxu0 0.0
      %2880 = vmatprep.subr.mxu0 0.0
      %2881 = vmatpush1.msra.mxu0 0.0
      %2882 = vmatprep.subr.mxu0 0.0
      %2883 = vmatpush1.msra.mxu0 0.0
      %2884 = vmatprep.subr.mxu0 0.0
      %2885 = vmatpush1.msra.mxu0 0.0
      %2886 = vmatprep.subr.mxu0 0.0
      %2887 = vmatpush1.msra.mxu0 0.0
      %2888 = vmatprep.subr.mxu0 0.0
      %2889 = vmatpush1.msra.mxu0 0.0
      %2890 = vmatprep.subr.mxu0 0.0
      %2891 = vmatpush1.msra.mxu0 0.0
      %2892 = vmatprep.subr.mxu0 0.0
      %2893 = vmatpush1.msra.mxu0 0.0
      %2894 = vmatprep.subr.mxu0 0.0
      %2895 = vmatpush1.msra.mxu0 0.0
      %2896 = vmatprep.subr.mxu0 0.0
      %2897 = vmatpush1.msra.mxu0 0.0
      %2898 = vmatprep.subr.mxu0 0.0
      %2899 = vmatpush1.msra.mxu0 0.0
      %2900 = vmatprep.subr.mxu0 0.0
      %2901 = vmatpush1.msra.mxu0 0.0
      %2902 = vmatprep.mubr.f32.mxu0 0.0
      %2903 = vmatmul.mubr.f32.gmra.mrb[0].mxu0 %v2837
      %v2904 = vpop.f32.mrb[0].mxu0
      %v2905 = vadd.f32 0.0, %v2904
      %v2906 = vpop.f32.mrb[0].mxu0
      %2907 = vdwg.mxu0
      %v2908 = vrcp.pop %v2905
      %v2909 = vlaneseq
      %v2910 = vshrl.u32 %v2909, 7
      %v2911 = vsub.s32 2, %v2910
      %v2912 = vrot.slane %v2908, %v2911
      %v2913 = vmul.f32 %v2905, %v2912
      %v2915 = vsel %vm1047, %v192, 0
      %v2918 = vsel %vm1047, %v193, 0
      %v2921 = vsel %vm1054, %v2913, 0
      %2923 = vmatprep.subr.mxu0 0.0
      %2924 = vmatpush1.msra.mxu0 %v2921
      %2925 = vmatprep.subr.mxu0 0.0
      %2926 = vmatpush1.msra.mxu0 0.0
      %2927 = vmatprep.subr.mxu0 0.0
      %2928 = vmatpush1.msra.mxu0 0.0
      %2929 = vmatprep.subr.mxu0 0.0
      %2930 = vmatpush1.msra.mxu0 0.0
      %2931 = vmatprep.subr.mxu0 0.0
      %2932 = vmatpush1.msra.mxu0 0.0
      %2933 = vmatprep.subr.mxu0 0.0
      %2934 = vmatpush1.msra.mxu0 0.0
      %2935 = vmatprep.subr.mxu0 0.0
      %2936 = vmatpush1.msra.mxu0 0.0
      %2937 = vmatprep.subr.mxu0 0.0
      %2938 = vmatpush1.msra.mxu0 0.0
      %2939 = vmatprep.subr.mxu0 0.0
      %2940 = vmatpush1.msra.mxu0 0.0
      %2941 = vmatprep.subr.mxu0 0.0
      %2942 = vmatpush1.msra.mxu0 0.0
      %2943 = vmatprep.subr.mxu0 0.0
      %2944 = vmatpush1.msra.mxu0 0.0
      %2945 = vmatprep.subr.mxu0 0.0
      %2946 = vmatpush1.msra.mxu0 0.0
      %2947 = vmatprep.subr.mxu0 0.0
      %2948 = vmatpush1.msra.mxu0 0.0
      %2949 = vmatprep.subr.mxu0 0.0
      %2950 = vmatpush1.msra.mxu0 0.0
      %2951 = vmatprep.subr.mxu0 0.0
      %2952 = vmatpush1.msra.mxu0 0.0
      %2953 = vmatprep.subr.mxu0 0.0
      %2954 = vmatpush1.msra.mxu0 0.0
      %2955 = vmatprep.subr.mxu0 0.0
      %2956 = vmatpush1.msra.mxu0 0.0
      %2957 = vmatprep.subr.mxu0 0.0
      %2958 = vmatpush1.msra.mxu0 0.0
      %2959 = vmatprep.subr.mxu0 0.0
      %2960 = vmatpush1.msra.mxu0 0.0
      %2961 = vmatprep.subr.mxu0 0.0
      %2962 = vmatpush1.msra.mxu0 0.0
      %2963 = vmatprep.subr.mxu0 0.0
      %2964 = vmatpush1.msra.mxu0 0.0
      %2965 = vmatprep.subr.mxu0 0.0
      %2966 = vmatpush1.msra.mxu0 0.0
      %2967 = vmatprep.subr.mxu0 0.0
      %2968 = vmatpush1.msra.mxu0 0.0
      %2969 = vmatprep.subr.mxu0 0.0
      %2970 = vmatpush1.msra.mxu0 0.0
      %2971 = vmatprep.subr.mxu0 0.0
      %2972 = vmatpush1.msra.mxu0 0.0
      %2973 = vmatprep.subr.mxu0 0.0
      %2974 = vmatpush1.msra.mxu0 0.0
      %2975 = vmatprep.subr.mxu0 0.0
      %2976 = vmatpush1.msra.mxu0 0.0
      %2977 = vmatprep.subr.mxu0 0.0
      %2978 = vmatpush1.msra.mxu0 0.0
      %2979 = vmatprep.subr.mxu0 0.0
      %2980 = vmatpush1.msra.mxu0 0.0
      %2981 = vmatprep.subr.mxu0 0.0
      %2982 = vmatpush1.msra.mxu0 0.0
      %2983 = vmatprep.subr.mxu0 0.0
      %2984 = vmatpush1.msra.mxu0 0.0
      %2985 = vmatprep.subr.mxu0 0.0
      %2986 = vmatpush1.msra.mxu0 0.0
      %2987 = vmatprep.mubr.f32.mxu0 0.0
      %2988 = vmatmul.mubr.f32.gmra.mrb[0].mxu0 %v2915
      %v2989 = vpop.f32.mrb[0].mxu0
      %v2990 = vadd.f32 0.0, %v2989
      %v2991 = vpop.f32.mrb[0].mxu0
      %2992 = vmatprep.mubr.f32.mxu0 0.0
      %2993 = vmatmul.mubr.f32.gmra.mrb[0].mxu0 %v2918
      %v2994 = vpop.f32.mrb[0].mxu0
      %v2995 = vadd.f32 0.0, %v2994
      %v2996 = vpop.f32.mrb[0].mxu0
      %2997 = vdwg.mxu0
      %v2998 = vadd.f32 %v2551, %v2990
      %v2999 = vadd.f32 %v2552, %v2995
      %3000 = vst [vmem:[%s170] sm:$0xff] %v2998
      %3001 = vst [vmem:[%s170 + $0x8] sm:$0xf] %v2999
      %p3002 = scmp.lt.s32.totalorder %s14, 3
      %s3003 = scalar_select %p3002, %s14, 3
      %s3004 = smul.addr %s3003, 2
      %s3005 = smul.addr %s3004, 8
      %s3006 = scalar_lea.vmem %s3, %s3005
      // Predicated region
      $region33: #{multihead_self_attention.1} parent=31 // pred_check
        %p3007 = pneg %p100
      $region34: #{multihead_self_attention.1} parent=31 // pred_check_branch
        %3009 = sbr.rel (%p3007) target = $region36
      $region35: #{multihead_self_attention.1} parent=31 // pred_region
        _
      $region36: #{multihead_self_attention.1} parent=31 // pred_fallthru
        _
    $region32: #{multihead_self_attention.1} parent=5 // pred_fallthru
      _
    %p3010 = scmp.le.s32.totalorder 2, %s9
    // Predicated region
    $region37: #{multihead_self_attention.1} parent=5 // pred_check
      %p3011 = pneg %p3010
    $region38: #{multihead_self_attention.1} parent=5 // pred_check_branch
      %3013 = sbr.rel (%p3011) target = $region40
    $region39: #{multihead_self_attention.1} parent=5 // pred_region
      %s3014 = ssub.s32 %s9, 2
      // Predicated region
      $region41: #{multihead_self_attention.1} parent=39 // pred_check
        %p3015 = pneg %p106
      $region42: #{multihead_self_attention.1} parent=39 // pred_check_branch
        %3017 = sbr.rel (%p3015) target = $region44
      $region43: #{multihead_self_attention.1} parent=39 // pred_region
        %p3018 = scmp.lt.s32.totalorder %s15, 3
        %s3019 = scalar_select %p3018, %s15, 3
        %s3020 = smul.addr %s3019, 2
        %s3021 = smul.addr %s3020, 8
        %s3022 = scalar_lea.vmem %s3, %s3021
      $region44: #{multihead_self_attention.1} parent=39 // pred_fallthru
        _
    $region40: #{multihead_self_attention.1} parent=5 // pred_fallthru
      _
  $region6: #{multihead_self_attention.1} parent=0 // loop_footer
    %s13 = sadd.s32 1, %s9
  $region7: #{multihead_self_attention.1} parent=0 // loop_footer_branch
    %8 = sbr.rel target = $region3
  $region8: #{multihead_self_attention.1} parent=0 // loop_exit
    _

</llo_original>
